<compile_context>
chip_gen: v7x
topology: tpu7x:2x2x1
jax: 0.10.0
libtpu: 0.0.40
codegen_flags: <defaults>
</compile_context>

<pallas_src>
import math
from functools import partial

import numpy as np
import jax
import jax.numpy as jnp
from jax.experimental import pallas as pl
from jax.experimental.pallas import tpu as pltpu

# (output parity, tap offset dy in {-1,0,1}) -> ConvTranspose2d kernel index ky
# for kernel=4, stride=2, padding=1 (oy = 2*iy - 1 + ky  =>  ky = py - 2*dy + 1).
_KY_TAB = {(0, -1): 3, (0, 0): 1, (1, 0): 2, (1, 1): 0}
# bilinear x2, align_corners=False: (output parity, tap offset) -> interpolation weight.
_WLIN = {(0, -1): 0.25, (0, 0): 0.75, (1, 0): 0.75, (1, 1): 0.25}
_PARITIES = [(0, 0), (0, 1), (1, 0), (1, 1)]


def _parity_offsets(p):
    return (-1, 0) if p == 0 else (0, 1)


# ------------------------------ Pallas kernel -------------------------------

def _upsample_kernel(x_ref, wcv_ref, wup_ref, b_ref, o_ref, xz_ref,
                     *, H, W, Cin, Cmid, TH):
    """Grid = (batch, row_tile).

    x_ref  : (1, H+2, W+2, Cin)  edge-replicate padded NHWC image (resident per batch)
    wcv_ref: (4, 4*Cin, Cmid)    per-parity folded deconv+1x1 weights (bf16)
    wup_ref: (4, 4*Cin, Cmid)    per-parity folded bilinear+1x1 weights (bf16)
    b_ref  : (1, 4*Cout)         fused bias (f32), Cout = 2*Cmid
    o_ref  : (1, TH, W, 4*Cout)  per input pixel: 4 sub-pixel outputs x Cout
    xz_ref : (H+2, W+2, Cin)     VMEM scratch: zero-padded copy of the image
    """
    # Build the zero-padded view once per batch (row-tile axis is "arbitrary" =>
    # sequential per core, so row_tile == 0 always runs first for each batch).
    @pl.when(pl.program_id(1) == 0)
    def _build_zero_pad():
        xz_ref[...] = jnp.zeros((H + 2, W + 2, Cin), jnp.float32)
        xz_ref[1:H + 1, 1:W + 1, :] = x_ref[0, 1:H + 1, 1:W + 1, :]

    m0 = pl.multiple_of(pl.program_id(1) * TH, TH)   # first input row of this tile
    M = TH * W

    ys = []
    for p_idx, (py, px) in enumerate(_PARITIES):
        dys = _parity_offsets(py)
        dxs = _parity_offsets(px)
        cv_taps, up_taps = [], []
        for dy in dys:
            for dx in dxs:
                r0 = m0 + (dy + 1)          # row offset into the padded image
                c0 = dx + 1                 # static column offset into the padded image
                cv_taps.append(xz_ref[pl.ds(r0, TH), c0:c0 + W, :])      # zero-padded taps
                up_taps.append(x_ref[0, pl.ds(r0, TH), c0:c0 + W, :])    # edge-clamped taps
        cv_patch = (jnp.concatenate(cv_taps, axis=-1)
                    .reshape(M, 4 * Cin).astype(jnp.bfloat16))
        up_patch = (jnp.concatenate(up_taps, axis=-1)
                    .reshape(M, 4 * Cin).astype(jnp.bfloat16))
        ys.append(jnp.dot(cv_patch, wcv_ref[p_idx],
                          preferred_element_type=jnp.float32))
        ys.append(jnp.dot(up_patch, wup_ref[p_idx],
                          preferred_element_type=jnp.float32))

    # Lane-dense (M, 4*Cout) result; channel concat of the two paths is implicit.
    y = jnp.concatenate(ys, axis=-1) + b_ref[...]
    o_ref[0] = y.reshape(TH, W, 8 * Cmid).astype(o_ref.dtype)


# --------------------------- host-side weight fuse --------------------------

def _fused_weights(params):
    """Fold (ConvTranspose2d 4x4 s2 p1 -> 1x1 conv) and (bilinear x2 -> 1x1 conv) into
    per-parity, zero-free GEMM weights: (4, 4*Cin, Cmid) for each path, bias (4*Cout,)."""
    Wd, bd = params['deconv_w'], params['deconv_b']          # (Cin, Cmid, 4, 4), (Cmid,)
    W1, b1 = params['cv1x1_w'], params['cv1x1_b']            # (Cmid, Cmid), (Cmid,)
    Wu, bu = params['up1x1_w'], params['up1x1_b']            # (Cmid, Cin), (Cmid,)
    Cin, Cmid = Wd.shape[0], Wd.shape[1]

    # Fold the 1x1 conv that follows the transposed conv into its weights / bias.
    Wcv = jnp.einsum('imyx,om->ioyx', Wd, W1)                # (Cin, Cmid, 4, 4)
    bcv = W1 @ bd + b1                                       # (Cmid,)
    WuT = Wu.T                                               # (Cin, Cmid)

    wcv_par, wup_par = [], []
    for (py, px) in _PARITIES:
        cv_blocks, up_blocks = [], []
        for dy in _parity_offsets(py):
            for dx in _parity_offsets(px):
                ky = _KY_TAB[(py, dy)]
                kx = _KY_TAB[(px, dx)]
                cv_blocks.append(Wcv[:, :, ky, kx])                       # (Cin, Cmid)
                lin = _WLIN[(py, dy)] * _WLIN[(px, dx)]
                up_blocks.append(lin * WuT)                               # (Cin, Cmid)
        wcv_par.append(jnp.concatenate(cv_blocks, axis=0))               # (4*Cin, Cmid)
        wup_par.append(jnp.concatenate(up_blocks, axis=0))
    wcv = jnp.stack(wcv_par, axis=0).astype(jnp.bfloat16)                # (4, 4*Cin, Cmid)
    wup = jnp.stack(wup_par, axis=0).astype(jnp.bfloat16)
    # per-parity channel layout is [cv (Cmid) | up (Cmid)], repeated for the 4 parities
    b_big = jnp.tile(jnp.concatenate([bcv, bu]), 4).astype(jnp.float32)  # (4*Cout,)
    return wcv, wup, b_big, Cmid


# ------------------------------ tiling helpers -------------------------------

def _pick_row_tile(H, W, m_target=512):
    """Largest divisor TH of H with GEMM M = TH*W <= m_target, preferring >= 2 row
    tiles so BlockSpec double-buffering has something to overlap."""
    divs = [d for d in range(1, H + 1) if H % d == 0]
    cand = [d for d in divs if d * W <= m_target and d < H]
    if not cand:
        cand = [d for d in divs if d * W <= m_target] or [1]
    return max(cand)


# --------------------------------- forward ----------------------------------

def upsample_forward(params, x):
    """Forward of `Upsample` (use_conv=True, use_upsample=True, k=2).
    x: (B, Cin, H, W) NCHW f32  ->  (B, Cout, 2H, 2W) NCHW f32."""
    B, Cin, H, W = x.shape
    wcv, wup, b_big, Cmid = _fused_weights(params)
    Cout = 2 * Cmid
    n_out = 4 * Cout

    # NCHW -> NHWC once + 1-pixel edge-replicate halo (realizes the bilinear border
    # clamp; the transposed conv's zero padding is built in a VMEM scratch in-kernel).
    x_nhwc = jnp.transpose(x, (0, 2, 3, 1))
    x_pad = jnp.pad(x_nhwc, ((0, 0), (1, 1), (1, 1), (0, 0)), mode='edge')

    TH = _pick_row_tile(H, W)
    R = H // TH
    assert TH * R == H

    # VMEM budget (block double-buffering + scratch + working set), capped for v7x (64 MiB).
    in_block = (H + 2) * (W + 2) * Cin * 4
    out_block = TH * W * n_out * 4
    w_bytes = 2 * 4 * (4 * Cin) * Cmid * 2
    work = TH * W * (2 * (4 * Cin) * 2 + 2 * n_out * 4)   # bf16 patches + f32 partials
    need = 2 * (in_block + out_block + w_bytes + n_out * 4) + in_block + work
    vmem_limit = int(min(max(2 * need, 16 * 1024 * 1024), 48 * 1024 * 1024))

    flops = 2 * B * H * W * 8 * (4 * Cin) * Cmid
    bytes_accessed = (B * (H + 2) * (W + 2) * Cin * 4      # input
                      + 2 * 4 * (4 * Cin) * Cmid * 2       # weights (bf16)
                      + n_out * 4                          # bias
                      + B * H * W * n_out * 4)             # output

    packed = pl.pallas_call(
        partial(_upsample_kernel, H=H, W=W, Cin=Cin, Cmid=Cmid, TH=TH),
        grid=(B, R),
        in_specs=[
            # full padded image per batch, resident across the row-tile axis
            pl.BlockSpec((1, H + 2, W + 2, Cin), lambda b, r: (b, 0, 0, 0)),
            pl.BlockSpec((4, 4 * Cin, Cmid), lambda b, r: (0, 0, 0)),
            pl.BlockSpec((4, 4 * Cin, Cmid), lambda b, r: (0, 0, 0)),
            pl.BlockSpec((1, n_out), lambda b, r: (0, 0)),
        ],
        out_specs=pl.BlockSpec((1, TH, W, n_out), lambda b, r: (b, r, 0, 0)),
        out_shape=jax.ShapeDtypeStruct((B, H, W, n_out), jnp.float32),
        scratch_shapes=[pltpu.VMEM((H + 2, W + 2, Cin), jnp.float32)],
        compiler_params=pltpu.CompilerParams(
            # batch axis parallel (v7x megacore); row-tile axis arbitrary so the
            # per-batch scratch init at row_tile==0 is always valid per core.
            dimension_semantics=("parallel", "arbitrary"),
            vmem_limit_bytes=vmem_limit),
        cost_estimate=pl.CostEstimate(flops=int(flops), transcendentals=0,
                                      bytes_accessed=int(bytes_accessed)),
    )(x_pad, wcv, wup, b_big.reshape(1, n_out))

    # depth-to-space + NHWC->NCHW in a single XLA permute (NCHW required by the spec;
    # skip this if downstream consumes NHWC):
    # packed[b, m, n, py, px, c] -> out[b, c, 2m+py, 2n+px]
    out = packed.reshape(B, H, W, 2, 2, Cout)
    out = out.transpose(0, 5, 1, 3, 2, 4).reshape(B, Cout, 2 * H, 2 * W)
    return out


# ----------------------------- parameter creation ---------------------------

def init_params(key, in_channels, out_channels):
    cmid = out_channels // 2
    ks = jax.random.split(key, 6)

    def uni(k, shape, fan_in):
        bound = 1.0 / math.sqrt(fan_in)
        return jax.random.uniform(k, shape, jnp.float32, -bound, bound)

    return {
        # nn.ConvTranspose2d(in_channels, cmid, 4, stride=2, padding=1)
        'deconv_w': uni(ks[0], (in_channels, cmid, 4, 4), cmid * 16),
        'deconv_b': uni(ks[1], (cmid,), cmid * 16),
        # nn.Conv2d(cmid, cmid, 1)
        'cv1x1_w': uni(ks[2], (cmid, cmid), cmid),
        'cv1x1_b': uni(ks[3], (cmid,), cmid),
        # nn.Conv2d(in_channels, cmid, 1)
        'up1x1_w': uni(ks[4], (cmid, in_channels), in_channels),
        'up1x1_b': uni(ks[5], (cmid,), in_channels),
    }


# ------------------------- NumPy reference (PyTorch semantics) ---------------

def _reference_forward(params, x):
    """Direct (slow) NumPy port of the PyTorch module, small shapes only."""
    xn = np.asarray(x, np.float32)
    B, Cin, H, W = xn.shape
    Wd = np.asarray(params['deconv_w']); bd = np.asarray(params['deconv_b'])
    W1 = np.asarray(params['cv1x1_w']);  b1 = np.asarray(params['cv1x1_b'])
    Wu = np.asarray(params['up1x1_w']);  bu = np.asarray(params['up1x1_b'])
    Cmid = Wd.shape[1]
    Ho, Wo = 2 * H, 2 * W

    # cv path: ConvTranspose2d(4, stride=2, padding=1) -> Conv2d 1x1
    dec = np.tile(bd[None, :, None, None], (B, 1, Ho, Wo)).astype(np.float32)
    for oy in range(Ho):
        for ox in range(Wo):
            acc = np.zeros((B, Cmid), np.float32)
            for ky in range(4):
                ty = oy + 1 - ky
                if ty % 2 != 0:
                    continue
                iy = ty // 2
                if not (0 <= iy < H):
                    continue
                for kx in range(4):
                    tx = ox + 1 - kx
                    if tx % 2 != 0:
                        continue
                    ix = tx // 2
                    if not (0 <= ix < W):
                        continue
                    acc += xn[:, :, iy, ix] @ Wd[:, :, ky, kx]
            dec[:, :, oy, ox] += acc
    cv = np.einsum('om,bmyx->boyx', W1, dec) + b1[None, :, None, None]

    # up path: bilinear x2 (align_corners=False) -> Conv2d 1x1
    def src(o, size):
        s = max(0.5 * (o + 0.5) - 0.5, 0.0)
        i0 = min(int(np.floor(s)), size - 1)
        i1 = min(i0 + 1, size - 1)
        return i0, i1, s - i0

    up_in = np.zeros((B, Cin, Ho, Wo), np.float32)
    for oy in range(Ho):
        y0, y1, ly = src(oy, H)
        for ox in range(Wo):
            x0, x1, lx = src(ox, W)
            up_in[:, :, oy, ox] = ((1 - ly) * (1 - lx) * xn[:, :, y0, x0]
                                   + (1 - ly) * lx * xn[:, :, y0, x1]
                                   + ly * (1 - lx) * xn[:, :, y1, x0]
                                   + ly * lx * xn[:, :, y1, x1])
    up = np.einsum('oc,bcyx->boyx', Wu, up_in) + bu[None, :, None, None]

    return np.concatenate([cv, up], axis=1)


# ----------------------------------- main ------------------------------------

if __name__ == "__main__":
    key = jax.random.PRNGKey(0)
    kx, kp = jax.random.split(key)

    # Small shapes; out_channels chosen so the packed kernel output is lane-dense
    # (4 * out_channels = 128 lanes).
    B, CIN, COUT, H, W = 2, 16, 32, 16, 16

    x = jax.random.normal(kx, (B, CIN, H, W), jnp.float32)          # NCHW, like PyTorch
    params = init_params(kp, CIN, COUT)

    fwd = jax.jit(upsample_forward)
    out = jax.block_until_ready(fwd(params, x))

    assert out.shape == (B, COUT, 2 * H, 2 * W), out.shape
    assert bool(jnp.all(jnp.isfinite(out)))

    # Correctness vs. a direct NumPy port of the PyTorch module (bf16 MXU operands =>
    # loose-ish but layout-bug-catching tolerance).
    ref = _reference_forward(params, x)
    err = float(np.max(np.abs(np.asarray(out) - ref)))
    scale = float(np.max(np.abs(ref)))
    assert err <= 5e-2 * max(scale, 1.0), f"max abs err {err} (ref scale {scale})"

    print("KERNEL_OK")
</pallas_src>

<mosaic_0001>
module attributes {stable_mosaic.version = 11 : i64} {
  func.func @_upsample_kernel(%arg0: i32, %arg1: i32, %arg2: memref<1x18x18x16xf32, #tpu.memory_space<vmem>>, %arg3: memref<4x64x16xbf16, #tpu.memory_space<vmem>>, %arg4: memref<4x64x16xbf16, #tpu.memory_space<vmem>>, %arg5: memref<1x128xf32, #tpu.memory_space<vmem>>, %arg6: memref<1x8x16x128xf32, #tpu.memory_space<vmem>>, %arg7: memref<18x18x16xf32, #tpu.memory_space<vmem>>) attributes {dimension_semantics = [#tpu.dimension_semantics<parallel>, #tpu.dimension_semantics<arbitrary>], iteration_bounds = array<i64: 2, 2>, scalar_prefetch = 0 : i64, scratch_operands = 1 : i64, tpu.core_type = #tpu.core_type<tc>, window_params = [{transform_indices = @transform_0, window_bounds = array<i64: 1, 18, 18, 16>}, {pipeline_mode = #tpu.pipeline_mode<synchronous>, transform_indices = @transform_1, window_bounds = array<i64: 4, 64, 16>}, {pipeline_mode = #tpu.pipeline_mode<synchronous>, transform_indices = @transform_2, window_bounds = array<i64: 4, 64, 16>}, {pipeline_mode = #tpu.pipeline_mode<synchronous>, transform_indices = @transform_3, window_bounds = array<i64: 1, 128>}, {transform_indices = @transform_4, window_bounds = array<i64: 1, 8, 16, 128>}]} {
    %c0_i32 = arith.constant 0 : i32
    %0 = arith.cmpi eq, %arg1, %c0_i32 : i32
    %1 = arith.extui %0 : i1 to i32
    %c0_i32_0 = arith.constant 0 : i32
    %2 = arith.cmpi ne, %1, %c0_i32_0 : i32
    scf.if %2 {
      %cst_128 = arith.constant 0.000000e+00 : f32
      %157 = vector.broadcast %cst_128 : f32 to vector<18x18x16xf32>
      %c0_129 = arith.constant 0 : index
      %c0_130 = arith.constant 0 : index
      %c0_131 = arith.constant 0 : index
      %158 = vector.load %arg7[%c0_129, %c0_130, %c0_131] : memref<18x18x16xf32, #tpu.memory_space<vmem>>, vector<18x18x16xf32>
      tpu.vector_store %arg7[%c0_129, %c0_130, %c0_131], %157 {strides = array<i32>} : memref<18x18x16xf32, #tpu.memory_space<vmem>>, vector<18x18x16xf32>,
      %c0_132 = arith.constant 0 : index
      %c1_133 = arith.constant 1 : index
      %c1_134 = arith.constant 1 : index
      %c0_135 = arith.constant 0 : index
      %159 = vector.load %arg2[%c0_132, %c1_133, %c1_134, %c0_135] : memref<1x18x18x16xf32, #tpu.memory_space<vmem>>, vector<1x16x16x16xf32>
      %160 = vector.shape_cast %159 : vector<1x16x16x16xf32> to vector<16x16x16xf32>
      %c1_136 = arith.constant 1 : index
      %c1_137 = arith.constant 1 : index
      %c0_138 = arith.constant 0 : index
      %161 = vector.load %arg7[%c1_136, %c1_137, %c0_138] : memref<18x18x16xf32, #tpu.memory_space<vmem>>, vector<16x16x16xf32>
      tpu.vector_store %arg7[%c1_136, %c1_137, %c0_138], %160 {strides = array<i32>} : memref<18x18x16xf32, #tpu.memory_space<vmem>>, vector<16x16x16xf32>,
    } else {
    }
    %c8_i32 = arith.constant 8 : i32
    %3 = arith.muli %arg1, %c8_i32 : i32
    %4 = tpu.assume_multiple %3, 8 : i32
    %c0_i32_1 = arith.constant 0 : i32
    %5 = arith.addi %4, %c0_i32_1 : i32
    %6 = arith.index_cast %5 : i32 to index
    %c0 = arith.constant 0 : index
    %c0_2 = arith.constant 0 : index
    %7 = vector.load %arg7[%6, %c0, %c0_2] : memref<18x18x16xf32, #tpu.memory_space<vmem>>, vector<8x16x16xf32>
    %c0_3 = arith.constant 0 : index
    %8 = arith.index_cast %5 : i32 to index
    %c0_4 = arith.constant 0 : index
    %c0_5 = arith.constant 0 : index
    %9 = vector.load %arg2[%c0_3, %8, %c0_4, %c0_5] : memref<1x18x18x16xf32, #tpu.memory_space<vmem>>, vector<1x8x16x16xf32>
    %10 = vector.shape_cast %9 : vector<1x8x16x16xf32> to vector<8x16x16xf32>
    %c0_i32_6 = arith.constant 0 : i32
    %11 = arith.addi %4, %c0_i32_6 : i32
    %12 = arith.index_cast %11 : i32 to index
    %c1 = arith.constant 1 : index
    %c0_7 = arith.constant 0 : index
    %13 = vector.load %arg7[%12, %c1, %c0_7] : memref<18x18x16xf32, #tpu.memory_space<vmem>>, vector<8x16x16xf32>
    %c0_8 = arith.constant 0 : index
    %14 = arith.index_cast %11 : i32 to index
    %c1_9 = arith.constant 1 : index
    %c0_10 = arith.constant 0 : index
    %15 = vector.load %arg2[%c0_8, %14, %c1_9, %c0_10] : memref<1x18x18x16xf32, #tpu.memory_space<vmem>>, vector<1x8x16x16xf32>
    %16 = vector.shape_cast %15 : vector<1x8x16x16xf32> to vector<8x16x16xf32>
    %c1_i32 = arith.constant 1 : i32
    %17 = arith.addi %4, %c1_i32 : i32
    %18 = arith.index_cast %17 : i32 to index
    %c0_11 = arith.constant 0 : index
    %c0_12 = arith.constant 0 : index
    %19 = vector.load %arg7[%18, %c0_11, %c0_12] : memref<18x18x16xf32, #tpu.memory_space<vmem>>, vector<8x16x16xf32>
    %c0_13 = arith.constant 0 : index
    %20 = arith.index_cast %17 : i32 to index
    %c0_14 = arith.constant 0 : index
    %c0_15 = arith.constant 0 : index
    %21 = vector.load %arg2[%c0_13, %20, %c0_14, %c0_15] : memref<1x18x18x16xf32, #tpu.memory_space<vmem>>, vector<1x8x16x16xf32>
    %22 = vector.shape_cast %21 : vector<1x8x16x16xf32> to vector<8x16x16xf32>
    %c1_i32_16 = arith.constant 1 : i32
    %23 = arith.addi %4, %c1_i32_16 : i32
    %24 = arith.index_cast %23 : i32 to index
    %c1_17 = arith.constant 1 : index
    %c0_18 = arith.constant 0 : index
    %25 = vector.load %arg7[%24, %c1_17, %c0_18] : memref<18x18x16xf32, #tpu.memory_space<vmem>>, vector<8x16x16xf32>
    %c0_19 = arith.constant 0 : index
    %26 = arith.index_cast %23 : i32 to index
    %c1_20 = arith.constant 1 : index
    %c0_21 = arith.constant 0 : index
    %27 = vector.load %arg2[%c0_19, %26, %c1_20, %c0_21] : memref<1x18x18x16xf32, #tpu.memory_space<vmem>>, vector<1x8x16x16xf32>
    %28 = vector.shape_cast %27 : vector<1x8x16x16xf32> to vector<8x16x16xf32>
    %29 = tpu.concatenate %7, %13, %19, %25 in 2 : vector<8x16x16xf32>, vector<8x16x16xf32>, vector<8x16x16xf32>, vector<8x16x16xf32> -> vector<8x16x64xf32>
    %30 = vector.shape_cast %29 : vector<8x16x64xf32> to vector<128x64xf32>
    %31 = arith.truncf %30 : vector<128x64xf32> to vector<128x64xbf16>
    %32 = tpu.concatenate %10, %16, %22, %28 in 2 : vector<8x16x16xf32>, vector<8x16x16xf32>, vector<8x16x16xf32>, vector<8x16x16xf32> -> vector<8x16x64xf32>
    %33 = vector.shape_cast %32 : vector<8x16x64xf32> to vector<128x64xf32>
    %34 = arith.truncf %33 : vector<128x64xf32> to vector<128x64xbf16>
    %c0_22 = arith.constant 0 : index
    %c0_23 = arith.constant 0 : index
    %c0_24 = arith.constant 0 : index
    %35 = vector.load %arg3[%c0_22, %c0_23, %c0_24] : memref<4x64x16xbf16, #tpu.memory_space<vmem>>, vector<1x64x16xbf16>
    %36 = vector.shape_cast %35 : vector<1x64x16xbf16> to vector<64x16xbf16>
    %cst = arith.constant dense<0.000000e+00> : vector<128x16xf32>
    %37 = tpu.matmul %31, %36, %cst {dimension_numbers = #tpu.dot_dimension_numbers<[1], [0], [0], [1], [0, 0, 1, 1], [], []>} : vector<128x64xbf16>, vector<64x16xbf16>, vector<128x16xf32> -> vector<128x16xf32>
    %c0_25 = arith.constant 0 : index
    %c0_26 = arith.constant 0 : index
    %c0_27 = arith.constant 0 : index
    %38 = vector.load %arg4[%c0_25, %c0_26, %c0_27] : memref<4x64x16xbf16, #tpu.memory_space<vmem>>, vector<1x64x16xbf16>
    %39 = vector.shape_cast %38 : vector<1x64x16xbf16> to vector<64x16xbf16>
    %cst_28 = arith.constant dense<0.000000e+00> : vector<128x16xf32>
    %40 = tpu.matmul %34, %39, %cst_28 {dimension_numbers = #tpu.dot_dimension_numbers<[1], [0], [0], [1], [0, 0, 1, 1], [], []>} : vector<128x64xbf16>, vector<64x16xbf16>, vector<128x16xf32> -> vector<128x16xf32>
    %c0_i32_29 = arith.constant 0 : i32
    %41 = arith.addi %4, %c0_i32_29 : i32
    %42 = arith.index_cast %41 : i32 to index
    %c1_30 = arith.constant 1 : index
    %c0_31 = arith.constant 0 : index
    %43 = vector.load %arg7[%42, %c1_30, %c0_31] : memref<18x18x16xf32, #tpu.memory_space<vmem>>, vector<8x16x16xf32>
    %c0_32 = arith.constant 0 : index
    %44 = arith.index_cast %41 : i32 to index
    %c1_33 = arith.constant 1 : index
    %c0_34 = arith.constant 0 : index
    %45 = vector.load %arg2[%c0_32, %44, %c1_33, %c0_34] : memref<1x18x18x16xf32, #tpu.memory_space<vmem>>, vector<1x8x16x16xf32>
    %46 = vector.shape_cast %45 : vector<1x8x16x16xf32> to vector<8x16x16xf32>
    %c0_i32_35 = arith.constant 0 : i32
    %47 = arith.addi %4, %c0_i32_35 : i32
    %48 = arith.index_cast %47 : i32 to index
    %c2 = arith.constant 2 : index
    %c0_36 = arith.constant 0 : index
    %49 = vector.load %arg7[%48, %c2, %c0_36] : memref<18x18x16xf32, #tpu.memory_space<vmem>>, vector<8x16x16xf32>
    %c0_37 = arith.constant 0 : index
    %50 = arith.index_cast %47 : i32 to index
    %c2_38 = arith.constant 2 : index
    %c0_39 = arith.constant 0 : index
    %51 = vector.load %arg2[%c0_37, %50, %c2_38, %c0_39] : memref<1x18x18x16xf32, #tpu.memory_space<vmem>>, vector<1x8x16x16xf32>
    %52 = vector.shape_cast %51 : vector<1x8x16x16xf32> to vector<8x16x16xf32>
    %c1_i32_40 = arith.constant 1 : i32
    %53 = arith.addi %4, %c1_i32_40 : i32
    %54 = arith.index_cast %53 : i32 to index
    %c1_41 = arith.constant 1 : index
    %c0_42 = arith.constant 0 : index
    %55 = vector.load %arg7[%54, %c1_41, %c0_42] : memref<18x18x16xf32, #tpu.memory_space<vmem>>, vector<8x16x16xf32>
    %c0_43 = arith.constant 0 : index
    %56 = arith.index_cast %53 : i32 to index
    %c1_44 = arith.constant 1 : index
    %c0_45 = arith.constant 0 : index
    %57 = vector.load %arg2[%c0_43, %56, %c1_44, %c0_45] : memref<1x18x18x16xf32, #tpu.memory_space<vmem>>, vector<1x8x16x16xf32>
    %58 = vector.shape_cast %57 : vector<1x8x16x16xf32> to vector<8x16x16xf32>
    %c1_i32_46 = arith.constant 1 : i32
    %59 = arith.addi %4, %c1_i32_46 : i32
    %60 = arith.index_cast %59 : i32 to index
    %c2_47 = arith.constant 2 : index
    %c0_48 = arith.constant 0 : index
    %61 = vector.load %arg7[%60, %c2_47, %c0_48] : memref<18x18x16xf32, #tpu.memory_space<vmem>>, vector<8x16x16xf32>
    %c0_49 = arith.constant 0 : index
    %62 = arith.index_cast %59 : i32 to index
    %c2_50 = arith.constant 2 : index
    %c0_51 = arith.constant 0 : index
    %63 = vector.load %arg2[%c0_49, %62, %c2_50, %c0_51] : memref<1x18x18x16xf32, #tpu.memory_space<vmem>>, vector<1x8x16x16xf32>
    %64 = vector.shape_cast %63 : vector<1x8x16x16xf32> to vector<8x16x16xf32>
    %65 = tpu.concatenate %43, %49, %55, %61 in 2 : vector<8x16x16xf32>, vector<8x16x16xf32>, vector<8x16x16xf32>, vector<8x16x16xf32> -> vector<8x16x64xf32>
    %66 = vector.shape_cast %65 : vector<8x16x64xf32> to vector<128x64xf32>
    %67 = arith.truncf %66 : vector<128x64xf32> to vector<128x64xbf16>
    %68 = tpu.concatenate %46, %52, %58, %64 in 2 : vector<8x16x16xf32>, vector<8x16x16xf32>, vector<8x16x16xf32>, vector<8x16x16xf32> -> vector<8x16x64xf32>
    %69 = vector.shape_cast %68 : vector<8x16x64xf32> to vector<128x64xf32>
    %70 = arith.truncf %69 : vector<128x64xf32> to vector<128x64xbf16>
    %c1_52 = arith.constant 1 : index
    %c0_53 = arith.constant 0 : index
    %c0_54 = arith.constant 0 : index
    %71 = vector.load %arg3[%c1_52, %c0_53, %c0_54] : memref<4x64x16xbf16, #tpu.memory_space<vmem>>, vector<1x64x16xbf16>
    %72 = vector.shape_cast %71 : vector<1x64x16xbf16> to vector<64x16xbf16>
    %cst_55 = arith.constant dense<0.000000e+00> : vector<128x16xf32>
    %73 = tpu.matmul %67, %72, %cst_55 {dimension_numbers = #tpu.dot_dimension_numbers<[1], [0], [0], [1], [0, 0, 1, 1], [], []>} : vector<128x64xbf16>, vector<64x16xbf16>, vector<128x16xf32> -> vector<128x16xf32>
    %c1_56 = arith.constant 1 : index
    %c0_57 = arith.constant 0 : index
    %c0_58 = arith.constant 0 : index
    %74 = vector.load %arg4[%c1_56, %c0_57, %c0_58] : memref<4x64x16xbf16, #tpu.memory_space<vmem>>, vector<1x64x16xbf16>
    %75 = vector.shape_cast %74 : vector<1x64x16xbf16> to vector<64x16xbf16>
    %cst_59 = arith.constant dense<0.000000e+00> : vector<128x16xf32>
    %76 = tpu.matmul %70, %75, %cst_59 {dimension_numbers = #tpu.dot_dimension_numbers<[1], [0], [0], [1], [0, 0, 1, 1], [], []>} : vector<128x64xbf16>, vector<64x16xbf16>, vector<128x16xf32> -> vector<128x16xf32>
    %c1_i32_60 = arith.constant 1 : i32
    %77 = arith.addi %4, %c1_i32_60 : i32
    %78 = arith.index_cast %77 : i32 to index
    %c0_61 = arith.constant 0 : index
    %c0_62 = arith.constant 0 : index
    %79 = vector.load %arg7[%78, %c0_61, %c0_62] : memref<18x18x16xf32, #tpu.memory_space<vmem>>, vector<8x16x16xf32>
    %c0_63 = arith.constant 0 : index
    %80 = arith.index_cast %77 : i32 to index
    %c0_64 = arith.constant 0 : index
    %c0_65 = arith.constant 0 : index
    %81 = vector.load %arg2[%c0_63, %80, %c0_64, %c0_65] : memref<1x18x18x16xf32, #tpu.memory_space<vmem>>, vector<1x8x16x16xf32>
    %82 = vector.shape_cast %81 : vector<1x8x16x16xf32> to vector<8x16x16xf32>
    %c1_i32_66 = arith.constant 1 : i32
    %83 = arith.addi %4, %c1_i32_66 : i32
    %84 = arith.index_cast %83 : i32 to index
    %c1_67 = arith.constant 1 : index
    %c0_68 = arith.constant 0 : index
    %85 = vector.load %arg7[%84, %c1_67, %c0_68] : memref<18x18x16xf32, #tpu.memory_space<vmem>>, vector<8x16x16xf32>
    %c0_69 = arith.constant 0 : index
    %86 = arith.index_cast %83 : i32 to index
    %c1_70 = arith.constant 1 : index
    %c0_71 = arith.constant 0 : index
    %87 = vector.load %arg2[%c0_69, %86, %c1_70, %c0_71] : memref<1x18x18x16xf32, #tpu.memory_space<vmem>>, vector<1x8x16x16xf32>
    %88 = vector.shape_cast %87 : vector<1x8x16x16xf32> to vector<8x16x16xf32>
    %c2_i32 = arith.constant 2 : i32
    %89 = arith.addi %4, %c2_i32 : i32
    %90 = arith.index_cast %89 : i32 to index
    %c0_72 = arith.constant 0 : index
    %c0_73 = arith.constant 0 : index
    %91 = vector.load %arg7[%90, %c0_72, %c0_73] : memref<18x18x16xf32, #tpu.memory_space<vmem>>, vector<8x16x16xf32>
    %c0_74 = arith.constant 0 : index
    %92 = arith.index_cast %89 : i32 to index
    %c0_75 = arith.constant 0 : index
    %c0_76 = arith.constant 0 : index
    %93 = vector.load %arg2[%c0_74, %92, %c0_75, %c0_76] : memref<1x18x18x16xf32, #tpu.memory_space<vmem>>, vector<1x8x16x16xf32>
    %94 = vector.shape_cast %93 : vector<1x8x16x16xf32> to vector<8x16x16xf32>
    %c2_i32_77 = arith.constant 2 : i32
    %95 = arith.addi %4, %c2_i32_77 : i32
    %96 = arith.index_cast %95 : i32 to index
    %c1_78 = arith.constant 1 : index
    %c0_79 = arith.constant 0 : index
    %97 = vector.load %arg7[%96, %c1_78, %c0_79] : memref<18x18x16xf32, #tpu.memory_space<vmem>>, vector<8x16x16xf32>
    %c0_80 = arith.constant 0 : index
    %98 = arith.index_cast %95 : i32 to index
    %c1_81 = arith.constant 1 : index
    %c0_82 = arith.constant 0 : index
    %99 = vector.load %arg2[%c0_80, %98, %c1_81, %c0_82] : memref<1x18x18x16xf32, #tpu.memory_space<vmem>>, vector<1x8x16x16xf32>
    %100 = vector.shape_cast %99 : vector<1x8x16x16xf32> to vector<8x16x16xf32>
    %101 = tpu.concatenate %79, %85, %91, %97 in 2 : vector<8x16x16xf32>, vector<8x16x16xf32>, vector<8x16x16xf32>, vector<8x16x16xf32> -> vector<8x16x64xf32>
    %102 = vector.shape_cast %101 : vector<8x16x64xf32> to vector<128x64xf32>
    %103 = arith.truncf %102 : vector<128x64xf32> to vector<128x64xbf16>
    %104 = tpu.concatenate %82, %88, %94, %100 in 2 : vector<8x16x16xf32>, vector<8x16x16xf32>, vector<8x16x16xf32>, vector<8x16x16xf32> -> vector<8x16x64xf32>
    %105 = vector.shape_cast %104 : vector<8x16x64xf32> to vector<128x64xf32>
    %106 = arith.truncf %105 : vector<128x64xf32> to vector<128x64xbf16>
    %c2_83 = arith.constant 2 : index
    %c0_84 = arith.constant 0 : index
    %c0_85 = arith.constant 0 : index
    %107 = vector.load %arg3[%c2_83, %c0_84, %c0_85] : memref<4x64x16xbf16, #tpu.memory_space<vmem>>, vector<1x64x16xbf16>
    %108 = vector.shape_cast %107 : vector<1x64x16xbf16> to vector<64x16xbf16>
    %cst_86 = arith.constant dense<0.000000e+00> : vector<128x16xf32>
    %109 = tpu.matmul %103, %108, %cst_86 {dimension_numbers = #tpu.dot_dimension_numbers<[1], [0], [0], [1], [0, 0, 1, 1], [], []>} : vector<128x64xbf16>, vector<64x16xbf16>, vector<128x16xf32> -> vector<128x16xf32>
    %c2_87 = arith.constant 2 : index
    %c0_88 = arith.constant 0 : index
    %c0_89 = arith.constant 0 : index
    %110 = vector.load %arg4[%c2_87, %c0_88, %c0_89] : memref<4x64x16xbf16, #tpu.memory_space<vmem>>, vector<1x64x16xbf16>
    %111 = vector.shape_cast %110 : vector<1x64x16xbf16> to vector<64x16xbf16>
    %cst_90 = arith.constant dense<0.000000e+00> : vector<128x16xf32>
    %112 = tpu.matmul %106, %111, %cst_90 {dimension_numbers = #tpu.dot_dimension_numbers<[1], [0], [0], [1], [0, 0, 1, 1], [], []>} : vector<128x64xbf16>, vector<64x16xbf16>, vector<128x16xf32> -> vector<128x16xf32>
    %c1_i32_91 = arith.constant 1 : i32
    %113 = arith.addi %4, %c1_i32_91 : i32
    %114 = arith.index_cast %113 : i32 to index
    %c1_92 = arith.constant 1 : index
    %c0_93 = arith.constant 0 : index
    %115 = vector.load %arg7[%114, %c1_92, %c0_93] : memref<18x18x16xf32, #tpu.memory_space<vmem>>, vector<8x16x16xf32>
    %c0_94 = arith.constant 0 : index
    %116 = arith.index_cast %113 : i32 to index
    %c1_95 = arith.constant 1 : index
    %c0_96 = arith.constant 0 : index
    %117 = vector.load %arg2[%c0_94, %116, %c1_95, %c0_96] : memref<1x18x18x16xf32, #tpu.memory_space<vmem>>, vector<1x8x16x16xf32>
    %118 = vector.shape_cast %117 : vector<1x8x16x16xf32> to vector<8x16x16xf32>
    %c1_i32_97 = arith.constant 1 : i32
    %119 = arith.addi %4, %c1_i32_97 : i32
    %120 = arith.index_cast %119 : i32 to index
    %c2_98 = arith.constant 2 : index
    %c0_99 = arith.constant 0 : index
    %121 = vector.load %arg7[%120, %c2_98, %c0_99] : memref<18x18x16xf32, #tpu.memory_space<vmem>>, vector<8x16x16xf32>
    %c0_100 = arith.constant 0 : index
    %122 = arith.index_cast %119 : i32 to index
    %c2_101 = arith.constant 2 : index
    %c0_102 = arith.constant 0 : index
    %123 = vector.load %arg2[%c0_100, %122, %c2_101, %c0_102] : memref<1x18x18x16xf32, #tpu.memory_space<vmem>>, vector<1x8x16x16xf32>
    %124 = vector.shape_cast %123 : vector<1x8x16x16xf32> to vector<8x16x16xf32>
    %c2_i32_103 = arith.constant 2 : i32
    %125 = arith.addi %4, %c2_i32_103 : i32
    %126 = arith.index_cast %125 : i32 to index
    %c1_104 = arith.constant 1 : index
    %c0_105 = arith.constant 0 : index
    %127 = vector.load %arg7[%126, %c1_104, %c0_105] : memref<18x18x16xf32, #tpu.memory_space<vmem>>, vector<8x16x16xf32>
    %c0_106 = arith.constant 0 : index
    %128 = arith.index_cast %125 : i32 to index
    %c1_107 = arith.constant 1 : index
    %c0_108 = arith.constant 0 : index
    %129 = vector.load %arg2[%c0_106, %128, %c1_107, %c0_108] : memref<1x18x18x16xf32, #tpu.memory_space<vmem>>, vector<1x8x16x16xf32>
    %130 = vector.shape_cast %129 : vector<1x8x16x16xf32> to vector<8x16x16xf32>
    %c2_i32_109 = arith.constant 2 : i32
    %131 = arith.addi %4, %c2_i32_109 : i32
    %132 = arith.index_cast %131 : i32 to index
    %c2_110 = arith.constant 2 : index
    %c0_111 = arith.constant 0 : index
    %133 = vector.load %arg7[%132, %c2_110, %c0_111] : memref<18x18x16xf32, #tpu.memory_space<vmem>>, vector<8x16x16xf32>
    %c0_112 = arith.constant 0 : index
    %134 = arith.index_cast %131 : i32 to index
    %c2_113 = arith.constant 2 : index
    %c0_114 = arith.constant 0 : index
    %135 = vector.load %arg2[%c0_112, %134, %c2_113, %c0_114] : memref<1x18x18x16xf32, #tpu.memory_space<vmem>>, vector<1x8x16x16xf32>
    %136 = vector.shape_cast %135 : vector<1x8x16x16xf32> to vector<8x16x16xf32>
    %137 = tpu.concatenate %115, %121, %127, %133 in 2 : vector<8x16x16xf32>, vector<8x16x16xf32>, vector<8x16x16xf32>, vector<8x16x16xf32> -> vector<8x16x64xf32>
    %138 = vector.shape_cast %137 : vector<8x16x64xf32> to vector<128x64xf32>
    %139 = arith.truncf %138 : vector<128x64xf32> to vector<128x64xbf16>
    %140 = tpu.concatenate %118, %124, %130, %136 in 2 : vector<8x16x16xf32>, vector<8x16x16xf32>, vector<8x16x16xf32>, vector<8x16x16xf32> -> vector<8x16x64xf32>
    %141 = vector.shape_cast %140 : vector<8x16x64xf32> to vector<128x64xf32>
    %142 = arith.truncf %141 : vector<128x64xf32> to vector<128x64xbf16>
    %c3 = arith.constant 3 : index
    %c0_115 = arith.constant 0 : index
    %c0_116 = arith.constant 0 : index
    %143 = vector.load %arg3[%c3, %c0_115, %c0_116] : memref<4x64x16xbf16, #tpu.memory_space<vmem>>, vector<1x64x16xbf16>
    %144 = vector.shape_cast %143 : vector<1x64x16xbf16> to vector<64x16xbf16>
    %cst_117 = arith.constant dense<0.000000e+00> : vector<128x16xf32>
    %145 = tpu.matmul %139, %144, %cst_117 {dimension_numbers = #tpu.dot_dimension_numbers<[1], [0], [0], [1], [0, 0, 1, 1], [], []>} : vector<128x64xbf16>, vector<64x16xbf16>, vector<128x16xf32> -> vector<128x16xf32>
    %c3_118 = arith.constant 3 : index
    %c0_119 = arith.constant 0 : index
    %c0_120 = arith.constant 0 : index
    %146 = vector.load %arg4[%c3_118, %c0_119, %c0_120] : memref<4x64x16xbf16, #tpu.memory_space<vmem>>, vector<1x64x16xbf16>
    %147 = vector.shape_cast %146 : vector<1x64x16xbf16> to vector<64x16xbf16>
    %cst_121 = arith.constant dense<0.000000e+00> : vector<128x16xf32>
    %148 = tpu.matmul %142, %147, %cst_121 {dimension_numbers = #tpu.dot_dimension_numbers<[1], [0], [0], [1], [0, 0, 1, 1], [], []>} : vector<128x64xbf16>, vector<64x16xbf16>, vector<128x16xf32> -> vector<128x16xf32>
    %149 = tpu.concatenate %37, %40, %73, %76, %109, %112, %145, %148 in 1 : vector<128x16xf32>, vector<128x16xf32>, vector<128x16xf32>, vector<128x16xf32>, vector<128x16xf32>, vector<128x16xf32>, vector<128x16xf32>, vector<128x16xf32> -> vector<128x128xf32>
    %c0_122 = arith.constant 0 : index
    %c0_123 = arith.constant 0 : index
    %150 = vector.load %arg5[%c0_122, %c0_123] : memref<1x128xf32, #tpu.memory_space<vmem>>, vector<1x128xf32>
    %151 = vector.broadcast %150 : vector<1x128xf32> to vector<128x128xf32>
    %152 = arith.addf %149, %151 : vector<128x128xf32>
    %153 = vector.shape_cast %152 : vector<128x128xf32> to vector<8x16x128xf32>
    %c0_124 = arith.constant 0 : index
    %c0_125 = arith.constant 0 : index
    %c0_126 = arith.constant 0 : index
    %c0_127 = arith.constant 0 : index
    %154 = vector.load %arg6[%c0_124, %c0_125, %c0_126, %c0_127] : memref<1x8x16x128xf32, #tpu.memory_space<vmem>>, vector<1x8x16x128xf32>
    %155 = vector.shape_cast %154 : vector<1x8x16x128xf32> to vector<8x16x128xf32>
    %156 = vector.shape_cast %153 : vector<8x16x128xf32> to vector<1x8x16x128xf32>
    tpu.vector_store %arg6[%c0_124, %c0_125, %c0_126, %c0_127], %156 {strides = array<i32>} : memref<1x8x16x128xf32, #tpu.memory_space<vmem>>, vector<1x8x16x128xf32>,
    return
  }
  func.func @transform_0(%arg0: i32, %arg1: i32) -> (i32, i32, i32, i32) {
    %c0_i32 = arith.constant 0 : i32
    %c0_i32_0 = arith.constant 0 : i32
    %c0_i32_1 = arith.constant 0 : i32
    %c0_i32_2 = arith.constant 0 : i32
    return %arg0, %c0_i32, %c0_i32_0, %c0_i32_1 : i32, i32, i32, i32
  }
  func.func @transform_1(%arg0: i32, %arg1: i32) -> (i32, i32, i32) {
    %c0_i32 = arith.constant 0 : i32
    %c0_i32_0 = arith.constant 0 : i32
    %c0_i32_1 = arith.constant 0 : i32
    %c0_i32_2 = arith.constant 0 : i32
    return %c0_i32, %c0_i32_0, %c0_i32_1 : i32, i32, i32
  }
  func.func @transform_2(%arg0: i32, %arg1: i32) -> (i32, i32, i32) {
    %c0_i32 = arith.constant 0 : i32
    %c0_i32_0 = arith.constant 0 : i32
    %c0_i32_1 = arith.constant 0 : i32
    %c0_i32_2 = arith.constant 0 : i32
    return %c0_i32, %c0_i32_0, %c0_i32_1 : i32, i32, i32
  }
  func.func @transform_3(%arg0: i32, %arg1: i32) -> (i32, i32) {
    %c0_i32 = arith.constant 0 : i32
    %c0_i32_0 = arith.constant 0 : i32
    %c0_i32_1 = arith.constant 0 : i32
    return %c0_i32, %c0_i32_0 : i32, i32
  }
  func.func @transform_4(%arg0: i32, %arg1: i32) -> (i32, i32, i32, i32) {
    %c0_i32 = arith.constant 0 : i32
    %c0_i32_0 = arith.constant 0 : i32
    %c0_i32_1 = arith.constant 0 : i32
    return %arg0, %arg1, %c0_i32, %c0_i32_0 : i32, i32, i32, i32
  }
}

</mosaic_0001>

<llo_original>
// kernel: tile.8
$region0: #{tile.8}
  #allocation0 [shape = 's32[1]{0}', space=sflag, size = 0x4, scoped, tag = 'scoped memory for tile.8']
  %s0 = inlined_call_operand.vmem [shape: f32[32], index: 0, kind: input, shape index: {}]
  %s1 = inlined_call_operand.vmem [shape: f32[4,32], index: 1, kind: output, shape index: {}]
  // Predicated region
  $region2: #{tile.8} parent=0 // pred_check
    _
  $region3: #{tile.8} parent=0 // pred_check_branch
    %3 = sbr.rel (0) target = $region5
  $region4: #{tile.8} parent=0 // pred_region
    _
  $region5: #{tile.8} parent=0 // pred_fallthru
    _
  %v4 = vld [vmem:[%s0] ss:$0 sm:$0xff]
  %5 = vst [vmem:[%s1] sm:$0xf] %v4

// kernel: tile.9
$region0: #{tile.9}
  %s0 = inlined_call_operand.vmem [shape: f32[4,32], index: 0, kind: input, shape index: {}]
  %s1 = inlined_call_operand.vmem [shape: f32[1,128], index: 1, kind: output, shape index: {}]
  $region1: #{tile.9} parent=0
    #allocation0 [shape = 'u8[4096]{0}', space=vmem, size = 0x1000, scoped, tag = 'scoped mem for output reshape']
    #allocation1 [shape = 'u8[4096]{0}', space=vmem, size = 0x1000, scoped, tag = 'scoped mem for input reshape']
    %s3 = sshllo.u32 0, 4
    %v4 = vld [vmem:[%s0] sm:%s3]
    %5 = vst [vmem:[#allocation1] sm:%s3] %v4
    %v6 = vld [vmem:[#allocation1] sm:$0x1]
    %vm7 = vcmask 261120
    %8 = vst.msk [vmem:[#allocation0] sm:$0x1] %vm7, %v6
    %s9 = scalar_lea.vmem [#allocation1], 3
    %v10 = vld [vmem:[%s9] sm:$0x1]
    %11 = vrot.lane.b32.xlu0 %v10, 96
    %v12 = vpop.permute.xlu0 %11
    %vm13 = vcmask 1048320
    %14 = vst.msk [vmem:[#allocation0] sm:$0x1] %vm13, %v12
    %s15 = scalar_lea.vmem [#allocation1], 2
    %v16 = vld [vmem:[%s15] sm:$0x1]
    %17 = vrot.lane.b32.xlu0 %v16, 64
    %v18 = vpop.permute.xlu0 %17
    %vm19 = vcmask 785920
    %20 = vst.msk [vmem:[#allocation0] sm:$0x1] %vm19, %v18
    %s21 = scalar_lea.vmem [#allocation1], 1
    %v22 = vld [vmem:[%s21] sm:$0x1]
    %23 = vrot.lane.b32.xlu0 %v22, 32
    %v24 = vpop.permute.xlu0 %23
    %vm25 = vcmask 523520
    %26 = vst.msk [vmem:[#allocation0] sm:$0x1] %vm25, %v24
    %s28 = sshllo.u32 0, 1
    %v30 = vld [vmem:[#allocation0] sm:%s28]
    %s31 = sshllo.u32 0, 1
    %32 = vst [vmem:[%s1] sm:%s31] %v30

// kernel: upsample_forward.1
$region0: #{upsample_forward.1}
  #allocation0 [shape = 'u32[]', space=smem, size = 0x4, offset = 0x4, fixed_abs, tag = 'smem constant byte address 0x4 - core index']
  #allocation1 [shape = 'u32[144,128]{1,0:T(1,128)}', space=vmem, size = 0x12000, scoped, tag = 'internal scratch']
  #allocation2 [shape = 'f32[18,18,16]{2,1,0:T(8,128)}', space=vmem, size = 0x36000, scoped, tag = 'scratch operand']
  %s0 = inlined_call_operand.vmem [shape: f32[2,18,18,16], index: 0, kind: input, shape index: {}]
  %s1 = inlined_call_operand.vmem [shape: bf16[4,64,16], index: 1, kind: input, shape index: {}]
  %s2 = inlined_call_operand.vmem [shape: bf16[4,64,16], index: 2, kind: input, shape index: {}]
  %s3 = inlined_call_operand.vmem [shape: f32[1,128], index: 3, kind: input, shape index: {}]
  %s4 = inlined_call_operand.vmem [shape: f32[2,16,16,128], index: 4, kind: output, shape index: {}]
  %s5 = sld [smem:[#allocation0]]
  $region53: #{upsample_forward.1} parent=0
    _
  %s7 = ssub.s32 1, %s5
  %s8 = scalar_select 0, %s7, %s5
  loop: start=0, step=1, limit=6
  $region2: #{upsample_forward.1} parent=0 // loop_pre_header
    _
  $region3: #{upsample_forward.1} parent=0 // loop_header
    %s10 = sphi 0, %s14
    %p11 = scmp.ge.s32.totalorder %s10, 6
    %s17 = sphi 0, %s29
    %s18 = sphi 0, %s25
    %s19 = sphi 0, %s17
    %s20 = sphi 0, %s18
    %s21 = sphi 0, %s19
    %s22 = sphi 0, %s20
    %s32 = sphi 0, %s34
    %s35 = sphi 0, %s32
    %s36 = sphi 0, %s35
    %s52 = sphi 0, %s36
    %s56 = sphi 0, %s56
    %s58 = sphi 0, %s56
    %s59 = sphi 0, %s58
    %s73 = sphi 0, %s59
    %s77 = sphi 0, %s77
    %s79 = sphi 0, %s77
    %s80 = sphi 0, %s79
    %s94 = sphi 0, %s80
    %s98 = sphi 0, %s98
    %s100 = sphi 0, %s98
    %s101 = sphi 0, %s100
    %s115 = sphi 0, %s101
    %s123 = sphi 0, %s125
    %s126 = sphi 0, %s123
    %s127 = sphi 0, %s126
    %s143 = sphi 0, %s127
  $region4: #{upsample_forward.1} parent=0 // loop_header_branch
    %13 = sbr.rel (%p11) target = $region8
  $region5: #{upsample_forward.1} parent=0 // loop_body
    %s15 = ssub.s32 %s10, 1
    %s16 = ssub.s32 %s10, 2
    %s23 = sadd.s32 1, %s18
    %p24 = scmp.ge.s32.totalorder %s23, 2
    %s25 = scalar_select %p24, 0, %s23
    %s26 = sadd.s32 1, %s17
    %s27 = scalar_select %p24, %s26, %s17
    %p28 = scmp.ge.s32.totalorder %s27, 2
    %s29 = scalar_select %p28, 0, %s27
    %s30 = ssub.s32 %s17, %s29
    %p31 = scmp.eq.s32.totalorder %s30, 0
    %s33 = sadd.s32 %s32, 1
    %s34 = scalar_select %p31, %s32, %s33
    %p37 = pneg %p31
    %p38 = scmp.eq.s32.totalorder %s10, 3
    %p39 = por %p37, %p38
    %p40 = scmp.ne.s32.totalorder %s32, %s35
    %p41 = scmp.eq.s32.totalorder %s10, 0
    %p42 = por %p40, %p41
    %p43 = scmp.ne.s32.totalorder %s32, %s35
    %p44 = scmp.eq.s32.totalorder %s15, 3
    %p45 = por %p43, %p44
    %p46 = scmp.ne.s32.totalorder %s35, %s36
    %p47 = scmp.eq.s32.totalorder %s15, 0
    %p48 = por %p46, %p47
    %p49 = scmp.ne.s32.totalorder %s35, %s36
    %p50 = scmp.eq.s32.totalorder %s16, 3
    %p51 = por %p49, %p50
    %p53 = scmp.ne.s32.totalorder %s36, %s52
    %p54 = scmp.eq.s32.totalorder %s16, 0
    %p55 = por %p53, %p54
    %s57 = sadd.s32 %s56, 1
    %p60 = scmp.eq.s32.totalorder %s10, 3
    %p61 = scmp.ne.s32.totalorder %s56, %s58
    %p62 = scmp.eq.s32.totalorder %s10, 0
    %p63 = por %p61, %p62
    %p64 = scmp.ne.s32.totalorder %s56, %s58
    %p65 = scmp.eq.s32.totalorder %s15, 3
    %p66 = por %p64, %p65
    %p67 = scmp.ne.s32.totalorder %s58, %s59
    %p68 = scmp.eq.s32.totalorder %s15, 0
    %p69 = por %p67, %p68
    %p70 = scmp.ne.s32.totalorder %s58, %s59
    %p71 = scmp.eq.s32.totalorder %s16, 3
    %p72 = por %p70, %p71
    %p74 = scmp.ne.s32.totalorder %s59, %s73
    %p75 = scmp.eq.s32.totalorder %s16, 0
    %p76 = por %p74, %p75
    %s78 = sadd.s32 %s77, 1
    %p81 = scmp.eq.s32.totalorder %s10, 3
    %p82 = scmp.ne.s32.totalorder %s77, %s79
    %p83 = scmp.eq.s32.totalorder %s10, 0
    %p84 = por %p82, %p83
    %p85 = scmp.ne.s32.totalorder %s77, %s79
    %p86 = scmp.eq.s32.totalorder %s15, 3
    %p87 = por %p85, %p86
    %p88 = scmp.ne.s32.totalorder %s79, %s80
    %p89 = scmp.eq.s32.totalorder %s15, 0
    %p90 = por %p88, %p89
    %p91 = scmp.ne.s32.totalorder %s79, %s80
    %p92 = scmp.eq.s32.totalorder %s16, 3
    %p93 = por %p91, %p92
    %p95 = scmp.ne.s32.totalorder %s80, %s94
    %p96 = scmp.eq.s32.totalorder %s16, 0
    %p97 = por %p95, %p96
    %s99 = sadd.s32 %s98, 1
    %p102 = scmp.eq.s32.totalorder %s10, 3
    %p103 = scmp.ne.s32.totalorder %s98, %s100
    %p104 = scmp.eq.s32.totalorder %s10, 0
    %p105 = por %p103, %p104
    %p106 = scmp.ne.s32.totalorder %s98, %s100
    %p107 = scmp.eq.s32.totalorder %s15, 3
    %p108 = por %p106, %p107
    %p109 = scmp.ne.s32.totalorder %s100, %s101
    %p110 = scmp.eq.s32.totalorder %s15, 0
    %p111 = por %p109, %p110
    %p112 = scmp.ne.s32.totalorder %s100, %s101
    %p113 = scmp.eq.s32.totalorder %s16, 3
    %p114 = por %p112, %p113
    %p116 = scmp.ne.s32.totalorder %s101, %s115
    %p117 = scmp.eq.s32.totalorder %s16, 0
    %p118 = por %p116, %p117
    %s119 = ssub.s32 %s17, %s29
    %s120 = ssub.s32 %s18, %s25
    %s121 = sor.u32 %s119, %s120
    %p122 = scmp.eq.s32.totalorder %s121, 0
    %s124 = sadd.s32 %s123, 1
    %s125 = scalar_select %p122, %s123, %s124
    %p128 = pneg %p122
    %p129 = scmp.eq.s32.totalorder %s10, 3
    %p130 = por %p128, %p129
    %p131 = scmp.ne.s32.totalorder %s123, %s126
    %p132 = scmp.eq.s32.totalorder %s10, 0
    %p133 = por %p131, %p132
    %p134 = scmp.ne.s32.totalorder %s123, %s126
    %p135 = scmp.eq.s32.totalorder %s15, 3
    %p136 = por %p134, %p135
    %p137 = scmp.ne.s32.totalorder %s126, %s127
    %p138 = scmp.eq.s32.totalorder %s15, 0
    %p139 = por %p137, %p138
    %p140 = scmp.ne.s32.totalorder %s126, %s127
    %p141 = scmp.eq.s32.totalorder %s16, 3
    %p142 = por %p140, %p141
    %p144 = scmp.ne.s32.totalorder %s127, %s143
    %p145 = scmp.eq.s32.totalorder %s16, 0
    %p146 = por %p144, %p145
    %p147 = scmp.le.s32.totalorder 1, %s10
    %p148 = scmp.lt.s32.totalorder %s10, 5
    %p149 = pnand %p147, %p148
    %p150 = pneg %p149
    // Predicated region
    $region9: #{upsample_forward.1} parent=5 // pred_check
      _
    $region10: #{upsample_forward.1} parent=5 // pred_check_branch
      %152 = sbr.rel (%p149) target = $region12
    $region11: #{upsample_forward.1} parent=5 // pred_region
      %s153 = ssub.s32 %s10, 1
      // Predicated region
      $region13: #{upsample_forward.1} parent=11 // pred_check
        %p154 = pneg %p69
      $region14: #{upsample_forward.1} parent=11 // pred_check_branch
        %156 = sbr.rel (%p154) target = $region16
      $region15: #{upsample_forward.1} parent=11 // pred_region
        _
      $region16: #{upsample_forward.1} parent=11 // pred_fallthru
        _
      // Predicated region
      $region17: #{upsample_forward.1} parent=11 // pred_check
        %p157 = pneg %p90
      $region18: #{upsample_forward.1} parent=11 // pred_check_branch
        %159 = sbr.rel (%p157) target = $region20
      $region19: #{upsample_forward.1} parent=11 // pred_region
        _
      $region20: #{upsample_forward.1} parent=11 // pred_fallthru
        _
      // Predicated region
      $region21: #{upsample_forward.1} parent=11 // pred_check
        %p160 = pneg %p111
      $region22: #{upsample_forward.1} parent=11 // pred_check_branch
        %162 = sbr.rel (%p160) target = $region24
      $region23: #{upsample_forward.1} parent=11 // pred_region
        _
      $region24: #{upsample_forward.1} parent=11 // pred_fallthru
        _
    $region12: #{upsample_forward.1} parent=5 // pred_fallthru
      _
    %p163 = scmp.lt.s32.totalorder %s10, 4
    // Predicated region
    $region25: #{upsample_forward.1} parent=5 // pred_check
      %p164 = pneg %p163
    $region26: #{upsample_forward.1} parent=5 // pred_check_branch
      %166 = sbr.rel (%p164) target = $region28
    $region27: #{upsample_forward.1} parent=5 // pred_region
      // Predicated region
      $region29: #{upsample_forward.1} parent=27 // pred_check
        %p167 = pneg %p42
      $region30: #{upsample_forward.1} parent=27 // pred_check_branch
        %169 = sbr.rel (%p167) target = $region32
      $region31: #{upsample_forward.1} parent=27 // pred_region
        %p170 = scmp.lt.s32.totalorder %s17, 1
        %s171 = scalar_select %p170, %s17, 1
        %s172 = smul.addr %s171, 54
        %s173 = smul.addr %s172, 8
        %s174 = scalar_lea.vmem %s0, %s173
      $region32: #{upsample_forward.1} parent=27 // pred_fallthru
        _
    $region28: #{upsample_forward.1} parent=5 // pred_fallthru
      _
    %p175 = scmp.le.s32.totalorder 1, %s10
    %p176 = scmp.lt.s32.totalorder %s10, 5
    %p177 = pnand %p175, %p176
    %p178 = pneg %p177
    // Predicated region
    $region33: #{upsample_forward.1} parent=5 // pred_check
      _
    $region34: #{upsample_forward.1} parent=5 // pred_check_branch
      %180 = sbr.rel (%p177) target = $region36
    $region35: #{upsample_forward.1} parent=5 // pred_region
      %s181 = ssub.s32 %s10, 1
      %p182 = scmp.lt.s32.totalorder %s19, 1
      %s183 = scalar_select %p182, %s19, 1
      %s184 = smul.addr %s183, 54
      %s185 = smul.addr %s184, 8
      %s186 = scalar_lea.vmem %s0, %s185
      %p187 = pneg %p48
      %p188 = pneg %p45
      %p189 = pneg %p69
      %p190 = pneg %p66
      %p191 = pneg %p90
      %p192 = pneg %p87
      %p193 = pneg %p111
      %p194 = pneg %p108
      %p195 = pneg %p139
      %p196 = pneg %p136
      %s197 = smul.u32 8, %s20
      %p198 = scmp.lt.s32.totalorder %s19, 1
      %s199 = scalar_select %p198, %s19, 1
      %p200 = scmp.lt.s32.totalorder %s197, 15
      %s201 = scalar_select %p200, %s197, 15
      %s202 = smul.addr %s201, 2
      %s203 = smul.addr %s199, 32
      %s204 = sadd.s32 %s202, %s203
      %s205 = smul.addr %s204, 8
      %s206 = scalar_lea.vmem %s4, %s205
      %p207 = scmp.lt.s32.totalorder %s19, 1
      %s208 = scalar_select %p207, %s19, 1
      %s209 = smul.addr %s208, 54
      %s210 = smul.addr %s209, 8
      %s211 = scalar_lea.vmem %s0, %s210
      %s212 = smul.u32 8, %s20
      %p213 = scmp.lt.s32.totalorder %s19, 1
      %s214 = scalar_select %p213, %s19, 1
      %p215 = scmp.lt.s32.totalorder %s212, 15
      %s216 = scalar_select %p215, %s212, 15
      %s217 = smul.addr %s216, 2
      %s218 = smul.addr %s214, 32
      %s219 = sadd.s32 %s217, %s218
      %s220 = smul.addr %s219, 8
      %s221 = scalar_lea.vmem %s4, %s220
      %s222 = smul.u32 8, %s20
      %p224 = scmp.eq.s32.totalorder %s20, 0
      // Predicated region
      $region37: #{upsample_forward.1} parent=35 // pred_check
        %p225 = pneg %p224
      $region38: #{upsample_forward.1} parent=35 // pred_check_branch
        %227 = sbr.rel (%p225) target = $region40
      $region39: #{upsample_forward.1} parent=35 // pred_region
        %vm228 = vcmask 130048
        %229 = vst.msk [vmem:[#allocation2] sm:$0xff] %vm228, 0.0
        %230 = vst.msk [vmem:[#allocation2 + $0x8] sm:$0xff] %vm228, 0.0
        %vm231 = vcmask 123904
        %232 = vst.msk [vmem:[#allocation2 + $0x10] sm:$0x3] %vm231, 0.0
        %233 = vst.msk [vmem:[#allocation2 + $0x18] sm:$0xff] %vm228, 0.0
        %234 = vst.msk [vmem:[#allocation2 + $0x20] sm:$0xff] %vm228, 0.0
        %235 = vst.msk [vmem:[#allocation2 + $0x28] sm:$0x3] %vm231, 0.0
        %236 = vst.msk [vmem:[#allocation2 + $0x30] sm:$0xff] %vm228, 0.0
        %237 = vst.msk [vmem:[#allocation2 + $0x38] sm:$0xff] %vm228, 0.0
        %238 = vst.msk [vmem:[#allocation2 + $0x40] sm:$0x3] %vm231, 0.0
        %239 = vst.msk [vmem:[#allocation2 + $0x48] sm:$0xff] %vm228, 0.0
        %240 = vst.msk [vmem:[#allocation2 + $0x50] sm:$0xff] %vm228, 0.0
        %241 = vst.msk [vmem:[#allocation2 + $0x58] sm:$0x3] %vm231, 0.0
        %242 = vst.msk [vmem:[#allocation2 + $0x60] sm:$0xff] %vm228, 0.0
        %243 = vst.msk [vmem:[#allocation2 + $0x68] sm:$0xff] %vm228, 0.0
        %244 = vst.msk [vmem:[#allocation2 + $0x70] sm:$0x3] %vm231, 0.0
        %245 = vst.msk [vmem:[#allocation2 + $0x78] sm:$0xff] %vm228, 0.0
        %246 = vst.msk [vmem:[#allocation2 + $0x80] sm:$0xff] %vm228, 0.0
        %247 = vst.msk [vmem:[#allocation2 + $0x88] sm:$0x3] %vm231, 0.0
        %248 = vst.msk [vmem:[#allocation2 + $0x90] sm:$0xff] %vm228, 0.0
        %249 = vst.msk [vmem:[#allocation2 + $0x98] sm:$0xff] %vm228, 0.0
        %250 = vst.msk [vmem:[#allocation2 + $0xa0] sm:$0x3] %vm231, 0.0
        %251 = vst.msk [vmem:[#allocation2 + $0xa8] sm:$0xff] %vm228, 0.0
        %252 = vst.msk [vmem:[#allocation2 + $0xb0] sm:$0xff] %vm228, 0.0
        %253 = vst.msk [vmem:[#allocation2 + $0xb8] sm:$0x3] %vm231, 0.0
        %254 = vst.msk [vmem:[#allocation2 + $0xc0] sm:$0xff] %vm228, 0.0
        %255 = vst.msk [vmem:[#allocation2 + $0xc8] sm:$0xff] %vm228, 0.0
        %256 = vst.msk [vmem:[#allocation2 + $0xd0] sm:$0x3] %vm231, 0.0
        %257 = vst.msk [vmem:[#allocation2 + $0xd8] sm:$0xff] %vm228, 0.0
        %258 = vst.msk [vmem:[#allocation2 + $0xe0] sm:$0xff] %vm228, 0.0
        %259 = vst.msk [vmem:[#allocation2 + $0xe8] sm:$0x3] %vm231, 0.0
        %260 = vst.msk [vmem:[#allocation2 + $0xf0] sm:$0xff] %vm228, 0.0
        %261 = vst.msk [vmem:[#allocation2 + $0xf8] sm:$0xff] %vm228, 0.0
        %262 = vst.msk [vmem:[#allocation2 + $0x100] sm:$0x3] %vm231, 0.0
        %263 = vst.msk [vmem:[#allocation2 + $0x108] sm:$0xff] %vm228, 0.0
        %264 = vst.msk [vmem:[#allocation2 + $0x110] sm:$0xff] %vm228, 0.0
        %265 = vst.msk [vmem:[#allocation2 + $0x118] sm:$0x3] %vm231, 0.0
        %266 = vst.msk [vmem:[#allocation2 + $0x120] sm:$0xff] %vm228, 0.0
        %267 = vst.msk [vmem:[#allocation2 + $0x128] sm:$0xff] %vm228, 0.0
        %268 = vst.msk [vmem:[#allocation2 + $0x130] sm:$0x3] %vm231, 0.0
        %269 = vst.msk [vmem:[#allocation2 + $0x138] sm:$0xff] %vm228, 0.0
        %270 = vst.msk [vmem:[#allocation2 + $0x140] sm:$0xff] %vm228, 0.0
        %271 = vst.msk [vmem:[#allocation2 + $0x148] sm:$0x3] %vm231, 0.0
        %272 = vst.msk [vmem:[#allocation2 + $0x150] sm:$0xff] %vm228, 0.0
        %273 = vst.msk [vmem:[#allocation2 + $0x158] sm:$0xff] %vm228, 0.0
        %274 = vst.msk [vmem:[#allocation2 + $0x160] sm:$0x3] %vm231, 0.0
        %275 = vst.msk [vmem:[#allocation2 + $0x168] sm:$0xff] %vm228, 0.0
        %276 = vst.msk [vmem:[#allocation2 + $0x170] sm:$0xff] %vm228, 0.0
        %277 = vst.msk [vmem:[#allocation2 + $0x178] sm:$0x3] %vm231, 0.0
        %278 = vst.msk [vmem:[#allocation2 + $0x180] sm:$0xff] %vm228, 0.0
        %279 = vst.msk [vmem:[#allocation2 + $0x188] sm:$0xff] %vm228, 0.0
        %280 = vst.msk [vmem:[#allocation2 + $0x190] sm:$0x3] %vm231, 0.0
        %281 = vst.msk [vmem:[#allocation2 + $0x198] sm:$0xff] %vm228, 0.0
        %282 = vst.msk [vmem:[#allocation2 + $0x1a0] sm:$0xff] %vm228, 0.0
        %283 = vst.msk [vmem:[#allocation2 + $0x1a8] sm:$0x3] %vm231, 0.0
        %s284 = scalar_lea.vmem %s211, 24
        %v285 = vld [vmem:[%s284 + $0x1] sm:$0xff]
        %v286 = vld [vmem:[%s284 + $0x9] sm:$0xff]
        %v287 = vld [vmem:[%s284 + $0x19] sm:$0xff]
        %v288 = vld [vmem:[%s284 + $0x21] sm:$0xff]
        %v289 = vld [vmem:[%s284 + $0x31] sm:$0xff]
        %v290 = vld [vmem:[%s284 + $0x39] sm:$0xff]
        %v291 = vld [vmem:[%s284 + $0x49] sm:$0xff]
        %v292 = vld [vmem:[%s284 + $0x51] sm:$0xff]
        %v293 = vld [vmem:[%s284 + $0x61] sm:$0xff]
        %v294 = vld [vmem:[%s284 + $0x69] sm:$0xff]
        %v295 = vld [vmem:[%s284 + $0x79] sm:$0xff]
        %v296 = vld [vmem:[%s284 + $0x81] sm:$0xff]
        %v297 = vld [vmem:[%s284 + $0x91] sm:$0xff]
        %v298 = vld [vmem:[%s284 + $0x99] sm:$0xff]
        %v299 = vld [vmem:[%s284 + $0xa9] sm:$0xff]
        %v300 = vld [vmem:[%s284 + $0xb1] sm:$0xff]
        %v301 = vld [vmem:[%s284 + $0xc1] sm:$0xff]
        %v302 = vld [vmem:[%s284 + $0xc9] sm:$0xff]
        %v303 = vld [vmem:[%s284 + $0xd9] sm:$0xff]
        %v304 = vld [vmem:[%s284 + $0xe1] sm:$0xff]
        %v305 = vld [vmem:[%s284 + $0xf1] sm:$0xff]
        %v306 = vld [vmem:[%s284 + $0xf9] sm:$0xff]
        %v307 = vld [vmem:[%s284 + $0x109] sm:$0xff]
        %v308 = vld [vmem:[%s284 + $0x111] sm:$0xff]
        %v309 = vld [vmem:[%s284 + $0x121] sm:$0xff]
        %v310 = vld [vmem:[%s284 + $0x129] sm:$0xff]
        %v311 = vld [vmem:[%s284 + $0x139] sm:$0xff]
        %v312 = vld [vmem:[%s284 + $0x141] sm:$0xff]
        %v313 = vld [vmem:[%s284 + $0x151] sm:$0xff]
        %v314 = vld [vmem:[%s284 + $0x159] sm:$0xff]
        %v315 = vld [vmem:[%s284 + $0x169] sm:$0xff]
        %v316 = vld [vmem:[%s284 + $0x171] sm:$0xff]
        %s317 = scalar_lea.vmem [#allocation2], 24
        %318 = vst.msk [vmem:[%s317 + $0x1] sm:$0xff] %vm228, %v285
        %319 = vst.msk [vmem:[%s317 + $0x9] sm:$0xff] %vm228, %v286
        %320 = vst.msk [vmem:[%s317 + $0x19] sm:$0xff] %vm228, %v287
        %321 = vst.msk [vmem:[%s317 + $0x21] sm:$0xff] %vm228, %v288
        %322 = vst.msk [vmem:[%s317 + $0x31] sm:$0xff] %vm228, %v289
        %323 = vst.msk [vmem:[%s317 + $0x39] sm:$0xff] %vm228, %v290
        %324 = vst.msk [vmem:[%s317 + $0x49] sm:$0xff] %vm228, %v291
        %325 = vst.msk [vmem:[%s317 + $0x51] sm:$0xff] %vm228, %v292
        %326 = vst.msk [vmem:[%s317 + $0x61] sm:$0xff] %vm228, %v293
        %327 = vst.msk [vmem:[%s317 + $0x69] sm:$0xff] %vm228, %v294
        %328 = vst.msk [vmem:[%s317 + $0x79] sm:$0xff] %vm228, %v295
        %329 = vst.msk [vmem:[%s317 + $0x81] sm:$0xff] %vm228, %v296
        %330 = vst.msk [vmem:[%s317 + $0x91] sm:$0xff] %vm228, %v297
        %331 = vst.msk [vmem:[%s317 + $0x99] sm:$0xff] %vm228, %v298
        %332 = vst.msk [vmem:[%s317 + $0xa9] sm:$0xff] %vm228, %v299
        %333 = vst.msk [vmem:[%s317 + $0xb1] sm:$0xff] %vm228, %v300
        %334 = vst.msk [vmem:[%s317 + $0xc1] sm:$0xff] %vm228, %v301
        %335 = vst.msk [vmem:[%s317 + $0xc9] sm:$0xff] %vm228, %v302
        %336 = vst.msk [vmem:[%s317 + $0xd9] sm:$0xff] %vm228, %v303
        %337 = vst.msk [vmem:[%s317 + $0xe1] sm:$0xff] %vm228, %v304
        %338 = vst.msk [vmem:[%s317 + $0xf1] sm:$0xff] %vm228, %v305
        %339 = vst.msk [vmem:[%s317 + $0xf9] sm:$0xff] %vm228, %v306
        %340 = vst.msk [vmem:[%s317 + $0x109] sm:$0xff] %vm228, %v307
        %341 = vst.msk [vmem:[%s317 + $0x111] sm:$0xff] %vm228, %v308
        %342 = vst.msk [vmem:[%s317 + $0x121] sm:$0xff] %vm228, %v309
        %343 = vst.msk [vmem:[%s317 + $0x129] sm:$0xff] %vm228, %v310
        %344 = vst.msk [vmem:[%s317 + $0x139] sm:$0xff] %vm228, %v311
        %345 = vst.msk [vmem:[%s317 + $0x141] sm:$0xff] %vm228, %v312
        %346 = vst.msk [vmem:[%s317 + $0x151] sm:$0xff] %vm228, %v313
        %347 = vst.msk [vmem:[%s317 + $0x159] sm:$0xff] %vm228, %v314
        %348 = vst.msk [vmem:[%s317 + $0x169] sm:$0xff] %vm228, %v315
        %349 = vst.msk [vmem:[%s317 + $0x171] sm:$0xff] %vm228, %v316
      $region40: #{upsample_forward.1} parent=35 // pred_fallthru
        _
      %s350 = smul.u32 %s20, 8
      %s351 = smul.u32 %s350, 24
      %s352 = scalar_lea.vmem [#allocation2], %s351
      %v353 = vld [vmem:[%s352] sm:$0xff]
      %v354 = vld [vmem:[%s352 + $0x8] sm:$0xff]
      %v355 = vld [vmem:[%s352 + $0x18] sm:$0xff]
      %v356 = vld [vmem:[%s352 + $0x20] sm:$0xff]
      %v357 = vld [vmem:[%s352 + $0x30] sm:$0xff]
      %v358 = vld [vmem:[%s352 + $0x38] sm:$0xff]
      %v359 = vld [vmem:[%s352 + $0x48] sm:$0xff]
      %v360 = vld [vmem:[%s352 + $0x50] sm:$0xff]
      %v361 = vld [vmem:[%s352 + $0x60] sm:$0xff]
      %v362 = vld [vmem:[%s352 + $0x68] sm:$0xff]
      %v363 = vld [vmem:[%s352 + $0x78] sm:$0xff]
      %v364 = vld [vmem:[%s352 + $0x80] sm:$0xff]
      %v365 = vld [vmem:[%s352 + $0x90] sm:$0xff]
      %v366 = vld [vmem:[%s352 + $0x98] sm:$0xff]
      %v367 = vld [vmem:[%s352 + $0xa8] sm:$0xff]
      %v368 = vld [vmem:[%s352 + $0xb0] sm:$0xff]
      %s369 = scalar_lea.vmem %s211, %s351
      %v370 = vld [vmem:[%s369] sm:$0xff]
      %v371 = vld [vmem:[%s369 + $0x8] sm:$0xff]
      %v372 = vld [vmem:[%s369 + $0x18] sm:$0xff]
      %v373 = vld [vmem:[%s369 + $0x20] sm:$0xff]
      %v374 = vld [vmem:[%s369 + $0x30] sm:$0xff]
      %v375 = vld [vmem:[%s369 + $0x38] sm:$0xff]
      %v376 = vld [vmem:[%s369 + $0x48] sm:$0xff]
      %v377 = vld [vmem:[%s369 + $0x50] sm:$0xff]
      %v378 = vld [vmem:[%s369 + $0x60] sm:$0xff]
      %v379 = vld [vmem:[%s369 + $0x68] sm:$0xff]
      %v380 = vld [vmem:[%s369 + $0x78] sm:$0xff]
      %v381 = vld [vmem:[%s369 + $0x80] sm:$0xff]
      %v382 = vld [vmem:[%s369 + $0x90] sm:$0xff]
      %v383 = vld [vmem:[%s369 + $0x98] sm:$0xff]
      %v384 = vld [vmem:[%s369 + $0xa8] sm:$0xff]
      %v385 = vld [vmem:[%s369 + $0xb0] sm:$0xff]
      %v386 = vld [vmem:[%s352 + $0x1] sm:$0xff]
      %v387 = vld [vmem:[%s352 + $0x9] sm:$0xff]
      %v388 = vld [vmem:[%s352 + $0x19] sm:$0xff]
      %v389 = vld [vmem:[%s352 + $0x21] sm:$0xff]
      %v390 = vld [vmem:[%s352 + $0x31] sm:$0xff]
      %v391 = vld [vmem:[%s352 + $0x39] sm:$0xff]
      %v392 = vld [vmem:[%s352 + $0x49] sm:$0xff]
      %v393 = vld [vmem:[%s352 + $0x51] sm:$0xff]
      %v394 = vld [vmem:[%s352 + $0x61] sm:$0xff]
      %v395 = vld [vmem:[%s352 + $0x69] sm:$0xff]
      %v396 = vld [vmem:[%s352 + $0x79] sm:$0xff]
      %v397 = vld [vmem:[%s352 + $0x81] sm:$0xff]
      %v398 = vld [vmem:[%s352 + $0x91] sm:$0xff]
      %v399 = vld [vmem:[%s352 + $0x99] sm:$0xff]
      %v400 = vld [vmem:[%s352 + $0xa9] sm:$0xff]
      %v401 = vld [vmem:[%s352 + $0xb1] sm:$0xff]
      %v402 = vld [vmem:[%s369 + $0x1] sm:$0xff]
      %v403 = vld [vmem:[%s369 + $0x9] sm:$0xff]
      %v404 = vld [vmem:[%s369 + $0x19] sm:$0xff]
      %v405 = vld [vmem:[%s369 + $0x21] sm:$0xff]
      %v406 = vld [vmem:[%s369 + $0x31] sm:$0xff]
      %v407 = vld [vmem:[%s369 + $0x39] sm:$0xff]
      %v408 = vld [vmem:[%s369 + $0x49] sm:$0xff]
      %v409 = vld [vmem:[%s369 + $0x51] sm:$0xff]
      %v410 = vld [vmem:[%s369 + $0x61] sm:$0xff]
      %v411 = vld [vmem:[%s369 + $0x69] sm:$0xff]
      %v412 = vld [vmem:[%s369 + $0x79] sm:$0xff]
      %v413 = vld [vmem:[%s369 + $0x81] sm:$0xff]
      %v414 = vld [vmem:[%s369 + $0x91] sm:$0xff]
      %v415 = vld [vmem:[%s369 + $0x99] sm:$0xff]
      %v416 = vld [vmem:[%s369 + $0xa9] sm:$0xff]
      %v417 = vld [vmem:[%s369 + $0xb1] sm:$0xff]
      %s418 = sadd.s32 %s350, 1
      %s419 = smul.u32 %s418, 24
      %s420 = scalar_lea.vmem [#allocation2], %s419
      %v421 = vld [vmem:[%s420] sm:$0xff]
      %v422 = vld [vmem:[%s420 + $0x8] sm:$0xff]
      %v423 = vld [vmem:[%s420 + $0x18] sm:$0xff]
      %v424 = vld [vmem:[%s420 + $0x20] sm:$0xff]
      %v425 = vld [vmem:[%s420 + $0x30] sm:$0xff]
      %v426 = vld [vmem:[%s420 + $0x38] sm:$0xff]
      %v427 = vld [vmem:[%s420 + $0x48] sm:$0xff]
      %v428 = vld [vmem:[%s420 + $0x50] sm:$0xff]
      %v429 = vld [vmem:[%s420 + $0x60] sm:$0xff]
      %v430 = vld [vmem:[%s420 + $0x68] sm:$0xff]
      %v431 = vld [vmem:[%s420 + $0x78] sm:$0xff]
      %v432 = vld [vmem:[%s420 + $0x80] sm:$0xff]
      %v433 = vld [vmem:[%s420 + $0x90] sm:$0xff]
      %v434 = vld [vmem:[%s420 + $0x98] sm:$0xff]
      %v435 = vld [vmem:[%s420 + $0xa8] sm:$0xff]
      %v436 = vld [vmem:[%s420 + $0xb0] sm:$0xff]
      %s437 = scalar_lea.vmem %s211, %s419
      %v438 = vld [vmem:[%s437] sm:$0xff]
      %v439 = vld [vmem:[%s437 + $0x8] sm:$0xff]
      %v440 = vld [vmem:[%s437 + $0x18] sm:$0xff]
      %v441 = vld [vmem:[%s437 + $0x20] sm:$0xff]
      %v442 = vld [vmem:[%s437 + $0x30] sm:$0xff]
      %v443 = vld [vmem:[%s437 + $0x38] sm:$0xff]
      %v444 = vld [vmem:[%s437 + $0x48] sm:$0xff]
      %v445 = vld [vmem:[%s437 + $0x50] sm:$0xff]
      %v446 = vld [vmem:[%s437 + $0x60] sm:$0xff]
      %v447 = vld [vmem:[%s437 + $0x68] sm:$0xff]
      %v448 = vld [vmem:[%s437 + $0x78] sm:$0xff]
      %v449 = vld [vmem:[%s437 + $0x80] sm:$0xff]
      %v450 = vld [vmem:[%s437 + $0x90] sm:$0xff]
      %v451 = vld [vmem:[%s437 + $0x98] sm:$0xff]
      %v452 = vld [vmem:[%s437 + $0xa8] sm:$0xff]
      %v453 = vld [vmem:[%s437 + $0xb0] sm:$0xff]
      %v454 = vld [vmem:[%s420 + $0x1] sm:$0xff]
      %v455 = vld [vmem:[%s420 + $0x9] sm:$0xff]
      %v456 = vld [vmem:[%s420 + $0x19] sm:$0xff]
      %v457 = vld [vmem:[%s420 + $0x21] sm:$0xff]
      %v458 = vld [vmem:[%s420 + $0x31] sm:$0xff]
      %v459 = vld [vmem:[%s420 + $0x39] sm:$0xff]
      %v460 = vld [vmem:[%s420 + $0x49] sm:$0xff]
      %v461 = vld [vmem:[%s420 + $0x51] sm:$0xff]
      %v462 = vld [vmem:[%s420 + $0x61] sm:$0xff]
      %v463 = vld [vmem:[%s420 + $0x69] sm:$0xff]
      %v464 = vld [vmem:[%s420 + $0x79] sm:$0xff]
      %v465 = vld [vmem:[%s420 + $0x81] sm:$0xff]
      %v466 = vld [vmem:[%s420 + $0x91] sm:$0xff]
      %v467 = vld [vmem:[%s420 + $0x99] sm:$0xff]
      %v468 = vld [vmem:[%s420 + $0xa9] sm:$0xff]
      %v469 = vld [vmem:[%s420 + $0xb1] sm:$0xff]
      %v470 = vld [vmem:[%s437 + $0x1] sm:$0xff]
      %v471 = vld [vmem:[%s437 + $0x9] sm:$0xff]
      %v472 = vld [vmem:[%s437 + $0x19] sm:$0xff]
      %v473 = vld [vmem:[%s437 + $0x21] sm:$0xff]
      %v474 = vld [vmem:[%s437 + $0x31] sm:$0xff]
      %v475 = vld [vmem:[%s437 + $0x39] sm:$0xff]
      %v476 = vld [vmem:[%s437 + $0x49] sm:$0xff]
      %v477 = vld [vmem:[%s437 + $0x51] sm:$0xff]
      %v478 = vld [vmem:[%s437 + $0x61] sm:$0xff]
      %v479 = vld [vmem:[%s437 + $0x69] sm:$0xff]
      %v480 = vld [vmem:[%s437 + $0x79] sm:$0xff]
      %v481 = vld [vmem:[%s437 + $0x81] sm:$0xff]
      %v482 = vld [vmem:[%s437 + $0x91] sm:$0xff]
      %v483 = vld [vmem:[%s437 + $0x99] sm:$0xff]
      %v484 = vld [vmem:[%s437 + $0xa9] sm:$0xff]
      %v485 = vld [vmem:[%s437 + $0xb1] sm:$0xff]
      %502 = vrot.lane.b32.xlu0 %v386, 16
      %v503 = vpop.permute.xlu0 %502
      %504 = vrot.lane.b32.xlu0 %v387, 16
      %v505 = vpop.permute.xlu0 %504
      %506 = vrot.lane.b32.xlu0 %v388, 16
      %v507 = vpop.permute.xlu0 %506
      %508 = vrot.lane.b32.xlu0 %v389, 16
      %v509 = vpop.permute.xlu0 %508
      %510 = vrot.lane.b32.xlu0 %v390, 16
      %v511 = vpop.permute.xlu0 %510
      %512 = vrot.lane.b32.xlu0 %v391, 16
      %v513 = vpop.permute.xlu0 %512
      %514 = vrot.lane.b32.xlu0 %v392, 16
      %v515 = vpop.permute.xlu0 %514
      %516 = vrot.lane.b32.xlu0 %v393, 16
      %v517 = vpop.permute.xlu0 %516
      %518 = vrot.lane.b32.xlu0 %v394, 16
      %v519 = vpop.permute.xlu0 %518
      %520 = vrot.lane.b32.xlu0 %v395, 16
      %v521 = vpop.permute.xlu0 %520
      %522 = vrot.lane.b32.xlu0 %v396, 16
      %v523 = vpop.permute.xlu0 %522
      %524 = vrot.lane.b32.xlu0 %v397, 16
      %v525 = vpop.permute.xlu0 %524
      %526 = vrot.lane.b32.xlu0 %v398, 16
      %v527 = vpop.permute.xlu0 %526
      %528 = vrot.lane.b32.xlu0 %v399, 16
      %v529 = vpop.permute.xlu0 %528
      %530 = vrot.lane.b32.xlu0 %v400, 16
      %v531 = vpop.permute.xlu0 %530
      %532 = vrot.lane.b32.xlu0 %v401, 16
      %v533 = vpop.permute.xlu0 %532
      %566 = vrot.lane.b32.xlu0 %v421, 32
      %v567 = vpop.permute.xlu0 %566
      %568 = vrot.lane.b32.xlu0 %v422, 32
      %v569 = vpop.permute.xlu0 %568
      %570 = vrot.lane.b32.xlu0 %v423, 32
      %v571 = vpop.permute.xlu0 %570
      %572 = vrot.lane.b32.xlu0 %v424, 32
      %v573 = vpop.permute.xlu0 %572
      %574 = vrot.lane.b32.xlu0 %v425, 32
      %v575 = vpop.permute.xlu0 %574
      %576 = vrot.lane.b32.xlu0 %v426, 32
      %v577 = vpop.permute.xlu0 %576
      %578 = vrot.lane.b32.xlu0 %v427, 32
      %v579 = vpop.permute.xlu0 %578
      %580 = vrot.lane.b32.xlu0 %v428, 32
      %v581 = vpop.permute.xlu0 %580
      %582 = vrot.lane.b32.xlu0 %v429, 32
      %v583 = vpop.permute.xlu0 %582
      %584 = vrot.lane.b32.xlu0 %v430, 32
      %v585 = vpop.permute.xlu0 %584
      %586 = vrot.lane.b32.xlu0 %v431, 32
      %v587 = vpop.permute.xlu0 %586
      %588 = vrot.lane.b32.xlu0 %v432, 32
      %v589 = vpop.permute.xlu0 %588
      %590 = vrot.lane.b32.xlu0 %v433, 32
      %v591 = vpop.permute.xlu0 %590
      %592 = vrot.lane.b32.xlu0 %v434, 32
      %v593 = vpop.permute.xlu0 %592
      %594 = vrot.lane.b32.xlu0 %v435, 32
      %v595 = vpop.permute.xlu0 %594
      %596 = vrot.lane.b32.xlu0 %v436, 32
      %v597 = vpop.permute.xlu0 %596
      %630 = vrot.lane.b32.xlu0 %v454, 48
      %v631 = vpop.permute.xlu0 %630
      %632 = vrot.lane.b32.xlu0 %v455, 48
      %v633 = vpop.permute.xlu0 %632
      %634 = vrot.lane.b32.xlu0 %v456, 48
      %v635 = vpop.permute.xlu0 %634
      %636 = vrot.lane.b32.xlu0 %v457, 48
      %v637 = vpop.permute.xlu0 %636
      %638 = vrot.lane.b32.xlu0 %v458, 48
      %v639 = vpop.permute.xlu0 %638
      %640 = vrot.lane.b32.xlu0 %v459, 48
      %v641 = vpop.permute.xlu0 %640
      %642 = vrot.lane.b32.xlu0 %v460, 48
      %v643 = vpop.permute.xlu0 %642
      %644 = vrot.lane.b32.xlu0 %v461, 48
      %v645 = vpop.permute.xlu0 %644
      %646 = vrot.lane.b32.xlu0 %v462, 48
      %v647 = vpop.permute.xlu0 %646
      %648 = vrot.lane.b32.xlu0 %v463, 48
      %v649 = vpop.permute.xlu0 %648
      %650 = vrot.lane.b32.xlu0 %v464, 48
      %v651 = vpop.permute.xlu0 %650
      %652 = vrot.lane.b32.xlu0 %v465, 48
      %v653 = vpop.permute.xlu0 %652
      %654 = vrot.lane.b32.xlu0 %v466, 48
      %v655 = vpop.permute.xlu0 %654
      %656 = vrot.lane.b32.xlu0 %v467, 48
      %v657 = vpop.permute.xlu0 %656
      %658 = vrot.lane.b32.xlu0 %v468, 48
      %v659 = vpop.permute.xlu0 %658
      %660 = vrot.lane.b32.xlu0 %v469, 48
      %v661 = vpop.permute.xlu0 %660
      %vm678 = vcmask 130048
      %v679 = vsel %vm678, %v353, %v503
      %v680 = vsel %vm678, %v354, %v505
      %v681 = vsel %vm678, %v355, %v507
      %v682 = vsel %vm678, %v356, %v509
      %v683 = vsel %vm678, %v357, %v511
      %v684 = vsel %vm678, %v358, %v513
      %v685 = vsel %vm678, %v359, %v515
      %v686 = vsel %vm678, %v360, %v517
      %v687 = vsel %vm678, %v361, %v519
      %v688 = vsel %vm678, %v362, %v521
      %v689 = vsel %vm678, %v363, %v523
      %v690 = vsel %vm678, %v364, %v525
      %v691 = vsel %vm678, %v365, %v527
      %v692 = vsel %vm678, %v366, %v529
      %v693 = vsel %vm678, %v367, %v531
      %v694 = vsel %vm678, %v368, %v533
      %vm695 = vcmask 261120
      %v696 = vsel %vm695, %v679, %v567
      %v697 = vsel %vm695, %v680, %v569
      %v698 = vsel %vm695, %v681, %v571
      %v699 = vsel %vm695, %v682, %v573
      %v700 = vsel %vm695, %v683, %v575
      %v701 = vsel %vm695, %v684, %v577
      %v702 = vsel %vm695, %v685, %v579
      %v703 = vsel %vm695, %v686, %v581
      %v704 = vsel %vm695, %v687, %v583
      %v705 = vsel %vm695, %v688, %v585
      %v706 = vsel %vm695, %v689, %v587
      %v707 = vsel %vm695, %v690, %v589
      %v708 = vsel %vm695, %v691, %v591
      %v709 = vsel %vm695, %v692, %v593
      %v710 = vsel %vm695, %v693, %v595
      %v711 = vsel %vm695, %v694, %v597
      %vm712 = vcmask 392192
      %v713 = vsel %vm712, %v696, %v631
      %v714 = vsel %vm712, %v697, %v633
      %v715 = vsel %vm712, %v698, %v635
      %v716 = vsel %vm712, %v699, %v637
      %v717 = vsel %vm712, %v700, %v639
      %v718 = vsel %vm712, %v701, %v641
      %v719 = vsel %vm712, %v702, %v643
      %v720 = vsel %vm712, %v703, %v645
      %v721 = vsel %vm712, %v704, %v647
      %v722 = vsel %vm712, %v705, %v649
      %v723 = vsel %vm712, %v706, %v651
      %v724 = vsel %vm712, %v707, %v653
      %v725 = vsel %vm712, %v708, %v655
      %v726 = vsel %vm712, %v709, %v657
      %v727 = vsel %vm712, %v710, %v659
      %v728 = vsel %vm712, %v711, %v661
      %v729 = vpack.c.bf16 %v714, %v713
      %v730 = vpack.c.bf16 %v716, %v715
      %v731 = vpack.c.bf16 %v718, %v717
      %v732 = vpack.c.bf16 %v720, %v719
      %v733 = vpack.c.bf16 %v722, %v721
      %v734 = vpack.c.bf16 %v724, %v723
      %v735 = vpack.c.bf16 %v726, %v725
      %v736 = vpack.c.bf16 %v728, %v727
      %753 = vrot.lane.b32.xlu0 %v402, 16
      %v754 = vpop.permute.xlu0 %753
      %755 = vrot.lane.b32.xlu0 %v403, 16
      %v756 = vpop.permute.xlu0 %755
      %757 = vrot.lane.b32.xlu0 %v404, 16
      %v758 = vpop.permute.xlu0 %757
      %759 = vrot.lane.b32.xlu0 %v405, 16
      %v760 = vpop.permute.xlu0 %759
      %761 = vrot.lane.b32.xlu0 %v406, 16
      %v762 = vpop.permute.xlu0 %761
      %763 = vrot.lane.b32.xlu0 %v407, 16
      %v764 = vpop.permute.xlu0 %763
      %765 = vrot.lane.b32.xlu0 %v408, 16
      %v766 = vpop.permute.xlu0 %765
      %767 = vrot.lane.b32.xlu0 %v409, 16
      %v768 = vpop.permute.xlu0 %767
      %769 = vrot.lane.b32.xlu0 %v410, 16
      %v770 = vpop.permute.xlu0 %769
      %771 = vrot.lane.b32.xlu0 %v411, 16
      %v772 = vpop.permute.xlu0 %771
      %773 = vrot.lane.b32.xlu0 %v412, 16
      %v774 = vpop.permute.xlu0 %773
      %775 = vrot.lane.b32.xlu0 %v413, 16
      %v776 = vpop.permute.xlu0 %775
      %777 = vrot.lane.b32.xlu0 %v414, 16
      %v778 = vpop.permute.xlu0 %777
      %779 = vrot.lane.b32.xlu0 %v415, 16
      %v780 = vpop.permute.xlu0 %779
      %781 = vrot.lane.b32.xlu0 %v416, 16
      %v782 = vpop.permute.xlu0 %781
      %783 = vrot.lane.b32.xlu0 %v417, 16
      %v784 = vpop.permute.xlu0 %783
      %817 = vrot.lane.b32.xlu0 %v438, 32
      %v818 = vpop.permute.xlu0 %817
      %819 = vrot.lane.b32.xlu0 %v439, 32
      %v820 = vpop.permute.xlu0 %819
      %821 = vrot.lane.b32.xlu0 %v440, 32
      %v822 = vpop.permute.xlu0 %821
      %823 = vrot.lane.b32.xlu0 %v441, 32
      %v824 = vpop.permute.xlu0 %823
      %825 = vrot.lane.b32.xlu0 %v442, 32
      %v826 = vpop.permute.xlu0 %825
      %827 = vrot.lane.b32.xlu0 %v443, 32
      %v828 = vpop.permute.xlu0 %827
      %829 = vrot.lane.b32.xlu0 %v444, 32
      %v830 = vpop.permute.xlu0 %829
      %831 = vrot.lane.b32.xlu0 %v445, 32
      %v832 = vpop.permute.xlu0 %831
      %833 = vrot.lane.b32.xlu0 %v446, 32
      %v834 = vpop.permute.xlu0 %833
      %835 = vrot.lane.b32.xlu0 %v447, 32
      %v836 = vpop.permute.xlu0 %835
      %837 = vrot.lane.b32.xlu0 %v448, 32
      %v838 = vpop.permute.xlu0 %837
      %839 = vrot.lane.b32.xlu0 %v449, 32
      %v840 = vpop.permute.xlu0 %839
      %841 = vrot.lane.b32.xlu0 %v450, 32
      %v842 = vpop.permute.xlu0 %841
      %843 = vrot.lane.b32.xlu0 %v451, 32
      %v844 = vpop.permute.xlu0 %843
      %845 = vrot.lane.b32.xlu0 %v452, 32
      %v846 = vpop.permute.xlu0 %845
      %847 = vrot.lane.b32.xlu0 %v453, 32
      %v848 = vpop.permute.xlu0 %847
      %881 = vrot.lane.b32.xlu0 %v470, 48
      %v882 = vpop.permute.xlu0 %881
      %883 = vrot.lane.b32.xlu0 %v471, 48
      %v884 = vpop.permute.xlu0 %883
      %885 = vrot.lane.b32.xlu0 %v472, 48
      %v886 = vpop.permute.xlu0 %885
      %887 = vrot.lane.b32.xlu0 %v473, 48
      %v888 = vpop.permute.xlu0 %887
      %889 = vrot.lane.b32.xlu0 %v474, 48
      %v890 = vpop.permute.xlu0 %889
      %891 = vrot.lane.b32.xlu0 %v475, 48
      %v892 = vpop.permute.xlu0 %891
      %893 = vrot.lane.b32.xlu0 %v476, 48
      %v894 = vpop.permute.xlu0 %893
      %895 = vrot.lane.b32.xlu0 %v477, 48
      %v896 = vpop.permute.xlu0 %895
      %897 = vrot.lane.b32.xlu0 %v478, 48
      %v898 = vpop.permute.xlu0 %897
      %899 = vrot.lane.b32.xlu0 %v479, 48
      %v900 = vpop.permute.xlu0 %899
      %901 = vrot.lane.b32.xlu0 %v480, 48
      %v902 = vpop.permute.xlu0 %901
      %903 = vrot.lane.b32.xlu0 %v481, 48
      %v904 = vpop.permute.xlu0 %903
      %905 = vrot.lane.b32.xlu0 %v482, 48
      %v906 = vpop.permute.xlu0 %905
      %907 = vrot.lane.b32.xlu0 %v483, 48
      %v908 = vpop.permute.xlu0 %907
      %909 = vrot.lane.b32.xlu0 %v484, 48
      %v910 = vpop.permute.xlu0 %909
      %911 = vrot.lane.b32.xlu0 %v485, 48
      %v912 = vpop.permute.xlu0 %911
      %v929 = vsel %vm678, %v370, %v754
      %v930 = vsel %vm678, %v371, %v756
      %v931 = vsel %vm678, %v372, %v758
      %v932 = vsel %vm678, %v373, %v760
      %v933 = vsel %vm678, %v374, %v762
      %v934 = vsel %vm678, %v375, %v764
      %v935 = vsel %vm678, %v376, %v766
      %v936 = vsel %vm678, %v377, %v768
      %v937 = vsel %vm678, %v378, %v770
      %v938 = vsel %vm678, %v379, %v772
      %v939 = vsel %vm678, %v380, %v774
      %v940 = vsel %vm678, %v381, %v776
      %v941 = vsel %vm678, %v382, %v778
      %v942 = vsel %vm678, %v383, %v780
      %v943 = vsel %vm678, %v384, %v782
      %v944 = vsel %vm678, %v385, %v784
      %v945 = vsel %vm695, %v929, %v818
      %v946 = vsel %vm695, %v930, %v820
      %v947 = vsel %vm695, %v931, %v822
      %v948 = vsel %vm695, %v932, %v824
      %v949 = vsel %vm695, %v933, %v826
      %v950 = vsel %vm695, %v934, %v828
      %v951 = vsel %vm695, %v935, %v830
      %v952 = vsel %vm695, %v936, %v832
      %v953 = vsel %vm695, %v937, %v834
      %v954 = vsel %vm695, %v938, %v836
      %v955 = vsel %vm695, %v939, %v838
      %v956 = vsel %vm695, %v940, %v840
      %v957 = vsel %vm695, %v941, %v842
      %v958 = vsel %vm695, %v942, %v844
      %v959 = vsel %vm695, %v943, %v846
      %v960 = vsel %vm695, %v944, %v848
      %v961 = vsel %vm712, %v945, %v882
      %v962 = vsel %vm712, %v946, %v884
      %v963 = vsel %vm712, %v947, %v886
      %v964 = vsel %vm712, %v948, %v888
      %v965 = vsel %vm712, %v949, %v890
      %v966 = vsel %vm712, %v950, %v892
      %v967 = vsel %vm712, %v951, %v894
      %v968 = vsel %vm712, %v952, %v896
      %v969 = vsel %vm712, %v953, %v898
      %v970 = vsel %vm712, %v954, %v900
      %v971 = vsel %vm712, %v955, %v902
      %v972 = vsel %vm712, %v956, %v904
      %v973 = vsel %vm712, %v957, %v906
      %v974 = vsel %vm712, %v958, %v908
      %v975 = vsel %vm712, %v959, %v910
      %v976 = vsel %vm712, %v960, %v912
      %v977 = vpack.c.bf16 %v962, %v961
      %v978 = vpack.c.bf16 %v964, %v963
      %v979 = vpack.c.bf16 %v966, %v965
      %v980 = vpack.c.bf16 %v968, %v967
      %v981 = vpack.c.bf16 %v970, %v969
      %v982 = vpack.c.bf16 %v972, %v971
      %v983 = vpack.c.bf16 %v974, %v973
      %v984 = vpack.c.bf16 %v976, %v975
      %v985 = vld [vmem:[%s1] sm:$0xf]
      %v986 = vld [vmem:[%s1 + $0x4] sm:$0xf]
      %v987 = vld [vmem:[%s1 + $0x8] sm:$0xf]
      %v988 = vld [vmem:[%s1 + $0xc] sm:$0xf]
      %v989 = vld [vmem:[%s1 + $0x10] sm:$0xf]
      %v990 = vld [vmem:[%s1 + $0x14] sm:$0xf]
      %v991 = vld [vmem:[%s1 + $0x18] sm:$0xf]
      %v992 = vld [vmem:[%s1 + $0x1c] sm:$0xf]
      %v1001 = vunpack.c.l.b16 %v985
      %v1002 = vunpack.c.l.b16 %v986
      %v1003 = vunpack.c.l.b16 %v987
      %v1004 = vunpack.c.l.b16 %v988
      %v1005 = vunpack.c.l.b16 %v989
      %v1006 = vunpack.c.l.b16 %v990
      %v1007 = vunpack.c.l.b16 %v991
      %v1008 = vunpack.c.l.b16 %v992
      %v1009 = vpack.c.b16 %v1002, %v1001
      %v1010 = vpack.c.b16 %v1004, %v1003
      %v1011 = vpack.c.b16 %v1006, %v1005
      %v1012 = vpack.c.b16 %v1008, %v1007
      %vm1017 = vcmask 523264
      %v1019 = vsel %vm1017, %v729, 0
      %v1022 = vsel %vm1017, %v730, 0
      %v1025 = vsel %vm1017, %v731, 0
      %v1028 = vsel %vm1017, %v732, 0
      %v1031 = vsel %vm1017, %v733, 0
      %v1034 = vsel %vm1017, %v734, 0
      %v1037 = vsel %vm1017, %v735, 0
      %v1040 = vsel %vm1017, %v736, 0
      %1042 = vmatprep.subr.bf16.mxu0 0
      %1043 = vmatpush1.bf16.msra.mxu0 %v1009
      %1044 = vmatprep.subr.bf16.mxu0 0
      %1045 = vmatpush1.bf16.msra.mxu0 %v1010
      %1046 = vmatprep.subr.bf16.mxu0 0
      %1047 = vmatpush1.bf16.msra.mxu0 %v1011
      %1048 = vmatprep.subr.bf16.mxu0 0
      %1049 = vmatpush1.bf16.msra.mxu0 %v1012
      %1050 = vmatprep.subr.bf16.mxu0 0
      %1051 = vmatpush1.bf16.msra.mxu0 0
      %1052 = vmatprep.subr.bf16.mxu0 0
      %1053 = vmatpush1.bf16.msra.mxu0 0
      %1054 = vmatprep.subr.bf16.mxu0 0
      %1055 = vmatpush1.bf16.msra.mxu0 0
      %1056 = vmatprep.subr.bf16.mxu0 0
      %1057 = vmatpush1.bf16.msra.mxu0 0
      %1058 = vmatprep.subr.bf16.mxu0 0
      %1059 = vmatpush1.bf16.msra.mxu0 0
      %1060 = vmatprep.subr.bf16.mxu0 0
      %1061 = vmatpush1.bf16.msra.mxu0 0
      %1062 = vmatprep.subr.bf16.mxu0 0
      %1063 = vmatpush1.bf16.msra.mxu0 0
      %1064 = vmatprep.subr.bf16.mxu0 0
      %1065 = vmatpush1.bf16.msra.mxu0 0
      %1066 = vmatprep.subr.bf16.mxu0 0
      %1067 = vmatpush1.bf16.msra.mxu0 0
      %1068 = vmatprep.subr.bf16.mxu0 0
      %1069 = vmatpush1.bf16.msra.mxu0 0
      %1070 = vmatprep.subr.bf16.mxu0 0
      %1071 = vmatpush1.bf16.msra.mxu0 0
      %1072 = vmatprep.subr.bf16.mxu0 0
      %1073 = vmatpush1.bf16.msra.mxu0 0
      %1074 = vmatprep.mubr.bf16.mxu0 0
      %1075 = vmatmul.mubr.bf16.gmra.mrb[0].mxu0 %v1019
      %v1076 = vpop.f32.mrb[0].mxu0
      %v1077 = vadd.f32 0.0, %v1076
      %v1078 = vpop.f32.mrb[0].mxu0
      %v1079 = vpop.f32.mrb[0].mxu0
      %v1080 = vadd.f32 0.0, %v1079
      %v1081 = vpop.f32.mrb[0].mxu0
      %1082 = vmatprep.mubr.bf16.mxu0 0
      %1083 = vmatmul.mubr.bf16.gmra.mrb[0].mxu0 %v1022
      %v1084 = vpop.f32.mrb[0].mxu0
      %v1085 = vadd.f32 0.0, %v1084
      %v1086 = vpop.f32.mrb[0].mxu0
      %v1087 = vpop.f32.mrb[0].mxu0
      %v1088 = vadd.f32 0.0, %v1087
      %v1089 = vpop.f32.mrb[0].mxu0
      %1090 = vmatprep.mubr.bf16.mxu0 0
      %1091 = vmatmul.mubr.bf16.gmra.mrb[0].mxu0 %v1025
      %v1092 = vpop.f32.mrb[0].mxu0
      %v1093 = vadd.f32 0.0, %v1092
      %v1094 = vpop.f32.mrb[0].mxu0
      %v1095 = vpop.f32.mrb[0].mxu0
      %v1096 = vadd.f32 0.0, %v1095
      %v1097 = vpop.f32.mrb[0].mxu0
      %1098 = vmatprep.mubr.bf16.mxu0 0
      %1099 = vmatmul.mubr.bf16.gmra.mrb[0].mxu0 %v1028
      %v1100 = vpop.f32.mrb[0].mxu0
      %v1101 = vadd.f32 0.0, %v1100
      %v1102 = vpop.f32.mrb[0].mxu0
      %v1103 = vpop.f32.mrb[0].mxu0
      %v1104 = vadd.f32 0.0, %v1103
      %v1105 = vpop.f32.mrb[0].mxu0
      %1106 = vmatprep.mubr.bf16.mxu0 0
      %1107 = vmatmul.mubr.bf16.gmra.mrb[0].mxu0 %v1031
      %v1108 = vpop.f32.mrb[0].mxu0
      %v1109 = vadd.f32 0.0, %v1108
      %v1110 = vpop.f32.mrb[0].mxu0
      %v1111 = vpop.f32.mrb[0].mxu0
      %v1112 = vadd.f32 0.0, %v1111
      %v1113 = vpop.f32.mrb[0].mxu0
      %1114 = vmatprep.mubr.bf16.mxu0 0
      %1115 = vmatmul.mubr.bf16.gmra.mrb[0].mxu0 %v1034
      %v1116 = vpop.f32.mrb[0].mxu0
      %v1117 = vadd.f32 0.0, %v1116
      %v1118 = vpop.f32.mrb[0].mxu0
      %v1119 = vpop.f32.mrb[0].mxu0
      %v1120 = vadd.f32 0.0, %v1119
      %v1121 = vpop.f32.mrb[0].mxu0
      %1122 = vmatprep.mubr.bf16.mxu0 0
      %1123 = vmatmul.mubr.bf16.gmra.mrb[0].mxu0 %v1037
      %v1124 = vpop.f32.mrb[0].mxu0
      %v1125 = vadd.f32 0.0, %v1124
      %v1126 = vpop.f32.mrb[0].mxu0
      %v1127 = vpop.f32.mrb[0].mxu0
      %v1128 = vadd.f32 0.0, %v1127
      %v1129 = vpop.f32.mrb[0].mxu0
      %1130 = vmatprep.mubr.bf16.mxu0 0
      %1131 = vmatmul.mubr.bf16.gmra.mrb[0].mxu0 %v1040
      %v1132 = vpop.f32.mrb[0].mxu0
      %v1133 = vadd.f32 0.0, %v1132
      %v1134 = vpop.f32.mrb[0].mxu0
      %v1135 = vpop.f32.mrb[0].mxu0
      %v1136 = vadd.f32 0.0, %v1135
      %v1137 = vpop.f32.mrb[0].mxu0
      %1138 = vdwg.mxu0
      %v1139 = vld [vmem:[%s2] sm:$0xf]
      %v1140 = vld [vmem:[%s2 + $0x4] sm:$0xf]
      %v1141 = vld [vmem:[%s2 + $0x8] sm:$0xf]
      %v1142 = vld [vmem:[%s2 + $0xc] sm:$0xf]
      %v1143 = vld [vmem:[%s2 + $0x10] sm:$0xf]
      %v1144 = vld [vmem:[%s2 + $0x14] sm:$0xf]
      %v1145 = vld [vmem:[%s2 + $0x18] sm:$0xf]
      %v1146 = vld [vmem:[%s2 + $0x1c] sm:$0xf]
      %v1155 = vunpack.c.l.b16 %v1139
      %v1156 = vunpack.c.l.b16 %v1140
      %v1157 = vunpack.c.l.b16 %v1141
      %v1158 = vunpack.c.l.b16 %v1142
      %v1159 = vunpack.c.l.b16 %v1143
      %v1160 = vunpack.c.l.b16 %v1144
      %v1161 = vunpack.c.l.b16 %v1145
      %v1162 = vunpack.c.l.b16 %v1146
      %v1163 = vpack.c.b16 %v1156, %v1155
      %v1164 = vpack.c.b16 %v1158, %v1157
      %v1165 = vpack.c.b16 %v1160, %v1159
      %v1166 = vpack.c.b16 %v1162, %v1161
      %v1172 = vsel %vm1017, %v977, 0
      %v1175 = vsel %vm1017, %v978, 0
      %v1178 = vsel %vm1017, %v979, 0
      %v1181 = vsel %vm1017, %v980, 0
      %v1184 = vsel %vm1017, %v981, 0
      %v1187 = vsel %vm1017, %v982, 0
      %v1190 = vsel %vm1017, %v983, 0
      %v1193 = vsel %vm1017, %v984, 0
      %1195 = vmatprep.subr.bf16.mxu0 0
      %1196 = vmatpush1.bf16.msra.mxu0 %v1163
      %1197 = vmatprep.subr.bf16.mxu0 0
      %1198 = vmatpush1.bf16.msra.mxu0 %v1164
      %1199 = vmatprep.subr.bf16.mxu0 0
      %1200 = vmatpush1.bf16.msra.mxu0 %v1165
      %1201 = vmatprep.subr.bf16.mxu0 0
      %1202 = vmatpush1.bf16.msra.mxu0 %v1166
      %1203 = vmatprep.subr.bf16.mxu0 0
      %1204 = vmatpush1.bf16.msra.mxu0 0
      %1205 = vmatprep.subr.bf16.mxu0 0
      %1206 = vmatpush1.bf16.msra.mxu0 0
      %1207 = vmatprep.subr.bf16.mxu0 0
      %1208 = vmatpush1.bf16.msra.mxu0 0
      %1209 = vmatprep.subr.bf16.mxu0 0
      %1210 = vmatpush1.bf16.msra.mxu0 0
      %1211 = vmatprep.subr.bf16.mxu0 0
      %1212 = vmatpush1.bf16.msra.mxu0 0
      %1213 = vmatprep.subr.bf16.mxu0 0
      %1214 = vmatpush1.bf16.msra.mxu0 0
      %1215 = vmatprep.subr.bf16.mxu0 0
      %1216 = vmatpush1.bf16.msra.mxu0 0
      %1217 = vmatprep.subr.bf16.mxu0 0
      %1218 = vmatpush1.bf16.msra.mxu0 0
      %1219 = vmatprep.subr.bf16.mxu0 0
      %1220 = vmatpush1.bf16.msra.mxu0 0
      %1221 = vmatprep.subr.bf16.mxu0 0
      %1222 = vmatpush1.bf16.msra.mxu0 0
      %1223 = vmatprep.subr.bf16.mxu0 0
      %1224 = vmatpush1.bf16.msra.mxu0 0
      %1225 = vmatprep.subr.bf16.mxu0 0
      %1226 = vmatpush1.bf16.msra.mxu0 0
      %1227 = vmatprep.mubr.bf16.mxu0 0
      %1228 = vmatmul.mubr.bf16.gmra.mrb[0].mxu0 %v1172
      %v1229 = vpop.f32.mrb[0].mxu0
      %v1230 = vadd.f32 0.0, %v1229
      %v1231 = vpop.f32.mrb[0].mxu0
      %v1232 = vpop.f32.mrb[0].mxu0
      %v1233 = vadd.f32 0.0, %v1232
      %v1234 = vpop.f32.mrb[0].mxu0
      %1235 = vmatprep.mubr.bf16.mxu0 0
      %1236 = vmatmul.mubr.bf16.gmra.mrb[0].mxu0 %v1175
      %v1237 = vpop.f32.mrb[0].mxu0
      %v1238 = vadd.f32 0.0, %v1237
      %v1239 = vpop.f32.mrb[0].mxu0
      %v1240 = vpop.f32.mrb[0].mxu0
      %v1241 = vadd.f32 0.0, %v1240
      %v1242 = vpop.f32.mrb[0].mxu0
      %1243 = vmatprep.mubr.bf16.mxu0 0
      %1244 = vmatmul.mubr.bf16.gmra.mrb[0].mxu0 %v1178
      %v1245 = vpop.f32.mrb[0].mxu0
      %v1246 = vadd.f32 0.0, %v1245
      %v1247 = vpop.f32.mrb[0].mxu0
      %v1248 = vpop.f32.mrb[0].mxu0
      %v1249 = vadd.f32 0.0, %v1248
      %v1250 = vpop.f32.mrb[0].mxu0
      %1251 = vmatprep.mubr.bf16.mxu0 0
      %1252 = vmatmul.mubr.bf16.gmra.mrb[0].mxu0 %v1181
      %v1253 = vpop.f32.mrb[0].mxu0
      %v1254 = vadd.f32 0.0, %v1253
      %v1255 = vpop.f32.mrb[0].mxu0
      %v1256 = vpop.f32.mrb[0].mxu0
      %v1257 = vadd.f32 0.0, %v1256
      %v1258 = vpop.f32.mrb[0].mxu0
      %1259 = vmatprep.mubr.bf16.mxu0 0
      %1260 = vmatmul.mubr.bf16.gmra.mrb[0].mxu0 %v1184
      %v1261 = vpop.f32.mrb[0].mxu0
      %v1262 = vadd.f32 0.0, %v1261
      %v1263 = vpop.f32.mrb[0].mxu0
      %v1264 = vpop.f32.mrb[0].mxu0
      %v1265 = vadd.f32 0.0, %v1264
      %v1266 = vpop.f32.mrb[0].mxu0
      %1267 = vmatprep.mubr.bf16.mxu0 0
      %1268 = vmatmul.mubr.bf16.gmra.mrb[0].mxu0 %v1187
      %v1269 = vpop.f32.mrb[0].mxu0
      %v1270 = vadd.f32 0.0, %v1269
      %v1271 = vpop.f32.mrb[0].mxu0
      %v1272 = vpop.f32.mrb[0].mxu0
      %v1273 = vadd.f32 0.0, %v1272
      %v1274 = vpop.f32.mrb[0].mxu0
      %1275 = vmatprep.mubr.bf16.mxu0 0
      %1276 = vmatmul.mubr.bf16.gmra.mrb[0].mxu0 %v1190
      %v1277 = vpop.f32.mrb[0].mxu0
      %v1278 = vadd.f32 0.0, %v1277
      %v1279 = vpop.f32.mrb[0].mxu0
      %v1280 = vpop.f32.mrb[0].mxu0
      %v1281 = vadd.f32 0.0, %v1280
      %v1282 = vpop.f32.mrb[0].mxu0
      %1283 = vmatprep.mubr.bf16.mxu0 0
      %1284 = vmatmul.mubr.bf16.gmra.mrb[0].mxu0 %v1193
      %v1285 = vpop.f32.mrb[0].mxu0
      %v1286 = vadd.f32 0.0, %v1285
      %v1287 = vpop.f32.mrb[0].mxu0
      %v1288 = vpop.f32.mrb[0].mxu0
      %v1289 = vadd.f32 0.0, %v1288
      %v1290 = vpop.f32.mrb[0].mxu0
      %1291 = vdwg.mxu0
      %v1292 = vld [vmem:[%s352 + $0x2] sm:$0xff]
      %v1293 = vld [vmem:[%s352 + $0xa] sm:$0xff]
      %v1294 = vld [vmem:[%s352 + $0x1a] sm:$0xff]
      %v1295 = vld [vmem:[%s352 + $0x22] sm:$0xff]
      %v1296 = vld [vmem:[%s352 + $0x32] sm:$0xff]
      %v1297 = vld [vmem:[%s352 + $0x3a] sm:$0xff]
      %v1298 = vld [vmem:[%s352 + $0x4a] sm:$0xff]
      %v1299 = vld [vmem:[%s352 + $0x52] sm:$0xff]
      %v1300 = vld [vmem:[%s352 + $0x62] sm:$0xff]
      %v1301 = vld [vmem:[%s352 + $0x6a] sm:$0xff]
      %v1302 = vld [vmem:[%s352 + $0x7a] sm:$0xff]
      %v1303 = vld [vmem:[%s352 + $0x82] sm:$0xff]
      %v1304 = vld [vmem:[%s352 + $0x92] sm:$0xff]
      %v1305 = vld [vmem:[%s352 + $0x9a] sm:$0xff]
      %v1306 = vld [vmem:[%s352 + $0xaa] sm:$0xff]
      %v1307 = vld [vmem:[%s352 + $0xb2] sm:$0xff]
      %v1308 = vld [vmem:[%s369 + $0x2] sm:$0xff]
      %v1309 = vld [vmem:[%s369 + $0xa] sm:$0xff]
      %v1310 = vld [vmem:[%s369 + $0x1a] sm:$0xff]
      %v1311 = vld [vmem:[%s369 + $0x22] sm:$0xff]
      %v1312 = vld [vmem:[%s369 + $0x32] sm:$0xff]
      %v1313 = vld [vmem:[%s369 + $0x3a] sm:$0xff]
      %v1314 = vld [vmem:[%s369 + $0x4a] sm:$0xff]
      %v1315 = vld [vmem:[%s369 + $0x52] sm:$0xff]
      %v1316 = vld [vmem:[%s369 + $0x62] sm:$0xff]
      %v1317 = vld [vmem:[%s369 + $0x6a] sm:$0xff]
      %v1318 = vld [vmem:[%s369 + $0x7a] sm:$0xff]
      %v1319 = vld [vmem:[%s369 + $0x82] sm:$0xff]
      %v1320 = vld [vmem:[%s369 + $0x92] sm:$0xff]
      %v1321 = vld [vmem:[%s369 + $0x9a] sm:$0xff]
      %v1322 = vld [vmem:[%s369 + $0xaa] sm:$0xff]
      %v1323 = vld [vmem:[%s369 + $0xb2] sm:$0xff]
      %v1324 = vld [vmem:[%s420 + $0x2] sm:$0xff]
      %v1325 = vld [vmem:[%s420 + $0xa] sm:$0xff]
      %v1326 = vld [vmem:[%s420 + $0x1a] sm:$0xff]
      %v1327 = vld [vmem:[%s420 + $0x22] sm:$0xff]
      %v1328 = vld [vmem:[%s420 + $0x32] sm:$0xff]
      %v1329 = vld [vmem:[%s420 + $0x3a] sm:$0xff]
      %v1330 = vld [vmem:[%s420 + $0x4a] sm:$0xff]
      %v1331 = vld [vmem:[%s420 + $0x52] sm:$0xff]
      %v1332 = vld [vmem:[%s420 + $0x62] sm:$0xff]
      %v1333 = vld [vmem:[%s420 + $0x6a] sm:$0xff]
      %v1334 = vld [vmem:[%s420 + $0x7a] sm:$0xff]
      %v1335 = vld [vmem:[%s420 + $0x82] sm:$0xff]
      %v1336 = vld [vmem:[%s420 + $0x92] sm:$0xff]
      %v1337 = vld [vmem:[%s420 + $0x9a] sm:$0xff]
      %v1338 = vld [vmem:[%s420 + $0xaa] sm:$0xff]
      %v1339 = vld [vmem:[%s420 + $0xb2] sm:$0xff]
      %v1340 = vld [vmem:[%s437 + $0x2] sm:$0xff]
      %v1341 = vld [vmem:[%s437 + $0xa] sm:$0xff]
      %v1342 = vld [vmem:[%s437 + $0x1a] sm:$0xff]
      %v1343 = vld [vmem:[%s437 + $0x22] sm:$0xff]
      %v1344 = vld [vmem:[%s437 + $0x32] sm:$0xff]
      %v1345 = vld [vmem:[%s437 + $0x3a] sm:$0xff]
      %v1346 = vld [vmem:[%s437 + $0x4a] sm:$0xff]
      %v1347 = vld [vmem:[%s437 + $0x52] sm:$0xff]
      %v1348 = vld [vmem:[%s437 + $0x62] sm:$0xff]
      %v1349 = vld [vmem:[%s437 + $0x6a] sm:$0xff]
      %v1350 = vld [vmem:[%s437 + $0x7a] sm:$0xff]
      %v1351 = vld [vmem:[%s437 + $0x82] sm:$0xff]
      %v1352 = vld [vmem:[%s437 + $0x92] sm:$0xff]
      %v1353 = vld [vmem:[%s437 + $0x9a] sm:$0xff]
      %v1354 = vld [vmem:[%s437 + $0xaa] sm:$0xff]
      %v1355 = vld [vmem:[%s437 + $0xb2] sm:$0xff]
      %1372 = vrot.lane.b32.xlu0 %v1292, 16
      %v1373 = vpop.permute.xlu0 %1372
      %1374 = vrot.lane.b32.xlu0 %v1293, 16
      %v1375 = vpop.permute.xlu0 %1374
      %1376 = vrot.lane.b32.xlu0 %v1294, 16
      %v1377 = vpop.permute.xlu0 %1376
      %1378 = vrot.lane.b32.xlu0 %v1295, 16
      %v1379 = vpop.permute.xlu0 %1378
      %1380 = vrot.lane.b32.xlu0 %v1296, 16
      %v1381 = vpop.permute.xlu0 %1380
      %1382 = vrot.lane.b32.xlu0 %v1297, 16
      %v1383 = vpop.permute.xlu0 %1382
      %1384 = vrot.lane.b32.xlu0 %v1298, 16
      %v1385 = vpop.permute.xlu0 %1384
      %1386 = vrot.lane.b32.xlu0 %v1299, 16
      %v1387 = vpop.permute.xlu0 %1386
      %1388 = vrot.lane.b32.xlu0 %v1300, 16
      %v1389 = vpop.permute.xlu0 %1388
      %1390 = vrot.lane.b32.xlu0 %v1301, 16
      %v1391 = vpop.permute.xlu0 %1390
      %1392 = vrot.lane.b32.xlu0 %v1302, 16
      %v1393 = vpop.permute.xlu0 %1392
      %1394 = vrot.lane.b32.xlu0 %v1303, 16
      %v1395 = vpop.permute.xlu0 %1394
      %1396 = vrot.lane.b32.xlu0 %v1304, 16
      %v1397 = vpop.permute.xlu0 %1396
      %1398 = vrot.lane.b32.xlu0 %v1305, 16
      %v1399 = vpop.permute.xlu0 %1398
      %1400 = vrot.lane.b32.xlu0 %v1306, 16
      %v1401 = vpop.permute.xlu0 %1400
      %1402 = vrot.lane.b32.xlu0 %v1307, 16
      %v1403 = vpop.permute.xlu0 %1402
      %1420 = vrot.lane.b32.xlu0 %v454, 32
      %v1421 = vpop.permute.xlu0 %1420
      %1422 = vrot.lane.b32.xlu0 %v455, 32
      %v1423 = vpop.permute.xlu0 %1422
      %1424 = vrot.lane.b32.xlu0 %v456, 32
      %v1425 = vpop.permute.xlu0 %1424
      %1426 = vrot.lane.b32.xlu0 %v457, 32
      %v1427 = vpop.permute.xlu0 %1426
      %1428 = vrot.lane.b32.xlu0 %v458, 32
      %v1429 = vpop.permute.xlu0 %1428
      %1430 = vrot.lane.b32.xlu0 %v459, 32
      %v1431 = vpop.permute.xlu0 %1430
      %1432 = vrot.lane.b32.xlu0 %v460, 32
      %v1433 = vpop.permute.xlu0 %1432
      %1434 = vrot.lane.b32.xlu0 %v461, 32
      %v1435 = vpop.permute.xlu0 %1434
      %1436 = vrot.lane.b32.xlu0 %v462, 32
      %v1437 = vpop.permute.xlu0 %1436
      %1438 = vrot.lane.b32.xlu0 %v463, 32
      %v1439 = vpop.permute.xlu0 %1438
      %1440 = vrot.lane.b32.xlu0 %v464, 32
      %v1441 = vpop.permute.xlu0 %1440
      %1442 = vrot.lane.b32.xlu0 %v465, 32
      %v1443 = vpop.permute.xlu0 %1442
      %1444 = vrot.lane.b32.xlu0 %v466, 32
      %v1445 = vpop.permute.xlu0 %1444
      %1446 = vrot.lane.b32.xlu0 %v467, 32
      %v1447 = vpop.permute.xlu0 %1446
      %1448 = vrot.lane.b32.xlu0 %v468, 32
      %v1449 = vpop.permute.xlu0 %1448
      %1450 = vrot.lane.b32.xlu0 %v469, 32
      %v1451 = vpop.permute.xlu0 %1450
      %1484 = vrot.lane.b32.xlu0 %v1324, 48
      %v1485 = vpop.permute.xlu0 %1484
      %1486 = vrot.lane.b32.xlu0 %v1325, 48
      %v1487 = vpop.permute.xlu0 %1486
      %1488 = vrot.lane.b32.xlu0 %v1326, 48
      %v1489 = vpop.permute.xlu0 %1488
      %1490 = vrot.lane.b32.xlu0 %v1327, 48
      %v1491 = vpop.permute.xlu0 %1490
      %1492 = vrot.lane.b32.xlu0 %v1328, 48
      %v1493 = vpop.permute.xlu0 %1492
      %1494 = vrot.lane.b32.xlu0 %v1329, 48
      %v1495 = vpop.permute.xlu0 %1494
      %1496 = vrot.lane.b32.xlu0 %v1330, 48
      %v1497 = vpop.permute.xlu0 %1496
      %1498 = vrot.lane.b32.xlu0 %v1331, 48
      %v1499 = vpop.permute.xlu0 %1498
      %1500 = vrot.lane.b32.xlu0 %v1332, 48
      %v1501 = vpop.permute.xlu0 %1500
      %1502 = vrot.lane.b32.xlu0 %v1333, 48
      %v1503 = vpop.permute.xlu0 %1502
      %1504 = vrot.lane.b32.xlu0 %v1334, 48
      %v1505 = vpop.permute.xlu0 %1504
      %1506 = vrot.lane.b32.xlu0 %v1335, 48
      %v1507 = vpop.permute.xlu0 %1506
      %1508 = vrot.lane.b32.xlu0 %v1336, 48
      %v1509 = vpop.permute.xlu0 %1508
      %1510 = vrot.lane.b32.xlu0 %v1337, 48
      %v1511 = vpop.permute.xlu0 %1510
      %1512 = vrot.lane.b32.xlu0 %v1338, 48
      %v1513 = vpop.permute.xlu0 %1512
      %1514 = vrot.lane.b32.xlu0 %v1339, 48
      %v1515 = vpop.permute.xlu0 %1514
      %v1532 = vsel %vm678, %v386, %v1373
      %v1533 = vsel %vm678, %v387, %v1375
      %v1534 = vsel %vm678, %v388, %v1377
      %v1535 = vsel %vm678, %v389, %v1379
      %v1536 = vsel %vm678, %v390, %v1381
      %v1537 = vsel %vm678, %v391, %v1383
      %v1538 = vsel %vm678, %v392, %v1385
      %v1539 = vsel %vm678, %v393, %v1387
      %v1540 = vsel %vm678, %v394, %v1389
      %v1541 = vsel %vm678, %v395, %v1391
      %v1542 = vsel %vm678, %v396, %v1393
      %v1543 = vsel %vm678, %v397, %v1395
      %v1544 = vsel %vm678, %v398, %v1397
      %v1545 = vsel %vm678, %v399, %v1399
      %v1546 = vsel %vm678, %v400, %v1401
      %v1547 = vsel %vm678, %v401, %v1403
      %v1548 = vsel %vm695, %v1532, %v1421
      %v1549 = vsel %vm695, %v1533, %v1423
      %v1550 = vsel %vm695, %v1534, %v1425
      %v1551 = vsel %vm695, %v1535, %v1427
      %v1552 = vsel %vm695, %v1536, %v1429
      %v1553 = vsel %vm695, %v1537, %v1431
      %v1554 = vsel %vm695, %v1538, %v1433
      %v1555 = vsel %vm695, %v1539, %v1435
      %v1556 = vsel %vm695, %v1540, %v1437
      %v1557 = vsel %vm695, %v1541, %v1439
      %v1558 = vsel %vm695, %v1542, %v1441
      %v1559 = vsel %vm695, %v1543, %v1443
      %v1560 = vsel %vm695, %v1544, %v1445
      %v1561 = vsel %vm695, %v1545, %v1447
      %v1562 = vsel %vm695, %v1546, %v1449
      %v1563 = vsel %vm695, %v1547, %v1451
      %v1564 = vsel %vm712, %v1548, %v1485
      %v1565 = vsel %vm712, %v1549, %v1487
      %v1566 = vsel %vm712, %v1550, %v1489
      %v1567 = vsel %vm712, %v1551, %v1491
      %v1568 = vsel %vm712, %v1552, %v1493
      %v1569 = vsel %vm712, %v1553, %v1495
      %v1570 = vsel %vm712, %v1554, %v1497
      %v1571 = vsel %vm712, %v1555, %v1499
      %v1572 = vsel %vm712, %v1556, %v1501
      %v1573 = vsel %vm712, %v1557, %v1503
      %v1574 = vsel %vm712, %v1558, %v1505
      %v1575 = vsel %vm712, %v1559, %v1507
      %v1576 = vsel %vm712, %v1560, %v1509
      %v1577 = vsel %vm712, %v1561, %v1511
      %v1578 = vsel %vm712, %v1562, %v1513
      %v1579 = vsel %vm712, %v1563, %v1515
      %v1580 = vpack.c.bf16 %v1565, %v1564
      %v1581 = vpack.c.bf16 %v1567, %v1566
      %v1582 = vpack.c.bf16 %v1569, %v1568
      %v1583 = vpack.c.bf16 %v1571, %v1570
      %v1584 = vpack.c.bf16 %v1573, %v1572
      %v1585 = vpack.c.bf16 %v1575, %v1574
      %v1586 = vpack.c.bf16 %v1577, %v1576
      %v1587 = vpack.c.bf16 %v1579, %v1578
      %1604 = vrot.lane.b32.xlu0 %v1308, 16
      %v1605 = vpop.permute.xlu0 %1604
      %1606 = vrot.lane.b32.xlu0 %v1309, 16
      %v1607 = vpop.permute.xlu0 %1606
      %1608 = vrot.lane.b32.xlu0 %v1310, 16
      %v1609 = vpop.permute.xlu0 %1608
      %1610 = vrot.lane.b32.xlu0 %v1311, 16
      %v1611 = vpop.permute.xlu0 %1610
      %1612 = vrot.lane.b32.xlu0 %v1312, 16
      %v1613 = vpop.permute.xlu0 %1612
      %1614 = vrot.lane.b32.xlu0 %v1313, 16
      %v1615 = vpop.permute.xlu0 %1614
      %1616 = vrot.lane.b32.xlu0 %v1314, 16
      %v1617 = vpop.permute.xlu0 %1616
      %1618 = vrot.lane.b32.xlu0 %v1315, 16
      %v1619 = vpop.permute.xlu0 %1618
      %1620 = vrot.lane.b32.xlu0 %v1316, 16
      %v1621 = vpop.permute.xlu0 %1620
      %1622 = vrot.lane.b32.xlu0 %v1317, 16
      %v1623 = vpop.permute.xlu0 %1622
      %1624 = vrot.lane.b32.xlu0 %v1318, 16
      %v1625 = vpop.permute.xlu0 %1624
      %1626 = vrot.lane.b32.xlu0 %v1319, 16
      %v1627 = vpop.permute.xlu0 %1626
      %1628 = vrot.lane.b32.xlu0 %v1320, 16
      %v1629 = vpop.permute.xlu0 %1628
      %1630 = vrot.lane.b32.xlu0 %v1321, 16
      %v1631 = vpop.permute.xlu0 %1630
      %1632 = vrot.lane.b32.xlu0 %v1322, 16
      %v1633 = vpop.permute.xlu0 %1632
      %1634 = vrot.lane.b32.xlu0 %v1323, 16
      %v1635 = vpop.permute.xlu0 %1634
      %1652 = vrot.lane.b32.xlu0 %v470, 32
      %v1653 = vpop.permute.xlu0 %1652
      %1654 = vrot.lane.b32.xlu0 %v471, 32
      %v1655 = vpop.permute.xlu0 %1654
      %1656 = vrot.lane.b32.xlu0 %v472, 32
      %v1657 = vpop.permute.xlu0 %1656
      %1658 = vrot.lane.b32.xlu0 %v473, 32
      %v1659 = vpop.permute.xlu0 %1658
      %1660 = vrot.lane.b32.xlu0 %v474, 32
      %v1661 = vpop.permute.xlu0 %1660
      %1662 = vrot.lane.b32.xlu0 %v475, 32
      %v1663 = vpop.permute.xlu0 %1662
      %1664 = vrot.lane.b32.xlu0 %v476, 32
      %v1665 = vpop.permute.xlu0 %1664
      %1666 = vrot.lane.b32.xlu0 %v477, 32
      %v1667 = vpop.permute.xlu0 %1666
      %1668 = vrot.lane.b32.xlu0 %v478, 32
      %v1669 = vpop.permute.xlu0 %1668
      %1670 = vrot.lane.b32.xlu0 %v479, 32
      %v1671 = vpop.permute.xlu0 %1670
      %1672 = vrot.lane.b32.xlu0 %v480, 32
      %v1673 = vpop.permute.xlu0 %1672
      %1674 = vrot.lane.b32.xlu0 %v481, 32
      %v1675 = vpop.permute.xlu0 %1674
      %1676 = vrot.lane.b32.xlu0 %v482, 32
      %v1677 = vpop.permute.xlu0 %1676
      %1678 = vrot.lane.b32.xlu0 %v483, 32
      %v1679 = vpop.permute.xlu0 %1678
      %1680 = vrot.lane.b32.xlu0 %v484, 32
      %v1681 = vpop.permute.xlu0 %1680
      %1682 = vrot.lane.b32.xlu0 %v485, 32
      %v1683 = vpop.permute.xlu0 %1682
      %1716 = vrot.lane.b32.xlu0 %v1340, 48
      %v1717 = vpop.permute.xlu0 %1716
      %1718 = vrot.lane.b32.xlu0 %v1341, 48
      %v1719 = vpop.permute.xlu0 %1718
      %1720 = vrot.lane.b32.xlu0 %v1342, 48
      %v1721 = vpop.permute.xlu0 %1720
      %1722 = vrot.lane.b32.xlu0 %v1343, 48
      %v1723 = vpop.permute.xlu0 %1722
      %1724 = vrot.lane.b32.xlu0 %v1344, 48
      %v1725 = vpop.permute.xlu0 %1724
      %1726 = vrot.lane.b32.xlu0 %v1345, 48
      %v1727 = vpop.permute.xlu0 %1726
      %1728 = vrot.lane.b32.xlu0 %v1346, 48
      %v1729 = vpop.permute.xlu0 %1728
      %1730 = vrot.lane.b32.xlu0 %v1347, 48
      %v1731 = vpop.permute.xlu0 %1730
      %1732 = vrot.lane.b32.xlu0 %v1348, 48
      %v1733 = vpop.permute.xlu0 %1732
      %1734 = vrot.lane.b32.xlu0 %v1349, 48
      %v1735 = vpop.permute.xlu0 %1734
      %1736 = vrot.lane.b32.xlu0 %v1350, 48
      %v1737 = vpop.permute.xlu0 %1736
      %1738 = vrot.lane.b32.xlu0 %v1351, 48
      %v1739 = vpop.permute.xlu0 %1738
      %1740 = vrot.lane.b32.xlu0 %v1352, 48
      %v1741 = vpop.permute.xlu0 %1740
      %1742 = vrot.lane.b32.xlu0 %v1353, 48
      %v1743 = vpop.permute.xlu0 %1742
      %1744 = vrot.lane.b32.xlu0 %v1354, 48
      %v1745 = vpop.permute.xlu0 %1744
      %1746 = vrot.lane.b32.xlu0 %v1355, 48
      %v1747 = vpop.permute.xlu0 %1746
      %v1764 = vsel %vm678, %v402, %v1605
      %v1765 = vsel %vm678, %v403, %v1607
      %v1766 = vsel %vm678, %v404, %v1609
      %v1767 = vsel %vm678, %v405, %v1611
      %v1768 = vsel %vm678, %v406, %v1613
      %v1769 = vsel %vm678, %v407, %v1615
      %v1770 = vsel %vm678, %v408, %v1617
      %v1771 = vsel %vm678, %v409, %v1619
      %v1772 = vsel %vm678, %v410, %v1621
      %v1773 = vsel %vm678, %v411, %v1623
      %v1774 = vsel %vm678, %v412, %v1625
      %v1775 = vsel %vm678, %v413, %v1627
      %v1776 = vsel %vm678, %v414, %v1629
      %v1777 = vsel %vm678, %v415, %v1631
      %v1778 = vsel %vm678, %v416, %v1633
      %v1779 = vsel %vm678, %v417, %v1635
      %v1780 = vsel %vm695, %v1764, %v1653
      %v1781 = vsel %vm695, %v1765, %v1655
      %v1782 = vsel %vm695, %v1766, %v1657
      %v1783 = vsel %vm695, %v1767, %v1659
      %v1784 = vsel %vm695, %v1768, %v1661
      %v1785 = vsel %vm695, %v1769, %v1663
      %v1786 = vsel %vm695, %v1770, %v1665
      %v1787 = vsel %vm695, %v1771, %v1667
      %v1788 = vsel %vm695, %v1772, %v1669
      %v1789 = vsel %vm695, %v1773, %v1671
      %v1790 = vsel %vm695, %v1774, %v1673
      %v1791 = vsel %vm695, %v1775, %v1675
      %v1792 = vsel %vm695, %v1776, %v1677
      %v1793 = vsel %vm695, %v1777, %v1679
      %v1794 = vsel %vm695, %v1778, %v1681
      %v1795 = vsel %vm695, %v1779, %v1683
      %v1796 = vsel %vm712, %v1780, %v1717
      %v1797 = vsel %vm712, %v1781, %v1719
      %v1798 = vsel %vm712, %v1782, %v1721
      %v1799 = vsel %vm712, %v1783, %v1723
      %v1800 = vsel %vm712, %v1784, %v1725
      %v1801 = vsel %vm712, %v1785, %v1727
      %v1802 = vsel %vm712, %v1786, %v1729
      %v1803 = vsel %vm712, %v1787, %v1731
      %v1804 = vsel %vm712, %v1788, %v1733
      %v1805 = vsel %vm712, %v1789, %v1735
      %v1806 = vsel %vm712, %v1790, %v1737
      %v1807 = vsel %vm712, %v1791, %v1739
      %v1808 = vsel %vm712, %v1792, %v1741
      %v1809 = vsel %vm712, %v1793, %v1743
      %v1810 = vsel %vm712, %v1794, %v1745
      %v1811 = vsel %vm712, %v1795, %v1747
      %v1812 = vpack.c.bf16 %v1797, %v1796
      %v1813 = vpack.c.bf16 %v1799, %v1798
      %v1814 = vpack.c.bf16 %v1801, %v1800
      %v1815 = vpack.c.bf16 %v1803, %v1802
      %v1816 = vpack.c.bf16 %v1805, %v1804
      %v1817 = vpack.c.bf16 %v1807, %v1806
      %v1818 = vpack.c.bf16 %v1809, %v1808
      %v1819 = vpack.c.bf16 %v1811, %v1810
      %s1820 = scalar_lea.vmem %s1, 32
      %v1821 = vld [vmem:[%s1820] sm:$0xf]
      %v1822 = vld [vmem:[%s1820 + $0x4] sm:$0xf]
      %v1823 = vld [vmem:[%s1820 + $0x8] sm:$0xf]
      %v1824 = vld [vmem:[%s1820 + $0xc] sm:$0xf]
      %v1825 = vld [vmem:[%s1820 + $0x10] sm:$0xf]
      %v1826 = vld [vmem:[%s1820 + $0x14] sm:$0xf]
      %v1827 = vld [vmem:[%s1820 + $0x18] sm:$0xf]
      %v1828 = vld [vmem:[%s1820 + $0x1c] sm:$0xf]
      %v1837 = vunpack.c.l.b16 %v1821
      %v1838 = vunpack.c.l.b16 %v1822
      %v1839 = vunpack.c.l.b16 %v1823
      %v1840 = vunpack.c.l.b16 %v1824
      %v1841 = vunpack.c.l.b16 %v1825
      %v1842 = vunpack.c.l.b16 %v1826
      %v1843 = vunpack.c.l.b16 %v1827
      %v1844 = vunpack.c.l.b16 %v1828
      %v1845 = vpack.c.b16 %v1838, %v1837
      %v1846 = vpack.c.b16 %v1840, %v1839
      %v1847 = vpack.c.b16 %v1842, %v1841
      %v1848 = vpack.c.b16 %v1844, %v1843
      %v1854 = vsel %vm1017, %v1580, 0
      %v1857 = vsel %vm1017, %v1581, 0
      %v1860 = vsel %vm1017, %v1582, 0
      %v1863 = vsel %vm1017, %v1583, 0
      %v1866 = vsel %vm1017, %v1584, 0
      %v1869 = vsel %vm1017, %v1585, 0
      %v1872 = vsel %vm1017, %v1586, 0
      %v1875 = vsel %vm1017, %v1587, 0
      %1877 = vmatprep.subr.bf16.mxu0 0
      %1878 = vmatpush1.bf16.msra.mxu0 %v1845
      %1879 = vmatprep.subr.bf16.mxu0 0
      %1880 = vmatpush1.bf16.msra.mxu0 %v1846
      %1881 = vmatprep.subr.bf16.mxu0 0
      %1882 = vmatpush1.bf16.msra.mxu0 %v1847
      %1883 = vmatprep.subr.bf16.mxu0 0
      %1884 = vmatpush1.bf16.msra.mxu0 %v1848
      %1885 = vmatprep.subr.bf16.mxu0 0
      %1886 = vmatpush1.bf16.msra.mxu0 0
      %1887 = vmatprep.subr.bf16.mxu0 0
      %1888 = vmatpush1.bf16.msra.mxu0 0
      %1889 = vmatprep.subr.bf16.mxu0 0
      %1890 = vmatpush1.bf16.msra.mxu0 0
      %1891 = vmatprep.subr.bf16.mxu0 0
      %1892 = vmatpush1.bf16.msra.mxu0 0
      %1893 = vmatprep.subr.bf16.mxu0 0
      %1894 = vmatpush1.bf16.msra.mxu0 0
      %1895 = vmatprep.subr.bf16.mxu0 0
      %1896 = vmatpush1.bf16.msra.mxu0 0
      %1897 = vmatprep.subr.bf16.mxu0 0
      %1898 = vmatpush1.bf16.msra.mxu0 0
      %1899 = vmatprep.subr.bf16.mxu0 0
      %1900 = vmatpush1.bf16.msra.mxu0 0
      %1901 = vmatprep.subr.bf16.mxu0 0
      %1902 = vmatpush1.bf16.msra.mxu0 0
      %1903 = vmatprep.subr.bf16.mxu0 0
      %1904 = vmatpush1.bf16.msra.mxu0 0
      %1905 = vmatprep.subr.bf16.mxu0 0
      %1906 = vmatpush1.bf16.msra.mxu0 0
      %1907 = vmatprep.subr.bf16.mxu0 0
      %1908 = vmatpush1.bf16.msra.mxu0 0
      %1909 = vmatprep.mubr.bf16.mxu0 0
      %1910 = vmatmul.mubr.bf16.gmra.mrb[0].mxu0 %v1854
      %v1911 = vpop.f32.mrb[0].mxu0
      %v1912 = vadd.f32 0.0, %v1911
      %v1913 = vpop.f32.mrb[0].mxu0
      %v1914 = vpop.f32.mrb[0].mxu0
      %v1915 = vadd.f32 0.0, %v1914
      %v1916 = vpop.f32.mrb[0].mxu0
      %1917 = vmatprep.mubr.bf16.mxu0 0
      %1918 = vmatmul.mubr.bf16.gmra.mrb[0].mxu0 %v1857
      %v1919 = vpop.f32.mrb[0].mxu0
      %v1920 = vadd.f32 0.0, %v1919
      %v1921 = vpop.f32.mrb[0].mxu0
      %v1922 = vpop.f32.mrb[0].mxu0
      %v1923 = vadd.f32 0.0, %v1922
      %v1924 = vpop.f32.mrb[0].mxu0
      %1925 = vmatprep.mubr.bf16.mxu0 0
      %1926 = vmatmul.mubr.bf16.gmra.mrb[0].mxu0 %v1860
      %v1927 = vpop.f32.mrb[0].mxu0
      %v1928 = vadd.f32 0.0, %v1927
      %v1929 = vpop.f32.mrb[0].mxu0
      %v1930 = vpop.f32.mrb[0].mxu0
      %v1931 = vadd.f32 0.0, %v1930
      %v1932 = vpop.f32.mrb[0].mxu0
      %1933 = vmatprep.mubr.bf16.mxu0 0
      %1934 = vmatmul.mubr.bf16.gmra.mrb[0].mxu0 %v1863
      %v1935 = vpop.f32.mrb[0].mxu0
      %v1936 = vadd.f32 0.0, %v1935
      %v1937 = vpop.f32.mrb[0].mxu0
      %v1938 = vpop.f32.mrb[0].mxu0
      %v1939 = vadd.f32 0.0, %v1938
      %v1940 = vpop.f32.mrb[0].mxu0
      %1941 = vmatprep.mubr.bf16.mxu0 0
      %1942 = vmatmul.mubr.bf16.gmra.mrb[0].mxu0 %v1866
      %v1943 = vpop.f32.mrb[0].mxu0
      %v1944 = vadd.f32 0.0, %v1943
      %v1945 = vpop.f32.mrb[0].mxu0
      %v1946 = vpop.f32.mrb[0].mxu0
      %v1947 = vadd.f32 0.0, %v1946
      %v1948 = vpop.f32.mrb[0].mxu0
      %1949 = vmatprep.mubr.bf16.mxu0 0
      %1950 = vmatmul.mubr.bf16.gmra.mrb[0].mxu0 %v1869
      %v1951 = vpop.f32.mrb[0].mxu0
      %v1952 = vadd.f32 0.0, %v1951
      %v1953 = vpop.f32.mrb[0].mxu0
      %v1954 = vpop.f32.mrb[0].mxu0
      %v1955 = vadd.f32 0.0, %v1954
      %v1956 = vpop.f32.mrb[0].mxu0
      %1957 = vmatprep.mubr.bf16.mxu0 0
      %1958 = vmatmul.mubr.bf16.gmra.mrb[0].mxu0 %v1872
      %v1959 = vpop.f32.mrb[0].mxu0
      %v1960 = vadd.f32 0.0, %v1959
      %v1961 = vpop.f32.mrb[0].mxu0
      %v1962 = vpop.f32.mrb[0].mxu0
      %v1963 = vadd.f32 0.0, %v1962
      %v1964 = vpop.f32.mrb[0].mxu0
      %1965 = vmatprep.mubr.bf16.mxu0 0
      %1966 = vmatmul.mubr.bf16.gmra.mrb[0].mxu0 %v1875
      %v1967 = vpop.f32.mrb[0].mxu0
      %v1968 = vadd.f32 0.0, %v1967
      %v1969 = vpop.f32.mrb[0].mxu0
      %v1970 = vpop.f32.mrb[0].mxu0
      %v1971 = vadd.f32 0.0, %v1970
      %v1972 = vpop.f32.mrb[0].mxu0
      %1973 = vdwg.mxu0
      %s1974 = scalar_lea.vmem %s2, 32
      %v1975 = vld [vmem:[%s1974] sm:$0xf]
      %v1976 = vld [vmem:[%s1974 + $0x4] sm:$0xf]
      %v1977 = vld [vmem:[%s1974 + $0x8] sm:$0xf]
      %v1978 = vld [vmem:[%s1974 + $0xc] sm:$0xf]
      %v1979 = vld [vmem:[%s1974 + $0x10] sm:$0xf]
      %v1980 = vld [vmem:[%s1974 + $0x14] sm:$0xf]
      %v1981 = vld [vmem:[%s1974 + $0x18] sm:$0xf]
      %v1982 = vld [vmem:[%s1974 + $0x1c] sm:$0xf]
      %v1991 = vunpack.c.l.b16 %v1975
      %v1992 = vunpack.c.l.b16 %v1976
      %v1993 = vunpack.c.l.b16 %v1977
      %v1994 = vunpack.c.l.b16 %v1978
      %v1995 = vunpack.c.l.b16 %v1979
      %v1996 = vunpack.c.l.b16 %v1980
      %v1997 = vunpack.c.l.b16 %v1981
      %v1998 = vunpack.c.l.b16 %v1982
      %v1999 = vpack.c.b16 %v1992, %v1991
      %v2000 = vpack.c.b16 %v1994, %v1993
      %v2001 = vpack.c.b16 %v1996, %v1995
      %v2002 = vpack.c.b16 %v1998, %v1997
      %v2008 = vsel %vm1017, %v1812, 0
      %v2011 = vsel %vm1017, %v1813, 0
      %v2014 = vsel %vm1017, %v1814, 0
      %v2017 = vsel %vm1017, %v1815, 0
      %v2020 = vsel %vm1017, %v1816, 0
      %v2023 = vsel %vm1017, %v1817, 0
      %v2026 = vsel %vm1017, %v1818, 0
      %v2029 = vsel %vm1017, %v1819, 0
      %2031 = vmatprep.subr.bf16.mxu0 0
      %2032 = vmatpush1.bf16.msra.mxu0 %v1999
      %2033 = vmatprep.subr.bf16.mxu0 0
      %2034 = vmatpush1.bf16.msra.mxu0 %v2000
      %2035 = vmatprep.subr.bf16.mxu0 0
      %2036 = vmatpush1.bf16.msra.mxu0 %v2001
      %2037 = vmatprep.subr.bf16.mxu0 0
      %2038 = vmatpush1.bf16.msra.mxu0 %v2002
      %2039 = vmatprep.subr.bf16.mxu0 0
      %2040 = vmatpush1.bf16.msra.mxu0 0
      %2041 = vmatprep.subr.bf16.mxu0 0
      %2042 = vmatpush1.bf16.msra.mxu0 0
      %2043 = vmatprep.subr.bf16.mxu0 0
      %2044 = vmatpush1.bf16.msra.mxu0 0
      %2045 = vmatprep.subr.bf16.mxu0 0
      %2046 = vmatpush1.bf16.msra.mxu0 0
      %2047 = vmatprep.subr.bf16.mxu0 0
      %2048 = vmatpush1.bf16.msra.mxu0 0
      %2049 = vmatprep.subr.bf16.mxu0 0
      %2050 = vmatpush1.bf16.msra.mxu0 0
      %2051 = vmatprep.subr.bf16.mxu0 0
      %2052 = vmatpush1.bf16.msra.mxu0 0
      %2053 = vmatprep.subr.bf16.mxu0 0
      %2054 = vmatpush1.bf16.msra.mxu0 0
      %2055 = vmatprep.subr.bf16.mxu0 0
      %2056 = vmatpush1.bf16.msra.mxu0 0
      %2057 = vmatprep.subr.bf16.mxu0 0
      %2058 = vmatpush1.bf16.msra.mxu0 0
      %2059 = vmatprep.subr.bf16.mxu0 0
      %2060 = vmatpush1.bf16.msra.mxu0 0
      %2061 = vmatprep.subr.bf16.mxu0 0
      %2062 = vmatpush1.bf16.msra.mxu0 0
      %2063 = vmatprep.mubr.bf16.mxu0 0
      %2064 = vmatmul.mubr.bf16.gmra.mrb[0].mxu0 %v2008
      %v2065 = vpop.f32.mrb[0].mxu0
      %v2066 = vadd.f32 0.0, %v2065
      %v2067 = vpop.f32.mrb[0].mxu0
      %v2068 = vpop.f32.mrb[0].mxu0
      %v2069 = vadd.f32 0.0, %v2068
      %v2070 = vpop.f32.mrb[0].mxu0
      %2071 = vmatprep.mubr.bf16.mxu0 0
      %2072 = vmatmul.mubr.bf16.gmra.mrb[0].mxu0 %v2011
      %v2073 = vpop.f32.mrb[0].mxu0
      %v2074 = vadd.f32 0.0, %v2073
      %v2075 = vpop.f32.mrb[0].mxu0
      %v2076 = vpop.f32.mrb[0].mxu0
      %v2077 = vadd.f32 0.0, %v2076
      %v2078 = vpop.f32.mrb[0].mxu0
      %2079 = vmatprep.mubr.bf16.mxu0 0
      %2080 = vmatmul.mubr.bf16.gmra.mrb[0].mxu0 %v2014
      %v2081 = vpop.f32.mrb[0].mxu0
      %v2082 = vadd.f32 0.0, %v2081
      %v2083 = vpop.f32.mrb[0].mxu0
      %v2084 = vpop.f32.mrb[0].mxu0
      %v2085 = vadd.f32 0.0, %v2084
      %v2086 = vpop.f32.mrb[0].mxu0
      %2087 = vmatprep.mubr.bf16.mxu0 0
      %2088 = vmatmul.mubr.bf16.gmra.mrb[0].mxu0 %v2017
      %v2089 = vpop.f32.mrb[0].mxu0
      %v2090 = vadd.f32 0.0, %v2089
      %v2091 = vpop.f32.mrb[0].mxu0
      %v2092 = vpop.f32.mrb[0].mxu0
      %v2093 = vadd.f32 0.0, %v2092
      %v2094 = vpop.f32.mrb[0].mxu0
      %2095 = vmatprep.mubr.bf16.mxu0 0
      %2096 = vmatmul.mubr.bf16.gmra.mrb[0].mxu0 %v2020
      %v2097 = vpop.f32.mrb[0].mxu0
      %v2098 = vadd.f32 0.0, %v2097
      %v2099 = vpop.f32.mrb[0].mxu0
      %v2100 = vpop.f32.mrb[0].mxu0
      %v2101 = vadd.f32 0.0, %v2100
      %v2102 = vpop.f32.mrb[0].mxu0
      %2103 = vmatprep.mubr.bf16.mxu0 0
      %2104 = vmatmul.mubr.bf16.gmra.mrb[0].mxu0 %v2023
      %v2105 = vpop.f32.mrb[0].mxu0
      %v2106 = vadd.f32 0.0, %v2105
      %v2107 = vpop.f32.mrb[0].mxu0
      %v2108 = vpop.f32.mrb[0].mxu0
      %v2109 = vadd.f32 0.0, %v2108
      %v2110 = vpop.f32.mrb[0].mxu0
      %2111 = vmatprep.mubr.bf16.mxu0 0
      %2112 = vmatmul.mubr.bf16.gmra.mrb[0].mxu0 %v2026
      %v2113 = vpop.f32.mrb[0].mxu0
      %v2114 = vadd.f32 0.0, %v2113
      %v2115 = vpop.f32.mrb[0].mxu0
      %v2116 = vpop.f32.mrb[0].mxu0
      %v2117 = vadd.f32 0.0, %v2116
      %v2118 = vpop.f32.mrb[0].mxu0
      %2119 = vmatprep.mubr.bf16.mxu0 0
      %2120 = vmatmul.mubr.bf16.gmra.mrb[0].mxu0 %v2029
      %v2121 = vpop.f32.mrb[0].mxu0
      %v2122 = vadd.f32 0.0, %v2121
      %v2123 = vpop.f32.mrb[0].mxu0
      %v2124 = vpop.f32.mrb[0].mxu0
      %v2125 = vadd.f32 0.0, %v2124
      %v2126 = vpop.f32.mrb[0].mxu0
      %2127 = vdwg.mxu0
      %s2128 = sadd.s32 %s350, 2
      %s2129 = smul.u32 %s2128, 24
      %s2130 = scalar_lea.vmem [#allocation2], %s2129
      %v2131 = vld [vmem:[%s2130] sm:$0xff]
      %v2132 = vld [vmem:[%s2130 + $0x8] sm:$0xff]
      %v2133 = vld [vmem:[%s2130 + $0x18] sm:$0xff]
      %v2134 = vld [vmem:[%s2130 + $0x20] sm:$0xff]
      %v2135 = vld [vmem:[%s2130 + $0x30] sm:$0xff]
      %v2136 = vld [vmem:[%s2130 + $0x38] sm:$0xff]
      %v2137 = vld [vmem:[%s2130 + $0x48] sm:$0xff]
      %v2138 = vld [vmem:[%s2130 + $0x50] sm:$0xff]
      %v2139 = vld [vmem:[%s2130 + $0x60] sm:$0xff]
      %v2140 = vld [vmem:[%s2130 + $0x68] sm:$0xff]
      %v2141 = vld [vmem:[%s2130 + $0x78] sm:$0xff]
      %v2142 = vld [vmem:[%s2130 + $0x80] sm:$0xff]
      %v2143 = vld [vmem:[%s2130 + $0x90] sm:$0xff]
      %v2144 = vld [vmem:[%s2130 + $0x98] sm:$0xff]
      %v2145 = vld [vmem:[%s2130 + $0xa8] sm:$0xff]
      %v2146 = vld [vmem:[%s2130 + $0xb0] sm:$0xff]
      %s2147 = scalar_lea.vmem %s211, %s2129
      %v2148 = vld [vmem:[%s2147] sm:$0xff]
      %v2149 = vld [vmem:[%s2147 + $0x8] sm:$0xff]
      %v2150 = vld [vmem:[%s2147 + $0x18] sm:$0xff]
      %v2151 = vld [vmem:[%s2147 + $0x20] sm:$0xff]
      %v2152 = vld [vmem:[%s2147 + $0x30] sm:$0xff]
      %v2153 = vld [vmem:[%s2147 + $0x38] sm:$0xff]
      %v2154 = vld [vmem:[%s2147 + $0x48] sm:$0xff]
      %v2155 = vld [vmem:[%s2147 + $0x50] sm:$0xff]
      %v2156 = vld [vmem:[%s2147 + $0x60] sm:$0xff]
      %v2157 = vld [vmem:[%s2147 + $0x68] sm:$0xff]
      %v2158 = vld [vmem:[%s2147 + $0x78] sm:$0xff]
      %v2159 = vld [vmem:[%s2147 + $0x80] sm:$0xff]
      %v2160 = vld [vmem:[%s2147 + $0x90] sm:$0xff]
      %v2161 = vld [vmem:[%s2147 + $0x98] sm:$0xff]
      %v2162 = vld [vmem:[%s2147 + $0xa8] sm:$0xff]
      %v2163 = vld [vmem:[%s2147 + $0xb0] sm:$0xff]
      %v2164 = vld [vmem:[%s2130 + $0x1] sm:$0xff]
      %v2165 = vld [vmem:[%s2130 + $0x9] sm:$0xff]
      %v2166 = vld [vmem:[%s2130 + $0x19] sm:$0xff]
      %v2167 = vld [vmem:[%s2130 + $0x21] sm:$0xff]
      %v2168 = vld [vmem:[%s2130 + $0x31] sm:$0xff]
      %v2169 = vld [vmem:[%s2130 + $0x39] sm:$0xff]
      %v2170 = vld [vmem:[%s2130 + $0x49] sm:$0xff]
      %v2171 = vld [vmem:[%s2130 + $0x51] sm:$0xff]
      %v2172 = vld [vmem:[%s2130 + $0x61] sm:$0xff]
      %v2173 = vld [vmem:[%s2130 + $0x69] sm:$0xff]
      %v2174 = vld [vmem:[%s2130 + $0x79] sm:$0xff]
      %v2175 = vld [vmem:[%s2130 + $0x81] sm:$0xff]
      %v2176 = vld [vmem:[%s2130 + $0x91] sm:$0xff]
      %v2177 = vld [vmem:[%s2130 + $0x99] sm:$0xff]
      %v2178 = vld [vmem:[%s2130 + $0xa9] sm:$0xff]
      %v2179 = vld [vmem:[%s2130 + $0xb1] sm:$0xff]
      %v2180 = vld [vmem:[%s2147 + $0x1] sm:$0xff]
      %v2181 = vld [vmem:[%s2147 + $0x9] sm:$0xff]
      %v2182 = vld [vmem:[%s2147 + $0x19] sm:$0xff]
      %v2183 = vld [vmem:[%s2147 + $0x21] sm:$0xff]
      %v2184 = vld [vmem:[%s2147 + $0x31] sm:$0xff]
      %v2185 = vld [vmem:[%s2147 + $0x39] sm:$0xff]
      %v2186 = vld [vmem:[%s2147 + $0x49] sm:$0xff]
      %v2187 = vld [vmem:[%s2147 + $0x51] sm:$0xff]
      %v2188 = vld [vmem:[%s2147 + $0x61] sm:$0xff]
      %v2189 = vld [vmem:[%s2147 + $0x69] sm:$0xff]
      %v2190 = vld [vmem:[%s2147 + $0x79] sm:$0xff]
      %v2191 = vld [vmem:[%s2147 + $0x81] sm:$0xff]
      %v2192 = vld [vmem:[%s2147 + $0x91] sm:$0xff]
      %v2193 = vld [vmem:[%s2147 + $0x99] sm:$0xff]
      %v2194 = vld [vmem:[%s2147 + $0xa9] sm:$0xff]
      %v2195 = vld [vmem:[%s2147 + $0xb1] sm:$0xff]
      %2196 = vrot.lane.b32.xlu0 %v454, 16
      %v2197 = vpop.permute.xlu0 %2196
      %2198 = vrot.lane.b32.xlu0 %v455, 16
      %v2199 = vpop.permute.xlu0 %2198
      %2200 = vrot.lane.b32.xlu0 %v456, 16
      %v2201 = vpop.permute.xlu0 %2200
      %2202 = vrot.lane.b32.xlu0 %v457, 16
      %v2203 = vpop.permute.xlu0 %2202
      %2204 = vrot.lane.b32.xlu0 %v458, 16
      %v2205 = vpop.permute.xlu0 %2204
      %2206 = vrot.lane.b32.xlu0 %v459, 16
      %v2207 = vpop.permute.xlu0 %2206
      %2208 = vrot.lane.b32.xlu0 %v460, 16
      %v2209 = vpop.permute.xlu0 %2208
      %2210 = vrot.lane.b32.xlu0 %v461, 16
      %v2211 = vpop.permute.xlu0 %2210
      %2212 = vrot.lane.b32.xlu0 %v462, 16
      %v2213 = vpop.permute.xlu0 %2212
      %2214 = vrot.lane.b32.xlu0 %v463, 16
      %v2215 = vpop.permute.xlu0 %2214
      %2216 = vrot.lane.b32.xlu0 %v464, 16
      %v2217 = vpop.permute.xlu0 %2216
      %2218 = vrot.lane.b32.xlu0 %v465, 16
      %v2219 = vpop.permute.xlu0 %2218
      %2220 = vrot.lane.b32.xlu0 %v466, 16
      %v2221 = vpop.permute.xlu0 %2220
      %2222 = vrot.lane.b32.xlu0 %v467, 16
      %v2223 = vpop.permute.xlu0 %2222
      %2224 = vrot.lane.b32.xlu0 %v468, 16
      %v2225 = vpop.permute.xlu0 %2224
      %2226 = vrot.lane.b32.xlu0 %v469, 16
      %v2227 = vpop.permute.xlu0 %2226
      %2260 = vrot.lane.b32.xlu0 %v2131, 32
      %v2261 = vpop.permute.xlu0 %2260
      %2262 = vrot.lane.b32.xlu0 %v2132, 32
      %v2263 = vpop.permute.xlu0 %2262
      %2264 = vrot.lane.b32.xlu0 %v2133, 32
      %v2265 = vpop.permute.xlu0 %2264
      %2266 = vrot.lane.b32.xlu0 %v2134, 32
      %v2267 = vpop.permute.xlu0 %2266
      %2268 = vrot.lane.b32.xlu0 %v2135, 32
      %v2269 = vpop.permute.xlu0 %2268
      %2270 = vrot.lane.b32.xlu0 %v2136, 32
      %v2271 = vpop.permute.xlu0 %2270
      %2272 = vrot.lane.b32.xlu0 %v2137, 32
      %v2273 = vpop.permute.xlu0 %2272
      %2274 = vrot.lane.b32.xlu0 %v2138, 32
      %v2275 = vpop.permute.xlu0 %2274
      %2276 = vrot.lane.b32.xlu0 %v2139, 32
      %v2277 = vpop.permute.xlu0 %2276
      %2278 = vrot.lane.b32.xlu0 %v2140, 32
      %v2279 = vpop.permute.xlu0 %2278
      %2280 = vrot.lane.b32.xlu0 %v2141, 32
      %v2281 = vpop.permute.xlu0 %2280
      %2282 = vrot.lane.b32.xlu0 %v2142, 32
      %v2283 = vpop.permute.xlu0 %2282
      %2284 = vrot.lane.b32.xlu0 %v2143, 32
      %v2285 = vpop.permute.xlu0 %2284
      %2286 = vrot.lane.b32.xlu0 %v2144, 32
      %v2287 = vpop.permute.xlu0 %2286
      %2288 = vrot.lane.b32.xlu0 %v2145, 32
      %v2289 = vpop.permute.xlu0 %2288
      %2290 = vrot.lane.b32.xlu0 %v2146, 32
      %v2291 = vpop.permute.xlu0 %2290
      %2324 = vrot.lane.b32.xlu0 %v2164, 48
      %v2325 = vpop.permute.xlu0 %2324
      %2326 = vrot.lane.b32.xlu0 %v2165, 48
      %v2327 = vpop.permute.xlu0 %2326
      %2328 = vrot.lane.b32.xlu0 %v2166, 48
      %v2329 = vpop.permute.xlu0 %2328
      %2330 = vrot.lane.b32.xlu0 %v2167, 48
      %v2331 = vpop.permute.xlu0 %2330
      %2332 = vrot.lane.b32.xlu0 %v2168, 48
      %v2333 = vpop.permute.xlu0 %2332
      %2334 = vrot.lane.b32.xlu0 %v2169, 48
      %v2335 = vpop.permute.xlu0 %2334
      %2336 = vrot.lane.b32.xlu0 %v2170, 48
      %v2337 = vpop.permute.xlu0 %2336
      %2338 = vrot.lane.b32.xlu0 %v2171, 48
      %v2339 = vpop.permute.xlu0 %2338
      %2340 = vrot.lane.b32.xlu0 %v2172, 48
      %v2341 = vpop.permute.xlu0 %2340
      %2342 = vrot.lane.b32.xlu0 %v2173, 48
      %v2343 = vpop.permute.xlu0 %2342
      %2344 = vrot.lane.b32.xlu0 %v2174, 48
      %v2345 = vpop.permute.xlu0 %2344
      %2346 = vrot.lane.b32.xlu0 %v2175, 48
      %v2347 = vpop.permute.xlu0 %2346
      %2348 = vrot.lane.b32.xlu0 %v2176, 48
      %v2349 = vpop.permute.xlu0 %2348
      %2350 = vrot.lane.b32.xlu0 %v2177, 48
      %v2351 = vpop.permute.xlu0 %2350
      %2352 = vrot.lane.b32.xlu0 %v2178, 48
      %v2353 = vpop.permute.xlu0 %2352
      %2354 = vrot.lane.b32.xlu0 %v2179, 48
      %v2355 = vpop.permute.xlu0 %2354
      %v2372 = vsel %vm678, %v421, %v2197
      %v2373 = vsel %vm678, %v422, %v2199
      %v2374 = vsel %vm678, %v423, %v2201
      %v2375 = vsel %vm678, %v424, %v2203
      %v2376 = vsel %vm678, %v425, %v2205
      %v2377 = vsel %vm678, %v426, %v2207
      %v2378 = vsel %vm678, %v427, %v2209
      %v2379 = vsel %vm678, %v428, %v2211
      %v2380 = vsel %vm678, %v429, %v2213
      %v2381 = vsel %vm678, %v430, %v2215
      %v2382 = vsel %vm678, %v431, %v2217
      %v2383 = vsel %vm678, %v432, %v2219
      %v2384 = vsel %vm678, %v433, %v2221
      %v2385 = vsel %vm678, %v434, %v2223
      %v2386 = vsel %vm678, %v435, %v2225
      %v2387 = vsel %vm678, %v436, %v2227
      %v2388 = vsel %vm695, %v2372, %v2261
      %v2389 = vsel %vm695, %v2373, %v2263
      %v2390 = vsel %vm695, %v2374, %v2265
      %v2391 = vsel %vm695, %v2375, %v2267
      %v2392 = vsel %vm695, %v2376, %v2269
      %v2393 = vsel %vm695, %v2377, %v2271
      %v2394 = vsel %vm695, %v2378, %v2273
      %v2395 = vsel %vm695, %v2379, %v2275
      %v2396 = vsel %vm695, %v2380, %v2277
      %v2397 = vsel %vm695, %v2381, %v2279
      %v2398 = vsel %vm695, %v2382, %v2281
      %v2399 = vsel %vm695, %v2383, %v2283
      %v2400 = vsel %vm695, %v2384, %v2285
      %v2401 = vsel %vm695, %v2385, %v2287
      %v2402 = vsel %vm695, %v2386, %v2289
      %v2403 = vsel %vm695, %v2387, %v2291
      %v2404 = vsel %vm712, %v2388, %v2325
      %v2405 = vsel %vm712, %v2389, %v2327
      %v2406 = vsel %vm712, %v2390, %v2329
      %v2407 = vsel %vm712, %v2391, %v2331
      %v2408 = vsel %vm712, %v2392, %v2333
      %v2409 = vsel %vm712, %v2393, %v2335
      %v2410 = vsel %vm712, %v2394, %v2337
      %v2411 = vsel %vm712, %v2395, %v2339
      %v2412 = vsel %vm712, %v2396, %v2341
      %v2413 = vsel %vm712, %v2397, %v2343
      %v2414 = vsel %vm712, %v2398, %v2345
      %v2415 = vsel %vm712, %v2399, %v2347
      %v2416 = vsel %vm712, %v2400, %v2349
      %v2417 = vsel %vm712, %v2401, %v2351
      %v2418 = vsel %vm712, %v2402, %v2353
      %v2419 = vsel %vm712, %v2403, %v2355
      %v2420 = vpack.c.bf16 %v2405, %v2404
      %v2421 = vpack.c.bf16 %v2407, %v2406
      %v2422 = vpack.c.bf16 %v2409, %v2408
      %v2423 = vpack.c.bf16 %v2411, %v2410
      %v2424 = vpack.c.bf16 %v2413, %v2412
      %v2425 = vpack.c.bf16 %v2415, %v2414
      %v2426 = vpack.c.bf16 %v2417, %v2416
      %v2427 = vpack.c.bf16 %v2419, %v2418
      %2428 = vrot.lane.b32.xlu0 %v470, 16
      %v2429 = vpop.permute.xlu0 %2428
      %2430 = vrot.lane.b32.xlu0 %v471, 16
      %v2431 = vpop.permute.xlu0 %2430
      %2432 = vrot.lane.b32.xlu0 %v472, 16
      %v2433 = vpop.permute.xlu0 %2432
      %2434 = vrot.lane.b32.xlu0 %v473, 16
      %v2435 = vpop.permute.xlu0 %2434
      %2436 = vrot.lane.b32.xlu0 %v474, 16
      %v2437 = vpop.permute.xlu0 %2436
      %2438 = vrot.lane.b32.xlu0 %v475, 16
      %v2439 = vpop.permute.xlu0 %2438
      %2440 = vrot.lane.b32.xlu0 %v476, 16
      %v2441 = vpop.permute.xlu0 %2440
      %2442 = vrot.lane.b32.xlu0 %v477, 16
      %v2443 = vpop.permute.xlu0 %2442
      %2444 = vrot.lane.b32.xlu0 %v478, 16
      %v2445 = vpop.permute.xlu0 %2444
      %2446 = vrot.lane.b32.xlu0 %v479, 16
      %v2447 = vpop.permute.xlu0 %2446
      %2448 = vrot.lane.b32.xlu0 %v480, 16
      %v2449 = vpop.permute.xlu0 %2448
      %2450 = vrot.lane.b32.xlu0 %v481, 16
      %v2451 = vpop.permute.xlu0 %2450
      %2452 = vrot.lane.b32.xlu0 %v482, 16
      %v2453 = vpop.permute.xlu0 %2452
      %2454 = vrot.lane.b32.xlu0 %v483, 16
      %v2455 = vpop.permute.xlu0 %2454
      %2456 = vrot.lane.b32.xlu0 %v484, 16
      %v2457 = vpop.permute.xlu0 %2456
      %2458 = vrot.lane.b32.xlu0 %v485, 16
      %v2459 = vpop.permute.xlu0 %2458
      %2492 = vrot.lane.b32.xlu0 %v2148, 32
      %v2493 = vpop.permute.xlu0 %2492
      %2494 = vrot.lane.b32.xlu0 %v2149, 32
      %v2495 = vpop.permute.xlu0 %2494
      %2496 = vrot.lane.b32.xlu0 %v2150, 32
      %v2497 = vpop.permute.xlu0 %2496
      %2498 = vrot.lane.b32.xlu0 %v2151, 32
      %v2499 = vpop.permute.xlu0 %2498
      %2500 = vrot.lane.b32.xlu0 %v2152, 32
      %v2501 = vpop.permute.xlu0 %2500
      %2502 = vrot.lane.b32.xlu0 %v2153, 32
      %v2503 = vpop.permute.xlu0 %2502
      %2504 = vrot.lane.b32.xlu0 %v2154, 32
      %v2505 = vpop.permute.xlu0 %2504
      %2506 = vrot.lane.b32.xlu0 %v2155, 32
      %v2507 = vpop.permute.xlu0 %2506
      %2508 = vrot.lane.b32.xlu0 %v2156, 32
      %v2509 = vpop.permute.xlu0 %2508
      %2510 = vrot.lane.b32.xlu0 %v2157, 32
      %v2511 = vpop.permute.xlu0 %2510
      %2512 = vrot.lane.b32.xlu0 %v2158, 32
      %v2513 = vpop.permute.xlu0 %2512
      %2514 = vrot.lane.b32.xlu0 %v2159, 32
      %v2515 = vpop.permute.xlu0 %2514
      %2516 = vrot.lane.b32.xlu0 %v2160, 32
      %v2517 = vpop.permute.xlu0 %2516
      %2518 = vrot.lane.b32.xlu0 %v2161, 32
      %v2519 = vpop.permute.xlu0 %2518
      %2520 = vrot.lane.b32.xlu0 %v2162, 32
      %v2521 = vpop.permute.xlu0 %2520
      %2522 = vrot.lane.b32.xlu0 %v2163, 32
      %v2523 = vpop.permute.xlu0 %2522
      %2556 = vrot.lane.b32.xlu0 %v2180, 48
      %v2557 = vpop.permute.xlu0 %2556
      %2558 = vrot.lane.b32.xlu0 %v2181, 48
      %v2559 = vpop.permute.xlu0 %2558
      %2560 = vrot.lane.b32.xlu0 %v2182, 48
      %v2561 = vpop.permute.xlu0 %2560
      %2562 = vrot.lane.b32.xlu0 %v2183, 48
      %v2563 = vpop.permute.xlu0 %2562
      %2564 = vrot.lane.b32.xlu0 %v2184, 48
      %v2565 = vpop.permute.xlu0 %2564
      %2566 = vrot.lane.b32.xlu0 %v2185, 48
      %v2567 = vpop.permute.xlu0 %2566
      %2568 = vrot.lane.b32.xlu0 %v2186, 48
      %v2569 = vpop.permute.xlu0 %2568
      %2570 = vrot.lane.b32.xlu0 %v2187, 48
      %v2571 = vpop.permute.xlu0 %2570
      %2572 = vrot.lane.b32.xlu0 %v2188, 48
      %v2573 = vpop.permute.xlu0 %2572
      %2574 = vrot.lane.b32.xlu0 %v2189, 48
      %v2575 = vpop.permute.xlu0 %2574
      %2576 = vrot.lane.b32.xlu0 %v2190, 48
      %v2577 = vpop.permute.xlu0 %2576
      %2578 = vrot.lane.b32.xlu0 %v2191, 48
      %v2579 = vpop.permute.xlu0 %2578
      %2580 = vrot.lane.b32.xlu0 %v2192, 48
      %v2581 = vpop.permute.xlu0 %2580
      %2582 = vrot.lane.b32.xlu0 %v2193, 48
      %v2583 = vpop.permute.xlu0 %2582
      %2584 = vrot.lane.b32.xlu0 %v2194, 48
      %v2585 = vpop.permute.xlu0 %2584
      %2586 = vrot.lane.b32.xlu0 %v2195, 48
      %v2587 = vpop.permute.xlu0 %2586
      %v2604 = vsel %vm678, %v438, %v2429
      %v2605 = vsel %vm678, %v439, %v2431
      %v2606 = vsel %vm678, %v440, %v2433
      %v2607 = vsel %vm678, %v441, %v2435
      %v2608 = vsel %vm678, %v442, %v2437
      %v2609 = vsel %vm678, %v443, %v2439
      %v2610 = vsel %vm678, %v444, %v2441
      %v2611 = vsel %vm678, %v445, %v2443
      %v2612 = vsel %vm678, %v446, %v2445
      %v2613 = vsel %vm678, %v447, %v2447
      %v2614 = vsel %vm678, %v448, %v2449
      %v2615 = vsel %vm678, %v449, %v2451
      %v2616 = vsel %vm678, %v450, %v2453
      %v2617 = vsel %vm678, %v451, %v2455
      %v2618 = vsel %vm678, %v452, %v2457
      %v2619 = vsel %vm678, %v453, %v2459
      %v2620 = vsel %vm695, %v2604, %v2493
      %v2621 = vsel %vm695, %v2605, %v2495
      %v2622 = vsel %vm695, %v2606, %v2497
      %v2623 = vsel %vm695, %v2607, %v2499
      %v2624 = vsel %vm695, %v2608, %v2501
      %v2625 = vsel %vm695, %v2609, %v2503
      %v2626 = vsel %vm695, %v2610, %v2505
      %v2627 = vsel %vm695, %v2611, %v2507
      %v2628 = vsel %vm695, %v2612, %v2509
      %v2629 = vsel %vm695, %v2613, %v2511
      %v2630 = vsel %vm695, %v2614, %v2513
      %v2631 = vsel %vm695, %v2615, %v2515
      %v2632 = vsel %vm695, %v2616, %v2517
      %v2633 = vsel %vm695, %v2617, %v2519
      %v2634 = vsel %vm695, %v2618, %v2521
      %v2635 = vsel %vm695, %v2619, %v2523
      %v2636 = vsel %vm712, %v2620, %v2557
      %v2637 = vsel %vm712, %v2621, %v2559
      %v2638 = vsel %vm712, %v2622, %v2561
      %v2639 = vsel %vm712, %v2623, %v2563
      %v2640 = vsel %vm712, %v2624, %v2565
      %v2641 = vsel %vm712, %v2625, %v2567
      %v2642 = vsel %vm712, %v2626, %v2569
      %v2643 = vsel %vm712, %v2627, %v2571
      %v2644 = vsel %vm712, %v2628, %v2573
      %v2645 = vsel %vm712, %v2629, %v2575
      %v2646 = vsel %vm712, %v2630, %v2577
      %v2647 = vsel %vm712, %v2631, %v2579
      %v2648 = vsel %vm712, %v2632, %v2581
      %v2649 = vsel %vm712, %v2633, %v2583
      %v2650 = vsel %vm712, %v2634, %v2585
      %v2651 = vsel %vm712, %v2635, %v2587
      %v2652 = vpack.c.bf16 %v2637, %v2636
      %v2653 = vpack.c.bf16 %v2639, %v2638
      %v2654 = vpack.c.bf16 %v2641, %v2640
      %v2655 = vpack.c.bf16 %v2643, %v2642
      %v2656 = vpack.c.bf16 %v2645, %v2644
      %v2657 = vpack.c.bf16 %v2647, %v2646
      %v2658 = vpack.c.bf16 %v2649, %v2648
      %v2659 = vpack.c.bf16 %v2651, %v2650
      %s2660 = scalar_lea.vmem %s1, 64
      %v2661 = vld [vmem:[%s2660] sm:$0xf]
      %v2662 = vld [vmem:[%s2660 + $0x4] sm:$0xf]
      %v2663 = vld [vmem:[%s2660 + $0x8] sm:$0xf]
      %v2664 = vld [vmem:[%s2660 + $0xc] sm:$0xf]
      %v2665 = vld [vmem:[%s2660 + $0x10] sm:$0xf]
      %v2666 = vld [vmem:[%s2660 + $0x14] sm:$0xf]
      %v2667 = vld [vmem:[%s2660 + $0x18] sm:$0xf]
      %v2668 = vld [vmem:[%s2660 + $0x1c] sm:$0xf]
      %v2677 = vunpack.c.l.b16 %v2661
      %v2678 = vunpack.c.l.b16 %v2662
      %v2679 = vunpack.c.l.b16 %v2663
      %v2680 = vunpack.c.l.b16 %v2664
      %v2681 = vunpack.c.l.b16 %v2665
      %v2682 = vunpack.c.l.b16 %v2666
      %v2683 = vunpack.c.l.b16 %v2667
      %v2684 = vunpack.c.l.b16 %v2668
      %v2685 = vpack.c.b16 %v2678, %v2677
      %v2686 = vpack.c.b16 %v2680, %v2679
      %v2687 = vpack.c.b16 %v2682, %v2681
      %v2688 = vpack.c.b16 %v2684, %v2683
      %v2694 = vsel %vm1017, %v2420, 0
      %v2697 = vsel %vm1017, %v2421, 0
      %v2700 = vsel %vm1017, %v2422, 0
      %v2703 = vsel %vm1017, %v2423, 0
      %v2706 = vsel %vm1017, %v2424, 0
      %v2709 = vsel %vm1017, %v2425, 0
      %v2712 = vsel %vm1017, %v2426, 0
      %v2715 = vsel %vm1017, %v2427, 0
      %2717 = vmatprep.subr.bf16.mxu0 0
      %2718 = vmatpush1.bf16.msra.mxu0 %v2685
      %2719 = vmatprep.subr.bf16.mxu0 0
      %2720 = vmatpush1.bf16.msra.mxu0 %v2686
      %2721 = vmatprep.subr.bf16.mxu0 0
      %2722 = vmatpush1.bf16.msra.mxu0 %v2687
      %2723 = vmatprep.subr.bf16.mxu0 0
      %2724 = vmatpush1.bf16.msra.mxu0 %v2688
      %2725 = vmatprep.subr.bf16.mxu0 0
      %2726 = vmatpush1.bf16.msra.mxu0 0
      %2727 = vmatprep.subr.bf16.mxu0 0
      %2728 = vmatpush1.bf16.msra.mxu0 0
      %2729 = vmatprep.subr.bf16.mxu0 0
      %2730 = vmatpush1.bf16.msra.mxu0 0
      %2731 = vmatprep.subr.bf16.mxu0 0
      %2732 = vmatpush1.bf16.msra.mxu0 0
      %2733 = vmatprep.subr.bf16.mxu0 0
      %2734 = vmatpush1.bf16.msra.mxu0 0
      %2735 = vmatprep.subr.bf16.mxu0 0
      %2736 = vmatpush1.bf16.msra.mxu0 0
      %2737 = vmatprep.subr.bf16.mxu0 0
      %2738 = vmatpush1.bf16.msra.mxu0 0
      %2739 = vmatprep.subr.bf16.mxu0 0
      %2740 = vmatpush1.bf16.msra.mxu0 0
      %2741 = vmatprep.subr.bf16.mxu0 0
      %2742 = vmatpush1.bf16.msra.mxu0 0
      %2743 = vmatprep.subr.bf16.mxu0 0
      %2744 = vmatpush1.bf16.msra.mxu0 0
      %2745 = vmatprep.subr.bf16.mxu0 0
      %2746 = vmatpush1.bf16.msra.mxu0 0
      %2747 = vmatprep.subr.bf16.mxu0 0
      %2748 = vmatpush1.bf16.msra.mxu0 0
      %2749 = vmatprep.mubr.bf16.mxu0 0
      %2750 = vmatmul.mubr.bf16.gmra.mrb[0].mxu0 %v2694
      %v2751 = vpop.f32.mrb[0].mxu0
      %v2752 = vadd.f32 0.0, %v2751
      %v2753 = vpop.f32.mrb[0].mxu0
      %v2754 = vpop.f32.mrb[0].mxu0
      %v2755 = vadd.f32 0.0, %v2754
      %v2756 = vpop.f32.mrb[0].mxu0
      %2757 = vmatprep.mubr.bf16.mxu0 0
      %2758 = vmatmul.mubr.bf16.gmra.mrb[0].mxu0 %v2697
      %v2759 = vpop.f32.mrb[0].mxu0
      %v2760 = vadd.f32 0.0, %v2759
      %v2761 = vpop.f32.mrb[0].mxu0
      %v2762 = vpop.f32.mrb[0].mxu0
      %v2763 = vadd.f32 0.0, %v2762
      %v2764 = vpop.f32.mrb[0].mxu0
      %2765 = vmatprep.mubr.bf16.mxu0 0
      %2766 = vmatmul.mubr.bf16.gmra.mrb[0].mxu0 %v2700
      %v2767 = vpop.f32.mrb[0].mxu0
      %v2768 = vadd.f32 0.0, %v2767
      %v2769 = vpop.f32.mrb[0].mxu0
      %v2770 = vpop.f32.mrb[0].mxu0
      %v2771 = vadd.f32 0.0, %v2770
      %v2772 = vpop.f32.mrb[0].mxu0
      %2773 = vmatprep.mubr.bf16.mxu0 0
      %2774 = vmatmul.mubr.bf16.gmra.mrb[0].mxu0 %v2703
      %v2775 = vpop.f32.mrb[0].mxu0
      %v2776 = vadd.f32 0.0, %v2775
      %v2777 = vpop.f32.mrb[0].mxu0
      %v2778 = vpop.f32.mrb[0].mxu0
      %v2779 = vadd.f32 0.0, %v2778
      %v2780 = vpop.f32.mrb[0].mxu0
      %2781 = vmatprep.mubr.bf16.mxu0 0
      %2782 = vmatmul.mubr.bf16.gmra.mrb[0].mxu0 %v2706
      %v2783 = vpop.f32.mrb[0].mxu0
      %v2784 = vadd.f32 0.0, %v2783
      %v2785 = vpop.f32.mrb[0].mxu0
      %v2786 = vpop.f32.mrb[0].mxu0
      %v2787 = vadd.f32 0.0, %v2786
      %v2788 = vpop.f32.mrb[0].mxu0
      %2789 = vmatprep.mubr.bf16.mxu0 0
      %2790 = vmatmul.mubr.bf16.gmra.mrb[0].mxu0 %v2709
      %v2791 = vpop.f32.mrb[0].mxu0
      %v2792 = vadd.f32 0.0, %v2791
      %v2793 = vpop.f32.mrb[0].mxu0
      %v2794 = vpop.f32.mrb[0].mxu0
      %v2795 = vadd.f32 0.0, %v2794
      %v2796 = vpop.f32.mrb[0].mxu0
      %2797 = vmatprep.mubr.bf16.mxu0 0
      %2798 = vmatmul.mubr.bf16.gmra.mrb[0].mxu0 %v2712
      %v2799 = vpop.f32.mrb[0].mxu0
      %v2800 = vadd.f32 0.0, %v2799
      %v2801 = vpop.f32.mrb[0].mxu0
      %v2802 = vpop.f32.mrb[0].mxu0
      %v2803 = vadd.f32 0.0, %v2802
      %v2804 = vpop.f32.mrb[0].mxu0
      %2805 = vmatprep.mubr.bf16.mxu0 0
      %2806 = vmatmul.mubr.bf16.gmra.mrb[0].mxu0 %v2715
      %v2807 = vpop.f32.mrb[0].mxu0
      %v2808 = vadd.f32 0.0, %v2807
      %v2809 = vpop.f32.mrb[0].mxu0
      %v2810 = vpop.f32.mrb[0].mxu0
      %v2811 = vadd.f32 0.0, %v2810
      %v2812 = vpop.f32.mrb[0].mxu0
      %2813 = vdwg.mxu0
      %s2814 = scalar_lea.vmem %s2, 64
      %v2815 = vld [vmem:[%s2814] sm:$0xf]
      %v2816 = vld [vmem:[%s2814 + $0x4] sm:$0xf]
      %v2817 = vld [vmem:[%s2814 + $0x8] sm:$0xf]
      %v2818 = vld [vmem:[%s2814 + $0xc] sm:$0xf]
      %v2819 = vld [vmem:[%s2814 + $0x10] sm:$0xf]
      %v2820 = vld [vmem:[%s2814 + $0x14] sm:$0xf]
      %v2821 = vld [vmem:[%s2814 + $0x18] sm:$0xf]
      %v2822 = vld [vmem:[%s2814 + $0x1c] sm:$0xf]
      %v2831 = vunpack.c.l.b16 %v2815
      %v2832 = vunpack.c.l.b16 %v2816
      %v2833 = vunpack.c.l.b16 %v2817
      %v2834 = vunpack.c.l.b16 %v2818
      %v2835 = vunpack.c.l.b16 %v2819
      %v2836 = vunpack.c.l.b16 %v2820
      %v2837 = vunpack.c.l.b16 %v2821
      %v2838 = vunpack.c.l.b16 %v2822
      %v2839 = vpack.c.b16 %v2832, %v2831
      %v2840 = vpack.c.b16 %v2834, %v2833
      %v2841 = vpack.c.b16 %v2836, %v2835
      %v2842 = vpack.c.b16 %v2838, %v2837
      %v2848 = vsel %vm1017, %v2652, 0
      %v2851 = vsel %vm1017, %v2653, 0
      %v2854 = vsel %vm1017, %v2654, 0
      %v2857 = vsel %vm1017, %v2655, 0
      %v2860 = vsel %vm1017, %v2656, 0
      %v2863 = vsel %vm1017, %v2657, 0
      %v2866 = vsel %vm1017, %v2658, 0
      %v2869 = vsel %vm1017, %v2659, 0
      %2871 = vmatprep.subr.bf16.mxu0 0
      %2872 = vmatpush1.bf16.msra.mxu0 %v2839
      %2873 = vmatprep.subr.bf16.mxu0 0
      %2874 = vmatpush1.bf16.msra.mxu0 %v2840
      %2875 = vmatprep.subr.bf16.mxu0 0
      %2876 = vmatpush1.bf16.msra.mxu0 %v2841
      %2877 = vmatprep.subr.bf16.mxu0 0
      %2878 = vmatpush1.bf16.msra.mxu0 %v2842
      %2879 = vmatprep.subr.bf16.mxu0 0
      %2880 = vmatpush1.bf16.msra.mxu0 0
      %2881 = vmatprep.subr.bf16.mxu0 0
      %2882 = vmatpush1.bf16.msra.mxu0 0
      %2883 = vmatprep.subr.bf16.mxu0 0
      %2884 = vmatpush1.bf16.msra.mxu0 0
      %2885 = vmatprep.subr.bf16.mxu0 0
      %2886 = vmatpush1.bf16.msra.mxu0 0
      %2887 = vmatprep.subr.bf16.mxu0 0
      %2888 = vmatpush1.bf16.msra.mxu0 0
      %2889 = vmatprep.subr.bf16.mxu0 0
      %2890 = vmatpush1.bf16.msra.mxu0 0
      %2891 = vmatprep.subr.bf16.mxu0 0
      %2892 = vmatpush1.bf16.msra.mxu0 0
      %2893 = vmatprep.subr.bf16.mxu0 0
      %2894 = vmatpush1.bf16.msra.mxu0 0
      %2895 = vmatprep.subr.bf16.mxu0 0
      %2896 = vmatpush1.bf16.msra.mxu0 0
      %2897 = vmatprep.subr.bf16.mxu0 0
      %2898 = vmatpush1.bf16.msra.mxu0 0
      %2899 = vmatprep.subr.bf16.mxu0 0
      %2900 = vmatpush1.bf16.msra.mxu0 0
      %2901 = vmatprep.subr.bf16.mxu0 0
      %2902 = vmatpush1.bf16.msra.mxu0 0
      %2903 = vmatprep.mubr.bf16.mxu0 0
      %2904 = vmatmul.mubr.bf16.gmra.mrb[0].mxu0 %v2848
      %v2905 = vpop.f32.mrb[0].mxu0
      %v2906 = vadd.f32 0.0, %v2905
      %v2907 = vpop.f32.mrb[0].mxu0
      %v2908 = vpop.f32.mrb[0].mxu0
      %v2909 = vadd.f32 0.0, %v2908
      %v2910 = vpop.f32.mrb[0].mxu0
      %2911 = vmatprep.mubr.bf16.mxu0 0
      %2912 = vmatmul.mubr.bf16.gmra.mrb[0].mxu0 %v2851
      %v2913 = vpop.f32.mrb[0].mxu0
      %v2914 = vadd.f32 0.0, %v2913
      %v2915 = vpop.f32.mrb[0].mxu0
      %v2916 = vpop.f32.mrb[0].mxu0
      %v2917 = vadd.f32 0.0, %v2916
      %v2918 = vpop.f32.mrb[0].mxu0
      %2919 = vmatprep.mubr.bf16.mxu0 0
      %2920 = vmatmul.mubr.bf16.gmra.mrb[0].mxu0 %v2854
      %v2921 = vpop.f32.mrb[0].mxu0
      %v2922 = vadd.f32 0.0, %v2921
      %v2923 = vpop.f32.mrb[0].mxu0
      %v2924 = vpop.f32.mrb[0].mxu0
      %v2925 = vadd.f32 0.0, %v2924
      %v2926 = vpop.f32.mrb[0].mxu0
      %2927 = vmatprep.mubr.bf16.mxu0 0
      %2928 = vmatmul.mubr.bf16.gmra.mrb[0].mxu0 %v2857
      %v2929 = vpop.f32.mrb[0].mxu0
      %v2930 = vadd.f32 0.0, %v2929
      %v2931 = vpop.f32.mrb[0].mxu0
      %v2932 = vpop.f32.mrb[0].mxu0
      %v2933 = vadd.f32 0.0, %v2932
      %v2934 = vpop.f32.mrb[0].mxu0
      %2935 = vmatprep.mubr.bf16.mxu0 0
      %2936 = vmatmul.mubr.bf16.gmra.mrb[0].mxu0 %v2860
      %v2937 = vpop.f32.mrb[0].mxu0
      %v2938 = vadd.f32 0.0, %v2937
      %v2939 = vpop.f32.mrb[0].mxu0
      %v2940 = vpop.f32.mrb[0].mxu0
      %v2941 = vadd.f32 0.0, %v2940
      %v2942 = vpop.f32.mrb[0].mxu0
      %2943 = vmatprep.mubr.bf16.mxu0 0
      %2944 = vmatmul.mubr.bf16.gmra.mrb[0].mxu0 %v2863
      %v2945 = vpop.f32.mrb[0].mxu0
      %v2946 = vadd.f32 0.0, %v2945
      %v2947 = vpop.f32.mrb[0].mxu0
      %v2948 = vpop.f32.mrb[0].mxu0
      %v2949 = vadd.f32 0.0, %v2948
      %v2950 = vpop.f32.mrb[0].mxu0
      %2951 = vmatprep.mubr.bf16.mxu0 0
      %2952 = vmatmul.mubr.bf16.gmra.mrb[0].mxu0 %v2866
      %v2953 = vpop.f32.mrb[0].mxu0
      %v2954 = vadd.f32 0.0, %v2953
      %v2955 = vpop.f32.mrb[0].mxu0
      %v2956 = vpop.f32.mrb[0].mxu0
      %v2957 = vadd.f32 0.0, %v2956
      %v2958 = vpop.f32.mrb[0].mxu0
      %2959 = vmatprep.mubr.bf16.mxu0 0
      %2960 = vmatmul.mubr.bf16.gmra.mrb[0].mxu0 %v2869
      %v2961 = vpop.f32.mrb[0].mxu0
      %v2962 = vadd.f32 0.0, %v2961
      %v2963 = vpop.f32.mrb[0].mxu0
      %v2964 = vpop.f32.mrb[0].mxu0
      %v2965 = vadd.f32 0.0, %v2964
      %v2966 = vpop.f32.mrb[0].mxu0
      %2967 = vdwg.mxu0
      %v2968 = vld [vmem:[%s2130 + $0x2] sm:$0xff]
      %v2969 = vld [vmem:[%s2130 + $0xa] sm:$0xff]
      %v2970 = vld [vmem:[%s2130 + $0x1a] sm:$0xff]
      %v2971 = vld [vmem:[%s2130 + $0x22] sm:$0xff]
      %v2972 = vld [vmem:[%s2130 + $0x32] sm:$0xff]
      %v2973 = vld [vmem:[%s2130 + $0x3a] sm:$0xff]
      %v2974 = vld [vmem:[%s2130 + $0x4a] sm:$0xff]
      %v2975 = vld [vmem:[%s2130 + $0x52] sm:$0xff]
      %v2976 = vld [vmem:[%s2130 + $0x62] sm:$0xff]
      %v2977 = vld [vmem:[%s2130 + $0x6a] sm:$0xff]
      %v2978 = vld [vmem:[%s2130 + $0x7a] sm:$0xff]
      %v2979 = vld [vmem:[%s2130 + $0x82] sm:$0xff]
      %v2980 = vld [vmem:[%s2130 + $0x92] sm:$0xff]
      %v2981 = vld [vmem:[%s2130 + $0x9a] sm:$0xff]
      %v2982 = vld [vmem:[%s2130 + $0xaa] sm:$0xff]
      %v2983 = vld [vmem:[%s2130 + $0xb2] sm:$0xff]
      %v2984 = vld [vmem:[%s2147 + $0x2] sm:$0xff]
      %v2985 = vld [vmem:[%s2147 + $0xa] sm:$0xff]
      %v2986 = vld [vmem:[%s2147 + $0x1a] sm:$0xff]
      %v2987 = vld [vmem:[%s2147 + $0x22] sm:$0xff]
      %v2988 = vld [vmem:[%s2147 + $0x32] sm:$0xff]
      %v2989 = vld [vmem:[%s2147 + $0x3a] sm:$0xff]
      %v2990 = vld [vmem:[%s2147 + $0x4a] sm:$0xff]
      %v2991 = vld [vmem:[%s2147 + $0x52] sm:$0xff]
      %v2992 = vld [vmem:[%s2147 + $0x62] sm:$0xff]
      %v2993 = vld [vmem:[%s2147 + $0x6a] sm:$0xff]
      %v2994 = vld [vmem:[%s2147 + $0x7a] sm:$0xff]
      %v2995 = vld [vmem:[%s2147 + $0x82] sm:$0xff]
      %v2996 = vld [vmem:[%s2147 + $0x92] sm:$0xff]
      %v2997 = vld [vmem:[%s2147 + $0x9a] sm:$0xff]
      %v2998 = vld [vmem:[%s2147 + $0xaa] sm:$0xff]
      %v2999 = vld [vmem:[%s2147 + $0xb2] sm:$0xff]
      %3000 = vrot.lane.b32.xlu0 %v1324, 16
      %v3001 = vpop.permute.xlu0 %3000
      %3002 = vrot.lane.b32.xlu0 %v1325, 16
      %v3003 = vpop.permute.xlu0 %3002
      %3004 = vrot.lane.b32.xlu0 %v1326, 16
      %v3005 = vpop.permute.xlu0 %3004
      %3006 = vrot.lane.b32.xlu0 %v1327, 16
      %v3007 = vpop.permute.xlu0 %3006
      %3008 = vrot.lane.b32.xlu0 %v1328, 16
      %v3009 = vpop.permute.xlu0 %3008
      %3010 = vrot.lane.b32.xlu0 %v1329, 16
      %v3011 = vpop.permute.xlu0 %3010
      %3012 = vrot.lane.b32.xlu0 %v1330, 16
      %v3013 = vpop.permute.xlu0 %3012
      %3014 = vrot.lane.b32.xlu0 %v1331, 16
      %v3015 = vpop.permute.xlu0 %3014
      %3016 = vrot.lane.b32.xlu0 %v1332, 16
      %v3017 = vpop.permute.xlu0 %3016
      %3018 = vrot.lane.b32.xlu0 %v1333, 16
      %v3019 = vpop.permute.xlu0 %3018
      %3020 = vrot.lane.b32.xlu0 %v1334, 16
      %v3021 = vpop.permute.xlu0 %3020
      %3022 = vrot.lane.b32.xlu0 %v1335, 16
      %v3023 = vpop.permute.xlu0 %3022
      %3024 = vrot.lane.b32.xlu0 %v1336, 16
      %v3025 = vpop.permute.xlu0 %3024
      %3026 = vrot.lane.b32.xlu0 %v1337, 16
      %v3027 = vpop.permute.xlu0 %3026
      %3028 = vrot.lane.b32.xlu0 %v1338, 16
      %v3029 = vpop.permute.xlu0 %3028
      %3030 = vrot.lane.b32.xlu0 %v1339, 16
      %v3031 = vpop.permute.xlu0 %3030
      %3048 = vrot.lane.b32.xlu0 %v2164, 32
      %v3049 = vpop.permute.xlu0 %3048
      %3050 = vrot.lane.b32.xlu0 %v2165, 32
      %v3051 = vpop.permute.xlu0 %3050
      %3052 = vrot.lane.b32.xlu0 %v2166, 32
      %v3053 = vpop.permute.xlu0 %3052
      %3054 = vrot.lane.b32.xlu0 %v2167, 32
      %v3055 = vpop.permute.xlu0 %3054
      %3056 = vrot.lane.b32.xlu0 %v2168, 32
      %v3057 = vpop.permute.xlu0 %3056
      %3058 = vrot.lane.b32.xlu0 %v2169, 32
      %v3059 = vpop.permute.xlu0 %3058
      %3060 = vrot.lane.b32.xlu0 %v2170, 32
      %v3061 = vpop.permute.xlu0 %3060
      %3062 = vrot.lane.b32.xlu0 %v2171, 32
      %v3063 = vpop.permute.xlu0 %3062
      %3064 = vrot.lane.b32.xlu0 %v2172, 32
      %v3065 = vpop.permute.xlu0 %3064
      %3066 = vrot.lane.b32.xlu0 %v2173, 32
      %v3067 = vpop.permute.xlu0 %3066
      %3068 = vrot.lane.b32.xlu0 %v2174, 32
      %v3069 = vpop.permute.xlu0 %3068
      %3070 = vrot.lane.b32.xlu0 %v2175, 32
      %v3071 = vpop.permute.xlu0 %3070
      %3072 = vrot.lane.b32.xlu0 %v2176, 32
      %v3073 = vpop.permute.xlu0 %3072
      %3074 = vrot.lane.b32.xlu0 %v2177, 32
      %v3075 = vpop.permute.xlu0 %3074
      %3076 = vrot.lane.b32.xlu0 %v2178, 32
      %v3077 = vpop.permute.xlu0 %3076
      %3078 = vrot.lane.b32.xlu0 %v2179, 32
      %v3079 = vpop.permute.xlu0 %3078
      %3112 = vrot.lane.b32.xlu0 %v2968, 48
      %v3113 = vpop.permute.xlu0 %3112
      %3114 = vrot.lane.b32.xlu0 %v2969, 48
      %v3115 = vpop.permute.xlu0 %3114
      %3116 = vrot.lane.b32.xlu0 %v2970, 48
      %v3117 = vpop.permute.xlu0 %3116
      %3118 = vrot.lane.b32.xlu0 %v2971, 48
      %v3119 = vpop.permute.xlu0 %3118
      %3120 = vrot.lane.b32.xlu0 %v2972, 48
      %v3121 = vpop.permute.xlu0 %3120
      %3122 = vrot.lane.b32.xlu0 %v2973, 48
      %v3123 = vpop.permute.xlu0 %3122
      %3124 = vrot.lane.b32.xlu0 %v2974, 48
      %v3125 = vpop.permute.xlu0 %3124
      %3126 = vrot.lane.b32.xlu0 %v2975, 48
      %v3127 = vpop.permute.xlu0 %3126
      %3128 = vrot.lane.b32.xlu0 %v2976, 48
      %v3129 = vpop.permute.xlu0 %3128
      %3130 = vrot.lane.b32.xlu0 %v2977, 48
      %v3131 = vpop.permute.xlu0 %3130
      %3132 = vrot.lane.b32.xlu0 %v2978, 48
      %v3133 = vpop.permute.xlu0 %3132
      %3134 = vrot.lane.b32.xlu0 %v2979, 48
      %v3135 = vpop.permute.xlu0 %3134
      %3136 = vrot.lane.b32.xlu0 %v2980, 48
      %v3137 = vpop.permute.xlu0 %3136
      %3138 = vrot.lane.b32.xlu0 %v2981, 48
      %v3139 = vpop.permute.xlu0 %3138
      %3140 = vrot.lane.b32.xlu0 %v2982, 48
      %v3141 = vpop.permute.xlu0 %3140
      %3142 = vrot.lane.b32.xlu0 %v2983, 48
      %v3143 = vpop.permute.xlu0 %3142
      %v3160 = vsel %vm678, %v454, %v3001
      %v3161 = vsel %vm678, %v455, %v3003
      %v3162 = vsel %vm678, %v456, %v3005
      %v3163 = vsel %vm678, %v457, %v3007
      %v3164 = vsel %vm678, %v458, %v3009
      %v3165 = vsel %vm678, %v459, %v3011
      %v3166 = vsel %vm678, %v460, %v3013
      %v3167 = vsel %vm678, %v461, %v3015
      %v3168 = vsel %vm678, %v462, %v3017
      %v3169 = vsel %vm678, %v463, %v3019
      %v3170 = vsel %vm678, %v464, %v3021
      %v3171 = vsel %vm678, %v465, %v3023
      %v3172 = vsel %vm678, %v466, %v3025
      %v3173 = vsel %vm678, %v467, %v3027
      %v3174 = vsel %vm678, %v468, %v3029
      %v3175 = vsel %vm678, %v469, %v3031
      %v3176 = vsel %vm695, %v3160, %v3049
      %v3177 = vsel %vm695, %v3161, %v3051
      %v3178 = vsel %vm695, %v3162, %v3053
      %v3179 = vsel %vm695, %v3163, %v3055
      %v3180 = vsel %vm695, %v3164, %v3057
      %v3181 = vsel %vm695, %v3165, %v3059
      %v3182 = vsel %vm695, %v3166, %v3061
      %v3183 = vsel %vm695, %v3167, %v3063
      %v3184 = vsel %vm695, %v3168, %v3065
      %v3185 = vsel %vm695, %v3169, %v3067
      %v3186 = vsel %vm695, %v3170, %v3069
      %v3187 = vsel %vm695, %v3171, %v3071
      %v3188 = vsel %vm695, %v3172, %v3073
      %v3189 = vsel %vm695, %v3173, %v3075
      %v3190 = vsel %vm695, %v3174, %v3077
      %v3191 = vsel %vm695, %v3175, %v3079
      %v3192 = vsel %vm712, %v3176, %v3113
      %v3193 = vsel %vm712, %v3177, %v3115
      %v3194 = vsel %vm712, %v3178, %v3117
      %v3195 = vsel %vm712, %v3179, %v3119
      %v3196 = vsel %vm712, %v3180, %v3121
      %v3197 = vsel %vm712, %v3181, %v3123
      %v3198 = vsel %vm712, %v3182, %v3125
      %v3199 = vsel %vm712, %v3183, %v3127
      %v3200 = vsel %vm712, %v3184, %v3129
      %v3201 = vsel %vm712, %v3185, %v3131
      %v3202 = vsel %vm712, %v3186, %v3133
      %v3203 = vsel %vm712, %v3187, %v3135
      %v3204 = vsel %vm712, %v3188, %v3137
      %v3205 = vsel %vm712, %v3189, %v3139
      %v3206 = vsel %vm712, %v3190, %v3141
      %v3207 = vsel %vm712, %v3191, %v3143
      %v3208 = vpack.c.bf16 %v3193, %v3192
      %v3209 = vpack.c.bf16 %v3195, %v3194
      %v3210 = vpack.c.bf16 %v3197, %v3196
      %v3211 = vpack.c.bf16 %v3199, %v3198
      %v3212 = vpack.c.bf16 %v3201, %v3200
      %v3213 = vpack.c.bf16 %v3203, %v3202
      %v3214 = vpack.c.bf16 %v3205, %v3204
      %v3215 = vpack.c.bf16 %v3207, %v3206
      %3216 = vrot.lane.b32.xlu0 %v1340, 16
      %v3217 = vpop.permute.xlu0 %3216
      %3218 = vrot.lane.b32.xlu0 %v1341, 16
      %v3219 = vpop.permute.xlu0 %3218
      %3220 = vrot.lane.b32.xlu0 %v1342, 16
      %v3221 = vpop.permute.xlu0 %3220
      %3222 = vrot.lane.b32.xlu0 %v1343, 16
      %v3223 = vpop.permute.xlu0 %3222
      %3224 = vrot.lane.b32.xlu0 %v1344, 16
      %v3225 = vpop.permute.xlu0 %3224
      %3226 = vrot.lane.b32.xlu0 %v1345, 16
      %v3227 = vpop.permute.xlu0 %3226
      %3228 = vrot.lane.b32.xlu0 %v1346, 16
      %v3229 = vpop.permute.xlu0 %3228
      %3230 = vrot.lane.b32.xlu0 %v1347, 16
      %v3231 = vpop.permute.xlu0 %3230
      %3232 = vrot.lane.b32.xlu0 %v1348, 16
      %v3233 = vpop.permute.xlu0 %3232
      %3234 = vrot.lane.b32.xlu0 %v1349, 16
      %v3235 = vpop.permute.xlu0 %3234
      %3236 = vrot.lane.b32.xlu0 %v1350, 16
      %v3237 = vpop.permute.xlu0 %3236
      %3238 = vrot.lane.b32.xlu0 %v1351, 16
      %v3239 = vpop.permute.xlu0 %3238
      %3240 = vrot.lane.b32.xlu0 %v1352, 16
      %v3241 = vpop.permute.xlu0 %3240
      %3242 = vrot.lane.b32.xlu0 %v1353, 16
      %v3243 = vpop.permute.xlu0 %3242
      %3244 = vrot.lane.b32.xlu0 %v1354, 16
      %v3245 = vpop.permute.xlu0 %3244
      %3246 = vrot.lane.b32.xlu0 %v1355, 16
      %v3247 = vpop.permute.xlu0 %3246
      %3264 = vrot.lane.b32.xlu0 %v2180, 32
      %v3265 = vpop.permute.xlu0 %3264
      %3266 = vrot.lane.b32.xlu0 %v2181, 32
      %v3267 = vpop.permute.xlu0 %3266
      %3268 = vrot.lane.b32.xlu0 %v2182, 32
      %v3269 = vpop.permute.xlu0 %3268
      %3270 = vrot.lane.b32.xlu0 %v2183, 32
      %v3271 = vpop.permute.xlu0 %3270
      %3272 = vrot.lane.b32.xlu0 %v2184, 32
      %v3273 = vpop.permute.xlu0 %3272
      %3274 = vrot.lane.b32.xlu0 %v2185, 32
      %v3275 = vpop.permute.xlu0 %3274
      %3276 = vrot.lane.b32.xlu0 %v2186, 32
      %v3277 = vpop.permute.xlu0 %3276
      %3278 = vrot.lane.b32.xlu0 %v2187, 32
      %v3279 = vpop.permute.xlu0 %3278
      %3280 = vrot.lane.b32.xlu0 %v2188, 32
      %v3281 = vpop.permute.xlu0 %3280
      %3282 = vrot.lane.b32.xlu0 %v2189, 32
      %v3283 = vpop.permute.xlu0 %3282
      %3284 = vrot.lane.b32.xlu0 %v2190, 32
      %v3285 = vpop.permute.xlu0 %3284
      %3286 = vrot.lane.b32.xlu0 %v2191, 32
      %v3287 = vpop.permute.xlu0 %3286
      %3288 = vrot.lane.b32.xlu0 %v2192, 32
      %v3289 = vpop.permute.xlu0 %3288
      %3290 = vrot.lane.b32.xlu0 %v2193, 32
      %v3291 = vpop.permute.xlu0 %3290
      %3292 = vrot.lane.b32.xlu0 %v2194, 32
      %v3293 = vpop.permute.xlu0 %3292
      %3294 = vrot.lane.b32.xlu0 %v2195, 32
      %v3295 = vpop.permute.xlu0 %3294
      %3328 = vrot.lane.b32.xlu0 %v2984, 48
      %v3329 = vpop.permute.xlu0 %3328
      %3330 = vrot.lane.b32.xlu0 %v2985, 48
      %v3331 = vpop.permute.xlu0 %3330
      %3332 = vrot.lane.b32.xlu0 %v2986, 48
      %v3333 = vpop.permute.xlu0 %3332
      %3334 = vrot.lane.b32.xlu0 %v2987, 48
      %v3335 = vpop.permute.xlu0 %3334
      %3336 = vrot.lane.b32.xlu0 %v2988, 48
      %v3337 = vpop.permute.xlu0 %3336
      %3338 = vrot.lane.b32.xlu0 %v2989, 48
      %v3339 = vpop.permute.xlu0 %3338
      %3340 = vrot.lane.b32.xlu0 %v2990, 48
      %v3341 = vpop.permute.xlu0 %3340
      %3342 = vrot.lane.b32.xlu0 %v2991, 48
      %v3343 = vpop.permute.xlu0 %3342
      %3344 = vrot.lane.b32.xlu0 %v2992, 48
      %v3345 = vpop.permute.xlu0 %3344
      %3346 = vrot.lane.b32.xlu0 %v2993, 48
      %v3347 = vpop.permute.xlu0 %3346
      %3348 = vrot.lane.b32.xlu0 %v2994, 48
      %v3349 = vpop.permute.xlu0 %3348
      %3350 = vrot.lane.b32.xlu0 %v2995, 48
      %v3351 = vpop.permute.xlu0 %3350
      %3352 = vrot.lane.b32.xlu0 %v2996, 48
      %v3353 = vpop.permute.xlu0 %3352
      %3354 = vrot.lane.b32.xlu0 %v2997, 48
      %v3355 = vpop.permute.xlu0 %3354
      %3356 = vrot.lane.b32.xlu0 %v2998, 48
      %v3357 = vpop.permute.xlu0 %3356
      %3358 = vrot.lane.b32.xlu0 %v2999, 48
      %v3359 = vpop.permute.xlu0 %3358
      %v3376 = vsel %vm678, %v470, %v3217
      %v3377 = vsel %vm678, %v471, %v3219
      %v3378 = vsel %vm678, %v472, %v3221
      %v3379 = vsel %vm678, %v473, %v3223
      %v3380 = vsel %vm678, %v474, %v3225
      %v3381 = vsel %vm678, %v475, %v3227
      %v3382 = vsel %vm678, %v476, %v3229
      %v3383 = vsel %vm678, %v477, %v3231
      %v3384 = vsel %vm678, %v478, %v3233
      %v3385 = vsel %vm678, %v479, %v3235
      %v3386 = vsel %vm678, %v480, %v3237
      %v3387 = vsel %vm678, %v481, %v3239
      %v3388 = vsel %vm678, %v482, %v3241
      %v3389 = vsel %vm678, %v483, %v3243
      %v3390 = vsel %vm678, %v484, %v3245
      %v3391 = vsel %vm678, %v485, %v3247
      %v3392 = vsel %vm695, %v3376, %v3265
      %v3393 = vsel %vm695, %v3377, %v3267
      %v3394 = vsel %vm695, %v3378, %v3269
      %v3395 = vsel %vm695, %v3379, %v3271
      %v3396 = vsel %vm695, %v3380, %v3273
      %v3397 = vsel %vm695, %v3381, %v3275
      %v3398 = vsel %vm695, %v3382, %v3277
      %v3399 = vsel %vm695, %v3383, %v3279
      %v3400 = vsel %vm695, %v3384, %v3281
      %v3401 = vsel %vm695, %v3385, %v3283
      %v3402 = vsel %vm695, %v3386, %v3285
      %v3403 = vsel %vm695, %v3387, %v3287
      %v3404 = vsel %vm695, %v3388, %v3289
      %v3405 = vsel %vm695, %v3389, %v3291
      %v3406 = vsel %vm695, %v3390, %v3293
      %v3407 = vsel %vm695, %v3391, %v3295
      %v3408 = vsel %vm712, %v3392, %v3329
      %v3409 = vsel %vm712, %v3393, %v3331
      %v3410 = vsel %vm712, %v3394, %v3333
      %v3411 = vsel %vm712, %v3395, %v3335
      %v3412 = vsel %vm712, %v3396, %v3337
      %v3413 = vsel %vm712, %v3397, %v3339
      %v3414 = vsel %vm712, %v3398, %v3341
      %v3415 = vsel %vm712, %v3399, %v3343
      %v3416 = vsel %vm712, %v3400, %v3345
      %v3417 = vsel %vm712, %v3401, %v3347
      %v3418 = vsel %vm712, %v3402, %v3349
      %v3419 = vsel %vm712, %v3403, %v3351
      %v3420 = vsel %vm712, %v3404, %v3353
      %v3421 = vsel %vm712, %v3405, %v3355
      %v3422 = vsel %vm712, %v3406, %v3357
      %v3423 = vsel %vm712, %v3407, %v3359
      %v3424 = vpack.c.bf16 %v3409, %v3408
      %v3425 = vpack.c.bf16 %v3411, %v3410
      %v3426 = vpack.c.bf16 %v3413, %v3412
      %v3427 = vpack.c.bf16 %v3415, %v3414
      %v3428 = vpack.c.bf16 %v3417, %v3416
      %v3429 = vpack.c.bf16 %v3419, %v3418
      %v3430 = vpack.c.bf16 %v3421, %v3420
      %v3431 = vpack.c.bf16 %v3423, %v3422
      %s3432 = scalar_lea.vmem %s1, 96
      %v3433 = vld [vmem:[%s3432] sm:$0xf]
      %v3434 = vld [vmem:[%s3432 + $0x4] sm:$0xf]
      %v3435 = vld [vmem:[%s3432 + $0x8] sm:$0xf]
      %v3436 = vld [vmem:[%s3432 + $0xc] sm:$0xf]
      %v3437 = vld [vmem:[%s3432 + $0x10] sm:$0xf]
      %v3438 = vld [vmem:[%s3432 + $0x14] sm:$0xf]
      %v3439 = vld [vmem:[%s3432 + $0x18] sm:$0xf]
      %v3440 = vld [vmem:[%s3432 + $0x1c] sm:$0xf]
      %v3449 = vunpack.c.l.b16 %v3433
      %v3450 = vunpack.c.l.b16 %v3434
      %v3451 = vunpack.c.l.b16 %v3435
      %v3452 = vunpack.c.l.b16 %v3436
      %v3453 = vunpack.c.l.b16 %v3437
      %v3454 = vunpack.c.l.b16 %v3438
      %v3455 = vunpack.c.l.b16 %v3439
      %v3456 = vunpack.c.l.b16 %v3440
      %v3457 = vpack.c.b16 %v3450, %v3449
      %v3458 = vpack.c.b16 %v3452, %v3451
      %v3459 = vpack.c.b16 %v3454, %v3453
      %v3460 = vpack.c.b16 %v3456, %v3455
      %v3466 = vsel %vm1017, %v3208, 0
      %v3469 = vsel %vm1017, %v3209, 0
      %v3472 = vsel %vm1017, %v3210, 0
      %v3475 = vsel %vm1017, %v3211, 0
      %v3478 = vsel %vm1017, %v3212, 0
      %v3481 = vsel %vm1017, %v3213, 0
      %v3484 = vsel %vm1017, %v3214, 0
      %v3487 = vsel %vm1017, %v3215, 0
      %3489 = vmatprep.subr.bf16.mxu0 0
      %3490 = vmatpush1.bf16.msra.mxu0 %v3457
      %3491 = vmatprep.subr.bf16.mxu0 0
      %3492 = vmatpush1.bf16.msra.mxu0 %v3458
      %3493 = vmatprep.subr.bf16.mxu0 0
      %3494 = vmatpush1.bf16.msra.mxu0 %v3459
      %3495 = vmatprep.subr.bf16.mxu0 0
      %3496 = vmatpush1.bf16.msra.mxu0 %v3460
      %3497 = vmatprep.subr.bf16.mxu0 0
      %3498 = vmatpush1.bf16.msra.mxu0 0
      %3499 = vmatprep.subr.bf16.mxu0 0
      %3500 = vmatpush1.bf16.msra.mxu0 0
      %3501 = vmatprep.subr.bf16.mxu0 0
      %3502 = vmatpush1.bf16.msra.mxu0 0
      %3503 = vmatprep.subr.bf16.mxu0 0
      %3504 = vmatpush1.bf16.msra.mxu0 0
      %3505 = vmatprep.subr.bf16.mxu0 0
      %3506 = vmatpush1.bf16.msra.mxu0 0
      %3507 = vmatprep.subr.bf16.mxu0 0
      %3508 = vmatpush1.bf16.msra.mxu0 0
      %3509 = vmatprep.subr.bf16.mxu0 0
      %3510 = vmatpush1.bf16.msra.mxu0 0
      %3511 = vmatprep.subr.bf16.mxu0 0
      %3512 = vmatpush1.bf16.msra.mxu0 0
      %3513 = vmatprep.subr.bf16.mxu0 0
      %3514 = vmatpush1.bf16.msra.mxu0 0
      %3515 = vmatprep.subr.bf16.mxu0 0
      %3516 = vmatpush1.bf16.msra.mxu0 0
      %3517 = vmatprep.subr.bf16.mxu0 0
      %3518 = vmatpush1.bf16.msra.mxu0 0
      %3519 = vmatprep.subr.bf16.mxu0 0
      %3520 = vmatpush1.bf16.msra.mxu0 0
      %3521 = vmatprep.mubr.bf16.mxu0 0
      %3522 = vmatmul.mubr.bf16.gmra.mrb[0].mxu0 %v3466
      %v3523 = vpop.f32.mrb[0].mxu0
      %v3524 = vadd.f32 0.0, %v3523
      %v3525 = vpop.f32.mrb[0].mxu0
      %v3526 = vpop.f32.mrb[0].mxu0
      %v3527 = vadd.f32 0.0, %v3526
      %v3528 = vpop.f32.mrb[0].mxu0
      %3529 = vmatprep.mubr.bf16.mxu0 0
      %3530 = vmatmul.mubr.bf16.gmra.mrb[0].mxu0 %v3469
      %v3531 = vpop.f32.mrb[0].mxu0
      %v3532 = vadd.f32 0.0, %v3531
      %v3533 = vpop.f32.mrb[0].mxu0
      %v3534 = vpop.f32.mrb[0].mxu0
      %v3535 = vadd.f32 0.0, %v3534
      %v3536 = vpop.f32.mrb[0].mxu0
      %3537 = vmatprep.mubr.bf16.mxu0 0
      %3538 = vmatmul.mubr.bf16.gmra.mrb[0].mxu0 %v3472
      %v3539 = vpop.f32.mrb[0].mxu0
      %v3540 = vadd.f32 0.0, %v3539
      %v3541 = vpop.f32.mrb[0].mxu0
      %v3542 = vpop.f32.mrb[0].mxu0
      %v3543 = vadd.f32 0.0, %v3542
      %v3544 = vpop.f32.mrb[0].mxu0
      %3545 = vmatprep.mubr.bf16.mxu0 0
      %3546 = vmatmul.mubr.bf16.gmra.mrb[0].mxu0 %v3475
      %v3547 = vpop.f32.mrb[0].mxu0
      %v3548 = vadd.f32 0.0, %v3547
      %v3549 = vpop.f32.mrb[0].mxu0
      %v3550 = vpop.f32.mrb[0].mxu0
      %v3551 = vadd.f32 0.0, %v3550
      %v3552 = vpop.f32.mrb[0].mxu0
      %3553 = vmatprep.mubr.bf16.mxu0 0
      %3554 = vmatmul.mubr.bf16.gmra.mrb[0].mxu0 %v3478
      %v3555 = vpop.f32.mrb[0].mxu0
      %v3556 = vadd.f32 0.0, %v3555
      %v3557 = vpop.f32.mrb[0].mxu0
      %v3558 = vpop.f32.mrb[0].mxu0
      %v3559 = vadd.f32 0.0, %v3558
      %v3560 = vpop.f32.mrb[0].mxu0
      %3561 = vmatprep.mubr.bf16.mxu0 0
      %3562 = vmatmul.mubr.bf16.gmra.mrb[0].mxu0 %v3481
      %v3563 = vpop.f32.mrb[0].mxu0
      %v3564 = vadd.f32 0.0, %v3563
      %v3565 = vpop.f32.mrb[0].mxu0
      %v3566 = vpop.f32.mrb[0].mxu0
      %v3567 = vadd.f32 0.0, %v3566
      %v3568 = vpop.f32.mrb[0].mxu0
      %3569 = vmatprep.mubr.bf16.mxu0 0
      %3570 = vmatmul.mubr.bf16.gmra.mrb[0].mxu0 %v3484
      %v3571 = vpop.f32.mrb[0].mxu0
      %v3572 = vadd.f32 0.0, %v3571
      %v3573 = vpop.f32.mrb[0].mxu0
      %v3574 = vpop.f32.mrb[0].mxu0
      %v3575 = vadd.f32 0.0, %v3574
      %v3576 = vpop.f32.mrb[0].mxu0
      %3577 = vmatprep.mubr.bf16.mxu0 0
      %3578 = vmatmul.mubr.bf16.gmra.mrb[0].mxu0 %v3487
      %v3579 = vpop.f32.mrb[0].mxu0
      %v3580 = vadd.f32 0.0, %v3579
      %v3581 = vpop.f32.mrb[0].mxu0
      %v3582 = vpop.f32.mrb[0].mxu0
      %v3583 = vadd.f32 0.0, %v3582
      %v3584 = vpop.f32.mrb[0].mxu0
      %3585 = vdwg.mxu0
      %s3586 = scalar_lea.vmem %s2, 96
      %v3587 = vld [vmem:[%s3586] sm:$0xf]
      %v3588 = vld [vmem:[%s3586 + $0x4] sm:$0xf]
      %v3589 = vld [vmem:[%s3586 + $0x8] sm:$0xf]
      %v3590 = vld [vmem:[%s3586 + $0xc] sm:$0xf]
      %v3591 = vld [vmem:[%s3586 + $0x10] sm:$0xf]
      %v3592 = vld [vmem:[%s3586 + $0x14] sm:$0xf]
      %v3593 = vld [vmem:[%s3586 + $0x18] sm:$0xf]
      %v3594 = vld [vmem:[%s3586 + $0x1c] sm:$0xf]
      %v3603 = vunpack.c.l.b16 %v3587
      %v3604 = vunpack.c.l.b16 %v3588
      %v3605 = vunpack.c.l.b16 %v3589
      %v3606 = vunpack.c.l.b16 %v3590
      %v3607 = vunpack.c.l.b16 %v3591
      %v3608 = vunpack.c.l.b16 %v3592
      %v3609 = vunpack.c.l.b16 %v3593
      %v3610 = vunpack.c.l.b16 %v3594
      %v3611 = vpack.c.b16 %v3604, %v3603
      %v3612 = vpack.c.b16 %v3606, %v3605
      %v3613 = vpack.c.b16 %v3608, %v3607
      %v3614 = vpack.c.b16 %v3610, %v3609
      %v3620 = vsel %vm1017, %v3424, 0
      %v3623 = vsel %vm1017, %v3425, 0
      %v3626 = vsel %vm1017, %v3426, 0
      %v3629 = vsel %vm1017, %v3427, 0
      %v3632 = vsel %vm1017, %v3428, 0
      %v3635 = vsel %vm1017, %v3429, 0
      %v3638 = vsel %vm1017, %v3430, 0
      %v3641 = vsel %vm1017, %v3431, 0
      %3643 = vmatprep.subr.bf16.mxu0 0
      %3644 = vmatpush1.bf16.msra.mxu0 %v3611
      %3645 = vmatprep.subr.bf16.mxu0 0
      %3646 = vmatpush1.bf16.msra.mxu0 %v3612
      %3647 = vmatprep.subr.bf16.mxu0 0
      %3648 = vmatpush1.bf16.msra.mxu0 %v3613
      %3649 = vmatprep.subr.bf16.mxu0 0
      %3650 = vmatpush1.bf16.msra.mxu0 %v3614
      %3651 = vmatprep.subr.bf16.mxu0 0
      %3652 = vmatpush1.bf16.msra.mxu0 0
      %3653 = vmatprep.subr.bf16.mxu0 0
      %3654 = vmatpush1.bf16.msra.mxu0 0
      %3655 = vmatprep.subr.bf16.mxu0 0
      %3656 = vmatpush1.bf16.msra.mxu0 0
      %3657 = vmatprep.subr.bf16.mxu0 0
      %3658 = vmatpush1.bf16.msra.mxu0 0
      %3659 = vmatprep.subr.bf16.mxu0 0
      %3660 = vmatpush1.bf16.msra.mxu0 0
      %3661 = vmatprep.subr.bf16.mxu0 0
      %3662 = vmatpush1.bf16.msra.mxu0 0
      %3663 = vmatprep.subr.bf16.mxu0 0
      %3664 = vmatpush1.bf16.msra.mxu0 0
      %3665 = vmatprep.subr.bf16.mxu0 0
      %3666 = vmatpush1.bf16.msra.mxu0 0
      %3667 = vmatprep.subr.bf16.mxu0 0
      %3668 = vmatpush1.bf16.msra.mxu0 0
      %3669 = vmatprep.subr.bf16.mxu0 0
      %3670 = vmatpush1.bf16.msra.mxu0 0
      %3671 = vmatprep.subr.bf16.mxu0 0
      %3672 = vmatpush1.bf16.msra.mxu0 0
      %3673 = vmatprep.subr.bf16.mxu0 0
      %3674 = vmatpush1.bf16.msra.mxu0 0
      %3675 = vmatprep.mubr.bf16.mxu0 0
      %3676 = vmatmul.mubr.bf16.gmra.mrb[0].mxu0 %v3620
      %v3677 = vpop.f32.mrb[0].mxu0
      %v3678 = vadd.f32 0.0, %v3677
      %v3679 = vpop.f32.mrb[0].mxu0
      %v3680 = vpop.f32.mrb[0].mxu0
      %v3681 = vadd.f32 0.0, %v3680
      %v3682 = vpop.f32.mrb[0].mxu0
      %3683 = vmatprep.mubr.bf16.mxu0 0
      %3684 = vmatmul.mubr.bf16.gmra.mrb[0].mxu0 %v3623
      %v3685 = vpop.f32.mrb[0].mxu0
      %v3686 = vadd.f32 0.0, %v3685
      %v3687 = vpop.f32.mrb[0].mxu0
      %v3688 = vpop.f32.mrb[0].mxu0
      %v3689 = vadd.f32 0.0, %v3688
      %v3690 = vpop.f32.mrb[0].mxu0
      %3691 = vmatprep.mubr.bf16.mxu0 0
      %3692 = vmatmul.mubr.bf16.gmra.mrb[0].mxu0 %v3626
      %v3693 = vpop.f32.mrb[0].mxu0
      %v3694 = vadd.f32 0.0, %v3693
      %v3695 = vpop.f32.mrb[0].mxu0
      %v3696 = vpop.f32.mrb[0].mxu0
      %v3697 = vadd.f32 0.0, %v3696
      %v3698 = vpop.f32.mrb[0].mxu0
      %3699 = vmatprep.mubr.bf16.mxu0 0
      %3700 = vmatmul.mubr.bf16.gmra.mrb[0].mxu0 %v3629
      %v3701 = vpop.f32.mrb[0].mxu0
      %v3702 = vadd.f32 0.0, %v3701
      %v3703 = vpop.f32.mrb[0].mxu0
      %v3704 = vpop.f32.mrb[0].mxu0
      %v3705 = vadd.f32 0.0, %v3704
      %v3706 = vpop.f32.mrb[0].mxu0
      %3707 = vmatprep.mubr.bf16.mxu0 0
      %3708 = vmatmul.mubr.bf16.gmra.mrb[0].mxu0 %v3632
      %v3709 = vpop.f32.mrb[0].mxu0
      %v3710 = vadd.f32 0.0, %v3709
      %v3711 = vpop.f32.mrb[0].mxu0
      %v3712 = vpop.f32.mrb[0].mxu0
      %v3713 = vadd.f32 0.0, %v3712
      %v3714 = vpop.f32.mrb[0].mxu0
      %3715 = vmatprep.mubr.bf16.mxu0 0
      %3716 = vmatmul.mubr.bf16.gmra.mrb[0].mxu0 %v3635
      %v3717 = vpop.f32.mrb[0].mxu0
      %v3718 = vadd.f32 0.0, %v3717
      %v3719 = vpop.f32.mrb[0].mxu0
      %v3720 = vpop.f32.mrb[0].mxu0
      %v3721 = vadd.f32 0.0, %v3720
      %v3722 = vpop.f32.mrb[0].mxu0
      %3723 = vmatprep.mubr.bf16.mxu0 0
      %3724 = vmatmul.mubr.bf16.gmra.mrb[0].mxu0 %v3638
      %v3725 = vpop.f32.mrb[0].mxu0
      %v3726 = vadd.f32 0.0, %v3725
      %v3727 = vpop.f32.mrb[0].mxu0
      %v3728 = vpop.f32.mrb[0].mxu0
      %v3729 = vadd.f32 0.0, %v3728
      %v3730 = vpop.f32.mrb[0].mxu0
      %3731 = vmatprep.mubr.bf16.mxu0 0
      %3732 = vmatmul.mubr.bf16.gmra.mrb[0].mxu0 %v3641
      %v3733 = vpop.f32.mrb[0].mxu0
      %v3734 = vadd.f32 0.0, %v3733
      %v3735 = vpop.f32.mrb[0].mxu0
      %v3736 = vpop.f32.mrb[0].mxu0
      %v3737 = vadd.f32 0.0, %v3736
      %v3738 = vpop.f32.mrb[0].mxu0
      %3739 = vdwg.mxu0
      %3756 = vrot.lane.b32.xlu0 %v1230, 16
      %v3757 = vpop.permute.xlu0 %3756
      %3758 = vrot.lane.b32.xlu0 %v1233, 16
      %v3759 = vpop.permute.xlu0 %3758
      %3760 = vrot.lane.b32.xlu0 %v1238, 16
      %v3761 = vpop.permute.xlu0 %3760
      %3762 = vrot.lane.b32.xlu0 %v1241, 16
      %v3763 = vpop.permute.xlu0 %3762
      %3764 = vrot.lane.b32.xlu0 %v1246, 16
      %v3765 = vpop.permute.xlu0 %3764
      %3766 = vrot.lane.b32.xlu0 %v1249, 16
      %v3767 = vpop.permute.xlu0 %3766
      %3768 = vrot.lane.b32.xlu0 %v1254, 16
      %v3769 = vpop.permute.xlu0 %3768
      %3770 = vrot.lane.b32.xlu0 %v1257, 16
      %v3771 = vpop.permute.xlu0 %3770
      %3772 = vrot.lane.b32.xlu0 %v1262, 16
      %v3773 = vpop.permute.xlu0 %3772
      %3774 = vrot.lane.b32.xlu0 %v1265, 16
      %v3775 = vpop.permute.xlu0 %3774
      %3776 = vrot.lane.b32.xlu0 %v1270, 16
      %v3777 = vpop.permute.xlu0 %3776
      %3778 = vrot.lane.b32.xlu0 %v1273, 16
      %v3779 = vpop.permute.xlu0 %3778
      %3780 = vrot.lane.b32.xlu0 %v1278, 16
      %v3781 = vpop.permute.xlu0 %3780
      %3782 = vrot.lane.b32.xlu0 %v1281, 16
      %v3783 = vpop.permute.xlu0 %3782
      %3784 = vrot.lane.b32.xlu0 %v1286, 16
      %v3785 = vpop.permute.xlu0 %3784
      %3786 = vrot.lane.b32.xlu0 %v1289, 16
      %v3787 = vpop.permute.xlu0 %3786
      %3820 = vrot.lane.b32.xlu0 %v1912, 32
      %v3821 = vpop.permute.xlu0 %3820
      %3822 = vrot.lane.b32.xlu0 %v1915, 32
      %v3823 = vpop.permute.xlu0 %3822
      %3824 = vrot.lane.b32.xlu0 %v1920, 32
      %v3825 = vpop.permute.xlu0 %3824
      %3826 = vrot.lane.b32.xlu0 %v1923, 32
      %v3827 = vpop.permute.xlu0 %3826
      %3828 = vrot.lane.b32.xlu0 %v1928, 32
      %v3829 = vpop.permute.xlu0 %3828
      %3830 = vrot.lane.b32.xlu0 %v1931, 32
      %v3831 = vpop.permute.xlu0 %3830
      %3832 = vrot.lane.b32.xlu0 %v1936, 32
      %v3833 = vpop.permute.xlu0 %3832
      %3834 = vrot.lane.b32.xlu0 %v1939, 32
      %v3835 = vpop.permute.xlu0 %3834
      %3836 = vrot.lane.b32.xlu0 %v1944, 32
      %v3837 = vpop.permute.xlu0 %3836
      %3838 = vrot.lane.b32.xlu0 %v1947, 32
      %v3839 = vpop.permute.xlu0 %3838
      %3840 = vrot.lane.b32.xlu0 %v1952, 32
      %v3841 = vpop.permute.xlu0 %3840
      %3842 = vrot.lane.b32.xlu0 %v1955, 32
      %v3843 = vpop.permute.xlu0 %3842
      %3844 = vrot.lane.b32.xlu0 %v1960, 32
      %v3845 = vpop.permute.xlu0 %3844
      %3846 = vrot.lane.b32.xlu0 %v1963, 32
      %v3847 = vpop.permute.xlu0 %3846
      %3848 = vrot.lane.b32.xlu0 %v1968, 32
      %v3849 = vpop.permute.xlu0 %3848
      %3850 = vrot.lane.b32.xlu0 %v1971, 32
      %v3851 = vpop.permute.xlu0 %3850
      %3884 = vrot.lane.b32.xlu0 %v2066, 48
      %v3885 = vpop.permute.xlu0 %3884
      %3886 = vrot.lane.b32.xlu0 %v2069, 48
      %v3887 = vpop.permute.xlu0 %3886
      %3888 = vrot.lane.b32.xlu0 %v2074, 48
      %v3889 = vpop.permute.xlu0 %3888
      %3890 = vrot.lane.b32.xlu0 %v2077, 48
      %v3891 = vpop.permute.xlu0 %3890
      %3892 = vrot.lane.b32.xlu0 %v2082, 48
      %v3893 = vpop.permute.xlu0 %3892
      %3894 = vrot.lane.b32.xlu0 %v2085, 48
      %v3895 = vpop.permute.xlu0 %3894
      %3896 = vrot.lane.b32.xlu0 %v2090, 48
      %v3897 = vpop.permute.xlu0 %3896
      %3898 = vrot.lane.b32.xlu0 %v2093, 48
      %v3899 = vpop.permute.xlu0 %3898
      %3900 = vrot.lane.b32.xlu0 %v2098, 48
      %v3901 = vpop.permute.xlu0 %3900
      %3902 = vrot.lane.b32.xlu0 %v2101, 48
      %v3903 = vpop.permute.xlu0 %3902
      %3904 = vrot.lane.b32.xlu0 %v2106, 48
      %v3905 = vpop.permute.xlu0 %3904
      %3906 = vrot.lane.b32.xlu0 %v2109, 48
      %v3907 = vpop.permute.xlu0 %3906
      %3908 = vrot.lane.b32.xlu0 %v2114, 48
      %v3909 = vpop.permute.xlu0 %3908
      %3910 = vrot.lane.b32.xlu0 %v2117, 48
      %v3911 = vpop.permute.xlu0 %3910
      %3912 = vrot.lane.b32.xlu0 %v2122, 48
      %v3913 = vpop.permute.xlu0 %3912
      %3914 = vrot.lane.b32.xlu0 %v2125, 48
      %v3915 = vpop.permute.xlu0 %3914
      %3948 = vrot.lane.b32.xlu0 %v2752, 64
      %v3949 = vpop.permute.xlu0 %3948
      %3950 = vrot.lane.b32.xlu0 %v2755, 64
      %v3951 = vpop.permute.xlu0 %3950
      %3952 = vrot.lane.b32.xlu0 %v2760, 64
      %v3953 = vpop.permute.xlu0 %3952
      %3954 = vrot.lane.b32.xlu0 %v2763, 64
      %v3955 = vpop.permute.xlu0 %3954
      %3956 = vrot.lane.b32.xlu0 %v2768, 64
      %v3957 = vpop.permute.xlu0 %3956
      %3958 = vrot.lane.b32.xlu0 %v2771, 64
      %v3959 = vpop.permute.xlu0 %3958
      %3960 = vrot.lane.b32.xlu0 %v2776, 64
      %v3961 = vpop.permute.xlu0 %3960
      %3962 = vrot.lane.b32.xlu0 %v2779, 64
      %v3963 = vpop.permute.xlu0 %3962
      %3964 = vrot.lane.b32.xlu0 %v2784, 64
      %v3965 = vpop.permute.xlu0 %3964
      %3966 = vrot.lane.b32.xlu0 %v2787, 64
      %v3967 = vpop.permute.xlu0 %3966
      %3968 = vrot.lane.b32.xlu0 %v2792, 64
      %v3969 = vpop.permute.xlu0 %3968
      %3970 = vrot.lane.b32.xlu0 %v2795, 64
      %v3971 = vpop.permute.xlu0 %3970
      %3972 = vrot.lane.b32.xlu0 %v2800, 64
      %v3973 = vpop.permute.xlu0 %3972
      %3974 = vrot.lane.b32.xlu0 %v2803, 64
      %v3975 = vpop.permute.xlu0 %3974
      %3976 = vrot.lane.b32.xlu0 %v2808, 64
      %v3977 = vpop.permute.xlu0 %3976
      %3978 = vrot.lane.b32.xlu0 %v2811, 64
      %v3979 = vpop.permute.xlu0 %3978
      %4012 = vrot.lane.b32.xlu0 %v2906, 80
      %v4013 = vpop.permute.xlu0 %4012
      %4014 = vrot.lane.b32.xlu0 %v2909, 80
      %v4015 = vpop.permute.xlu0 %4014
      %4016 = vrot.lane.b32.xlu0 %v2914, 80
      %v4017 = vpop.permute.xlu0 %4016
      %4018 = vrot.lane.b32.xlu0 %v2917, 80
      %v4019 = vpop.permute.xlu0 %4018
      %4020 = vrot.lane.b32.xlu0 %v2922, 80
      %v4021 = vpop.permute.xlu0 %4020
      %4022 = vrot.lane.b32.xlu0 %v2925, 80
      %v4023 = vpop.permute.xlu0 %4022
      %4024 = vrot.lane.b32.xlu0 %v2930, 80
      %v4025 = vpop.permute.xlu0 %4024
      %4026 = vrot.lane.b32.xlu0 %v2933, 80
      %v4027 = vpop.permute.xlu0 %4026
      %4028 = vrot.lane.b32.xlu0 %v2938, 80
      %v4029 = vpop.permute.xlu0 %4028
      %4030 = vrot.lane.b32.xlu0 %v2941, 80
      %v4031 = vpop.permute.xlu0 %4030
      %4032 = vrot.lane.b32.xlu0 %v2946, 80
      %v4033 = vpop.permute.xlu0 %4032
      %4034 = vrot.lane.b32.xlu0 %v2949, 80
      %v4035 = vpop.permute.xlu0 %4034
      %4036 = vrot.lane.b32.xlu0 %v2954, 80
      %v4037 = vpop.permute.xlu0 %4036
      %4038 = vrot.lane.b32.xlu0 %v2957, 80
      %v4039 = vpop.permute.xlu0 %4038
      %4040 = vrot.lane.b32.xlu0 %v2962, 80
      %v4041 = vpop.permute.xlu0 %4040
      %4042 = vrot.lane.b32.xlu0 %v2965, 80
      %v4043 = vpop.permute.xlu0 %4042
      %4076 = vrot.lane.b32.xlu0 %v3524, 96
      %v4077 = vpop.permute.xlu0 %4076
      %4078 = vrot.lane.b32.xlu0 %v3527, 96
      %v4079 = vpop.permute.xlu0 %4078
      %4080 = vrot.lane.b32.xlu0 %v3532, 96
      %v4081 = vpop.permute.xlu0 %4080
      %4082 = vrot.lane.b32.xlu0 %v3535, 96
      %v4083 = vpop.permute.xlu0 %4082
      %4084 = vrot.lane.b32.xlu0 %v3540, 96
      %v4085 = vpop.permute.xlu0 %4084
      %4086 = vrot.lane.b32.xlu0 %v3543, 96
      %v4087 = vpop.permute.xlu0 %4086
      %4088 = vrot.lane.b32.xlu0 %v3548, 96
      %v4089 = vpop.permute.xlu0 %4088
      %4090 = vrot.lane.b32.xlu0 %v3551, 96
      %v4091 = vpop.permute.xlu0 %4090
      %4092 = vrot.lane.b32.xlu0 %v3556, 96
      %v4093 = vpop.permute.xlu0 %4092
      %4094 = vrot.lane.b32.xlu0 %v3559, 96
      %v4095 = vpop.permute.xlu0 %4094
      %4096 = vrot.lane.b32.xlu0 %v3564, 96
      %v4097 = vpop.permute.xlu0 %4096
      %4098 = vrot.lane.b32.xlu0 %v3567, 96
      %v4099 = vpop.permute.xlu0 %4098
      %4100 = vrot.lane.b32.xlu0 %v3572, 96
      %v4101 = vpop.permute.xlu0 %4100
      %4102 = vrot.lane.b32.xlu0 %v3575, 96
      %v4103 = vpop.permute.xlu0 %4102
      %4104 = vrot.lane.b32.xlu0 %v3580, 96
      %v4105 = vpop.permute.xlu0 %4104
      %4106 = vrot.lane.b32.xlu0 %v3583, 96
      %v4107 = vpop.permute.xlu0 %4106
      %4140 = vrot.lane.b32.xlu0 %v3678, 112
      %v4141 = vpop.permute.xlu0 %4140
      %4142 = vrot.lane.b32.xlu0 %v3681, 112
      %v4143 = vpop.permute.xlu0 %4142
      %4144 = vrot.lane.b32.xlu0 %v3686, 112
      %v4145 = vpop.permute.xlu0 %4144
      %4146 = vrot.lane.b32.xlu0 %v3689, 112
      %v4147 = vpop.permute.xlu0 %4146
      %4148 = vrot.lane.b32.xlu0 %v3694, 112
      %v4149 = vpop.permute.xlu0 %4148
      %4150 = vrot.lane.b32.xlu0 %v3697, 112
      %v4151 = vpop.permute.xlu0 %4150
      %4152 = vrot.lane.b32.xlu0 %v3702, 112
      %v4153 = vpop.permute.xlu0 %4152
      %4154 = vrot.lane.b32.xlu0 %v3705, 112
      %v4155 = vpop.permute.xlu0 %4154
      %4156 = vrot.lane.b32.xlu0 %v3710, 112
      %v4157 = vpop.permute.xlu0 %4156
      %4158 = vrot.lane.b32.xlu0 %v3713, 112
      %v4159 = vpop.permute.xlu0 %4158
      %4160 = vrot.lane.b32.xlu0 %v3718, 112
      %v4161 = vpop.permute.xlu0 %4160
      %4162 = vrot.lane.b32.xlu0 %v3721, 112
      %v4163 = vpop.permute.xlu0 %4162
      %4164 = vrot.lane.b32.xlu0 %v3726, 112
      %v4165 = vpop.permute.xlu0 %4164
      %4166 = vrot.lane.b32.xlu0 %v3729, 112
      %v4167 = vpop.permute.xlu0 %4166
      %4168 = vrot.lane.b32.xlu0 %v3734, 112
      %v4169 = vpop.permute.xlu0 %4168
      %4170 = vrot.lane.b32.xlu0 %v3737, 112
      %v4171 = vpop.permute.xlu0 %4170
      %v4188 = vsel %vm678, %v1077, %v3757
      %v4189 = vsel %vm678, %v1080, %v3759
      %v4190 = vsel %vm678, %v1085, %v3761
      %v4191 = vsel %vm678, %v1088, %v3763
      %v4192 = vsel %vm678, %v1093, %v3765
      %v4193 = vsel %vm678, %v1096, %v3767
      %v4194 = vsel %vm678, %v1101, %v3769
      %v4195 = vsel %vm678, %v1104, %v3771
      %v4196 = vsel %vm678, %v1109, %v3773
      %v4197 = vsel %vm678, %v1112, %v3775
      %v4198 = vsel %vm678, %v1117, %v3777
      %v4199 = vsel %vm678, %v1120, %v3779
      %v4200 = vsel %vm678, %v1125, %v3781
      %v4201 = vsel %vm678, %v1128, %v3783
      %v4202 = vsel %vm678, %v1133, %v3785
      %v4203 = vsel %vm678, %v1136, %v3787
      %v4204 = vsel %vm695, %v4188, %v3821
      %v4205 = vsel %vm695, %v4189, %v3823
      %v4206 = vsel %vm695, %v4190, %v3825
      %v4207 = vsel %vm695, %v4191, %v3827
      %v4208 = vsel %vm695, %v4192, %v3829
      %v4209 = vsel %vm695, %v4193, %v3831
      %v4210 = vsel %vm695, %v4194, %v3833
      %v4211 = vsel %vm695, %v4195, %v3835
      %v4212 = vsel %vm695, %v4196, %v3837
      %v4213 = vsel %vm695, %v4197, %v3839
      %v4214 = vsel %vm695, %v4198, %v3841
      %v4215 = vsel %vm695, %v4199, %v3843
      %v4216 = vsel %vm695, %v4200, %v3845
      %v4217 = vsel %vm695, %v4201, %v3847
      %v4218 = vsel %vm695, %v4202, %v3849
      %v4219 = vsel %vm695, %v4203, %v3851
      %v4220 = vsel %vm712, %v4204, %v3885
      %v4221 = vsel %vm712, %v4205, %v3887
      %v4222 = vsel %vm712, %v4206, %v3889
      %v4223 = vsel %vm712, %v4207, %v3891
      %v4224 = vsel %vm712, %v4208, %v3893
      %v4225 = vsel %vm712, %v4209, %v3895
      %v4226 = vsel %vm712, %v4210, %v3897
      %v4227 = vsel %vm712, %v4211, %v3899
      %v4228 = vsel %vm712, %v4212, %v3901
      %v4229 = vsel %vm712, %v4213, %v3903
      %v4230 = vsel %vm712, %v4214, %v3905
      %v4231 = vsel %vm712, %v4215, %v3907
      %v4232 = vsel %vm712, %v4216, %v3909
      %v4233 = vsel %vm712, %v4217, %v3911
      %v4234 = vsel %vm712, %v4218, %v3913
      %v4235 = vsel %vm712, %v4219, %v3915
      %v4236 = vsel %vm1017, %v4220, %v3949
      %v4237 = vsel %vm1017, %v4221, %v3951
      %v4238 = vsel %vm1017, %v4222, %v3953
      %v4239 = vsel %vm1017, %v4223, %v3955
      %v4240 = vsel %vm1017, %v4224, %v3957
      %v4241 = vsel %vm1017, %v4225, %v3959
      %v4242 = vsel %vm1017, %v4226, %v3961
      %v4243 = vsel %vm1017, %v4227, %v3963
      %v4244 = vsel %vm1017, %v4228, %v3965
      %v4245 = vsel %vm1017, %v4229, %v3967
      %v4246 = vsel %vm1017, %v4230, %v3969
      %v4247 = vsel %vm1017, %v4231, %v3971
      %v4248 = vsel %vm1017, %v4232, %v3973
      %v4249 = vsel %vm1017, %v4233, %v3975
      %v4250 = vsel %vm1017, %v4234, %v3977
      %v4251 = vsel %vm1017, %v4235, %v3979
      %vm4252 = vcmask 654336
      %v4253 = vsel %vm4252, %v4236, %v4013
      %v4254 = vsel %vm4252, %v4237, %v4015
      %v4255 = vsel %vm4252, %v4238, %v4017
      %v4256 = vsel %vm4252, %v4239, %v4019
      %v4257 = vsel %vm4252, %v4240, %v4021
      %v4258 = vsel %vm4252, %v4241, %v4023
      %v4259 = vsel %vm4252, %v4242, %v4025
      %v4260 = vsel %vm4252, %v4243, %v4027
      %v4261 = vsel %vm4252, %v4244, %v4029
      %v4262 = vsel %vm4252, %v4245, %v4031
      %v4263 = vsel %vm4252, %v4246, %v4033
      %v4264 = vsel %vm4252, %v4247, %v4035
      %v4265 = vsel %vm4252, %v4248, %v4037
      %v4266 = vsel %vm4252, %v4249, %v4039
      %v4267 = vsel %vm4252, %v4250, %v4041
      %v4268 = vsel %vm4252, %v4251, %v4043
      %vm4269 = vcmask 785408
      %v4270 = vsel %vm4269, %v4253, %v4077
      %v4271 = vsel %vm4269, %v4254, %v4079
      %v4272 = vsel %vm4269, %v4255, %v4081
      %v4273 = vsel %vm4269, %v4256, %v4083
      %v4274 = vsel %vm4269, %v4257, %v4085
      %v4275 = vsel %vm4269, %v4258, %v4087
      %v4276 = vsel %vm4269, %v4259, %v4089
      %v4277 = vsel %vm4269, %v4260, %v4091
      %v4278 = vsel %vm4269, %v4261, %v4093
      %v4279 = vsel %vm4269, %v4262, %v4095
      %v4280 = vsel %vm4269, %v4263, %v4097
      %v4281 = vsel %vm4269, %v4264, %v4099
      %v4282 = vsel %vm4269, %v4265, %v4101
      %v4283 = vsel %vm4269, %v4266, %v4103
      %v4284 = vsel %vm4269, %v4267, %v4105
      %v4285 = vsel %vm4269, %v4268, %v4107
      %vm4286 = vcmask 916480
      %v4287 = vsel %vm4286, %v4270, %v4141
      %v4288 = vsel %vm4286, %v4271, %v4143
      %v4289 = vsel %vm4286, %v4272, %v4145
      %v4290 = vsel %vm4286, %v4273, %v4147
      %v4291 = vsel %vm4286, %v4274, %v4149
      %v4292 = vsel %vm4286, %v4275, %v4151
      %v4293 = vsel %vm4286, %v4276, %v4153
      %v4294 = vsel %vm4286, %v4277, %v4155
      %v4295 = vsel %vm4286, %v4278, %v4157
      %v4296 = vsel %vm4286, %v4279, %v4159
      %v4297 = vsel %vm4286, %v4280, %v4161
      %v4298 = vsel %vm4286, %v4281, %v4163
      %v4299 = vsel %vm4286, %v4282, %v4165
      %v4300 = vsel %vm4286, %v4283, %v4167
      %v4301 = vsel %vm4286, %v4284, %v4169
      %v4302 = vsel %vm4286, %v4285, %v4171
      %v4303 = vld [vmem:[%s3] sm:$0x1]
      %v4305 = vlaneseq
      %v4306 = vshrl.u32 %v4305, 7
      %v4307 = vsub.s32 0, %v4306
      %v4308 = vrot.slane %v4303, %v4307
      %v4310 = vadd.f32 %v4287, %v4308
      %v4311 = vadd.f32 %v4288, %v4308
      %v4312 = vadd.f32 %v4289, %v4308
      %v4313 = vadd.f32 %v4290, %v4308
      %v4314 = vadd.f32 %v4291, %v4308
      %v4315 = vadd.f32 %v4292, %v4308
      %v4316 = vadd.f32 %v4293, %v4308
      %v4317 = vadd.f32 %v4294, %v4308
      %v4318 = vadd.f32 %v4295, %v4308
      %v4319 = vadd.f32 %v4296, %v4308
      %v4320 = vadd.f32 %v4297, %v4308
      %v4321 = vadd.f32 %v4298, %v4308
      %v4322 = vadd.f32 %v4299, %v4308
      %v4323 = vadd.f32 %v4300, %v4308
      %v4324 = vadd.f32 %v4301, %v4308
      %v4325 = vadd.f32 %v4302, %v4308
      %4326 = vst [vmem:[%s221] sm:$0xff] %v4310
      %4327 = vst [vmem:[%s221 + $0x8] sm:$0xff] %v4311
      %4328 = vst [vmem:[%s221 + $0x10] sm:$0xff] %v4312
      %4329 = vst [vmem:[%s221 + $0x18] sm:$0xff] %v4313
      %4330 = vst [vmem:[%s221 + $0x20] sm:$0xff] %v4314
      %4331 = vst [vmem:[%s221 + $0x28] sm:$0xff] %v4315
      %4332 = vst [vmem:[%s221 + $0x30] sm:$0xff] %v4316
      %4333 = vst [vmem:[%s221 + $0x38] sm:$0xff] %v4317
      %4334 = vst [vmem:[%s221 + $0x40] sm:$0xff] %v4318
      %4335 = vst [vmem:[%s221 + $0x48] sm:$0xff] %v4319
      %4336 = vst [vmem:[%s221 + $0x50] sm:$0xff] %v4320
      %4337 = vst [vmem:[%s221 + $0x58] sm:$0xff] %v4321
      %4338 = vst [vmem:[%s221 + $0x60] sm:$0xff] %v4322
      %4339 = vst [vmem:[%s221 + $0x68] sm:$0xff] %v4323
      %4340 = vst [vmem:[%s221 + $0x70] sm:$0xff] %v4324
      %4341 = vst [vmem:[%s221 + $0x78] sm:$0xff] %v4325
      %s4342 = smul.u32 8, %s20
      %p4343 = scmp.lt.s32.totalorder %s19, 1
      %s4344 = scalar_select %p4343, %s19, 1
      %p4345 = scmp.lt.s32.totalorder %s4342, 15
      %s4346 = scalar_select %p4345, %s4342, 15
      %s4347 = smul.addr %s4346, 2
      %s4348 = smul.addr %s4344, 32
      %s4349 = sadd.s32 %s4347, %s4348
      %s4350 = smul.addr %s4349, 8
      %s4351 = scalar_lea.vmem %s4, %s4350
      // Predicated region
      $region41: #{upsample_forward.1} parent=35 // pred_check
        %p4352 = pneg %p136
      $region42: #{upsample_forward.1} parent=35 // pred_check_branch
        %4354 = sbr.rel (%p4352) target = $region44
      $region43: #{upsample_forward.1} parent=35 // pred_region
        %s4355 = smul.u32 8, %s20
      $region44: #{upsample_forward.1} parent=35 // pred_fallthru
        _
    $region36: #{upsample_forward.1} parent=5 // pred_fallthru
      _
    %p4356 = scmp.le.s32.totalorder 2, %s10
    // Predicated region
    $region45: #{upsample_forward.1} parent=5 // pred_check
      %p4357 = pneg %p4356
    $region46: #{upsample_forward.1} parent=5 // pred_check_branch
      %4359 = sbr.rel (%p4357) target = $region48
    $region47: #{upsample_forward.1} parent=5 // pred_region
      %s4360 = ssub.s32 %s10, 2
      // Predicated region
      $region49: #{upsample_forward.1} parent=47 // pred_check
        %p4361 = pneg %p142
      $region50: #{upsample_forward.1} parent=47 // pred_check_branch
        %4363 = sbr.rel (%p4361) target = $region52
      $region51: #{upsample_forward.1} parent=47 // pred_region
        %s4364 = smul.u32 8, %s22
        %p4365 = scmp.lt.s32.totalorder %s21, 1
        %s4366 = scalar_select %p4365, %s21, 1
        %p4367 = scmp.lt.s32.totalorder %s4364, 15
        %s4368 = scalar_select %p4367, %s4364, 15
        %s4369 = smul.addr %s4368, 2
        %s4370 = smul.addr %s4366, 32
        %s4371 = sadd.s32 %s4369, %s4370
        %s4372 = smul.addr %s4371, 8
        %s4373 = scalar_lea.vmem %s4, %s4372
      $region52: #{upsample_forward.1} parent=47 // pred_fallthru
        _
    $region48: #{upsample_forward.1} parent=5 // pred_fallthru
      _
  $region6: #{upsample_forward.1} parent=0 // loop_footer
    %s14 = sadd.s32 1, %s10
  $region7: #{upsample_forward.1} parent=0 // loop_footer_branch
    %9 = sbr.rel target = $region3
  $region8: #{upsample_forward.1} parent=0 // loop_exit
    _

</llo_original>
